<compile_context>
chip_gen: v7x
topology: tpu7x:2x2x1
jax: 0.10.0
libtpu: 0.0.40
codegen_flags: <defaults>
</compile_context>

<pallas_src>
import functools

import jax
import jax.numpy as jnp
from jax.experimental import pallas as pl
from jax.experimental.pallas import tpu as pltpu


def _round_up(x, m):
    return (x + m - 1) // m * m


# ---------------------------------------------------------------------------
# Kernel 1: sub-pixel (4-phase) transposed-conv GEMM with fused bias.
#
# For PyTorch ConvTranspose2d(kernel=3, stride=2, padding=1, output_padding=1):
#   out[2m+dh, 2l+dw, co] uses at most 4 shifted input pixels:
#     EE (dh=0,dw=0): x[m  ,l  ] @ w[:,:,1,1]
#     EO (0,1)      : x[m  ,l  ] @ w[:,:,1,2] + x[m  ,l+1] @ w[:,:,1,0]
#     OE (1,0)      : x[m  ,l  ] @ w[:,:,2,1] + x[m+1,l  ] @ w[:,:,0,1]
#     OO (1,1)      : x[m  ,l  ] @ w[:,:,2,2] + x[m  ,l+1] @ w[:,:,2,0]
#                   + x[m+1,l  ] @ w[:,:,0,2] + x[m+1,l+1] @ w[:,:,0,0]
#   (x[...] is zero outside the input)  -> exactly the 9 non-zero taps.
# ---------------------------------------------------------------------------
def _convt_subpixel_kernel(x00_ref, x01_ref, x10_ref, x11_ref, w_ref, b_ref, o_ref):
    a00 = x00_ref[...]            # (tm, Cg) bf16
    a01 = x01_ref[...]
    a10 = x10_ref[...]
    a11 = x11_ref[...]

    def tap(a, k):                # MXU: bf16 x bf16, f32 accumulate
        return jnp.dot(a, w_ref[k], preferred_element_type=jnp.float32)

    b = b_ref[...]                # (1, Cout) f32
    y_ee = tap(a00, 0) + b
    y_eo = tap(a00, 1) + tap(a01, 2) + b
    y_oe = tap(a00, 3) + tap(a10, 4) + b
    y_oo = tap(a00, 5) + tap(a01, 6) + tap(a10, 7) + tap(a11, 8) + b
    # lane-dense phase-packed output block: (tm, 4*Cout)
    o_ref[...] = jnp.concatenate([y_ee, y_eo, y_oe, y_oo], axis=-1)


# ---------------------------------------------------------------------------
# Kernel 2: BatchNorm pass 1 — per-column sum / sum-of-squares, accumulated
# across a row-tiled grid (marked "arbitrary", carried accumulator outputs).
# ---------------------------------------------------------------------------
def _bn_stats_kernel(y_ref, sum_ref, sq_ref, *, m_valid):
    i = pl.program_id(0)

    @pl.when(i == 0)
    def _():
        sum_ref[...] = jnp.zeros_like(sum_ref)
        sq_ref[...] = jnp.zeros_like(sq_ref)

    tm = y_ref.shape[0]
    row = i * tm + jax.lax.broadcasted_iota(jnp.int32, y_ref.shape, 0)
    y = jnp.where(row < m_valid, y_ref[...], 0.0)       # mask padded rows
    sum_ref[...] += jnp.sum(y, axis=0, keepdims=True)
    sq_ref[...] += jnp.sum(y * y, axis=0, keepdims=True)


# ---------------------------------------------------------------------------
# Kernel 3: BatchNorm pass 2 (folded scale/shift) + LeakyReLU, tiled & parallel.
# ---------------------------------------------------------------------------
def _bn_apply_kernel(y_ref, scale_ref, shift_ref, o_ref, *, slope):
    y = y_ref[...]
    o = y * scale_ref[...] + shift_ref[...]
    o_ref[...] = jnp.where(o >= 0, o, slope * o)


# ---------------------------------------------------------------------------
# Forward pass
# ---------------------------------------------------------------------------
@functools.partial(jax.jit, static_argnames=("eps", "slope", "tm"))
def convt_block_forward(w, b, gamma, beta, x_nchw, *, eps=1e-5, slope=0.01, tm=256):
    """ConvTranspose2d(3,3, s=2, p=1, op=1) + BatchNorm2d (batch stats) + LeakyReLU.

    w: PyTorch ConvTranspose2d weight (Cin, Cout, 3, 3).  x: NCHW.  Returns NCHW.
    """
    N, Cin, H, W = x_nchw.shape
    Cout = w.shape[1]
    M = N * H * W
    Mp = _round_up(M, tm)
    Cg = _round_up(Cin, 128)
    C4 = 4 * Cout
    grid_m = Mp // tm

    x = jnp.transpose(x_nchw, (0, 2, 3, 1)).astype(jnp.float32)      # NHWC
    xp = jnp.pad(x, ((0, 0), (0, 1), (0, 1), (0, 0)))                # zero halo (bottom/right)

    def slab(a):   # (N,H,W,Cin) -> (Mp, Cg) bf16, rows in (n,h,w) order
        a = a.reshape(M, Cin).astype(jnp.bfloat16)
        return jnp.pad(a, ((0, Mp - M), (0, Cg - Cin)))

    x00 = slab(xp[:, :H, :W, :])
    x01 = slab(xp[:, :H, 1:W + 1, :])
    x10 = slab(xp[:, 1:H + 1, :W, :])
    x11 = slab(xp[:, 1:H + 1, 1:W + 1, :])

    # 9 weight taps (order matches kernel): PyTorch layout (Cin, Cout, kh, kw)
    taps = ((1, 1), (1, 2), (1, 0), (2, 1), (0, 1), (2, 2), (2, 0), (0, 2), (0, 0))
    w9 = jnp.stack([w[:, :, kh, kw] for kh, kw in taps], axis=0)      # (9, Cin, Cout)
    w9 = jnp.pad(w9, ((0, 0), (0, Cg - Cin), (0, 0))).astype(jnp.bfloat16)
    b2 = b.reshape(1, Cout).astype(jnp.float32)

    row_spec = pl.BlockSpec((tm, Cg), lambda i: (i, 0))
    y = pl.pallas_call(
        _convt_subpixel_kernel,
        out_shape=jax.ShapeDtypeStruct((Mp, C4), jnp.float32),
        grid=(grid_m,),
        in_specs=[row_spec, row_spec, row_spec, row_spec,
                  pl.BlockSpec((9, Cg, Cout), lambda i: (0, 0, 0)),
                  pl.BlockSpec((1, Cout), lambda i: (0, 0))],
        out_specs=pl.BlockSpec((tm, C4), lambda i: (i, 0)),
        compiler_params=pltpu.CompilerParams(
            dimension_semantics=("parallel",)),
    )(x00, x01, x10, x11, w9, b2)

    # BN pass 1: tiled sum/sumsq accumulation.
    sums, sqs = pl.pallas_call(
        functools.partial(_bn_stats_kernel, m_valid=M),
        out_shape=(jax.ShapeDtypeStruct((1, C4), jnp.float32),
                   jax.ShapeDtypeStruct((1, C4), jnp.float32)),
        grid=(grid_m,),
        in_specs=[pl.BlockSpec((tm, C4), lambda i: (i, 0))],
        out_specs=(pl.BlockSpec((1, C4), lambda i: (0, 0)),
                   pl.BlockSpec((1, C4), lambda i: (0, 0))),
        compiler_params=pltpu.CompilerParams(
            dimension_semantics=("arbitrary",)),
    )(y)

    # Fold the 4 phase groups into per-channel stats; fold BN into scale/shift
    # (tiny XLA glue on 4*Cout floats).
    cnt = jnp.float32(4 * M)                        # = N * (2H) * (2W)
    ch_sum = jnp.sum(sums.reshape(4, Cout), axis=0)
    ch_sq = jnp.sum(sqs.reshape(4, Cout), axis=0)
    mean = ch_sum / cnt
    var = ch_sq / cnt - mean * mean                 # biased variance (train-mode BN)
    scale_c = gamma * jax.lax.rsqrt(var + eps)
    shift_c = beta - mean * scale_c
    scale = jnp.tile(scale_c, 4).reshape(1, C4)
    shift = jnp.tile(shift_c, 4).reshape(1, C4)

    # BN pass 2 + LeakyReLU.
    yo = pl.pallas_call(
        functools.partial(_bn_apply_kernel, slope=slope),
        out_shape=jax.ShapeDtypeStruct((Mp, C4), jnp.float32),
        grid=(grid_m,),
        in_specs=[pl.BlockSpec((tm, C4), lambda i: (i, 0)),
                  pl.BlockSpec((1, C4), lambda i: (0, 0)),
                  pl.BlockSpec((1, C4), lambda i: (0, 0))],
        out_specs=pl.BlockSpec((tm, C4), lambda i: (i, 0)),
        compiler_params=pltpu.CompilerParams(
            dimension_semantics=("parallel",)),
    )(y, scale, shift)

    # depth-to-space: (M, [EE|EO|OE|OO]*Cout) -> (N, 2H, 2W, Cout) -> NCHW
    out = yo[:M].reshape(N, H, W, 2, 2, Cout)
    out = out.transpose(0, 1, 3, 2, 4, 5).reshape(N, 2 * H, 2 * W, Cout)
    return jnp.transpose(out, (0, 3, 1, 2))


# ---------------------------------------------------------------------------
# Pure-JAX reference (f32) for correctness checking.
# ---------------------------------------------------------------------------
def _reference_forward(w, b, gamma, beta, x_nchw, eps=1e-5, slope=0.01):
    x = jnp.transpose(x_nchw, (0, 2, 3, 1)).astype(jnp.float32)
    w_eq = jnp.transpose(jnp.flip(w, (2, 3)), (2, 3, 0, 1))           # HWIO
    y = jax.lax.conv_general_dilated(
        x, w_eq, window_strides=(1, 1), padding=((1, 2), (1, 2)),
        lhs_dilation=(2, 2), dimension_numbers=("NHWC", "HWIO", "NHWC"),
        precision=jax.lax.Precision.HIGHEST)
    y = y + b.reshape(1, 1, 1, -1)
    mean = jnp.mean(y, axis=(0, 1, 2))
    var = jnp.mean((y - mean) ** 2, axis=(0, 1, 2))
    yn = (y - mean) * jax.lax.rsqrt(var + eps) * gamma + beta
    out = jnp.where(yn >= 0, yn, slope * yn)
    return jnp.transpose(out, (0, 3, 1, 2))


if __name__ == "__main__":
    key = jax.random.PRNGKey(0)
    k_w, k_b, k_g, k_be, k_x = jax.random.split(key, 5)

    N, CIN, COUT, H, W = 2, 64, 32, 16, 16
    w = jax.random.normal(k_w, (CIN, COUT, 3, 3), jnp.float32) * (1.0 / (CIN * 9)) ** 0.5
    b = 0.01 * jax.random.normal(k_b, (COUT,), jnp.float32)
    gamma = 1.0 + 0.1 * jax.random.normal(k_g, (COUT,), jnp.float32)
    beta = 0.1 * jax.random.normal(k_be, (COUT,), jnp.float32)
    x = jax.random.normal(k_x, (N, CIN, H, W), jnp.float32)

    out = convt_block_forward(w, b, gamma, beta, x)
    out = jax.block_until_ready(out)

    assert out.shape == (N, COUT, 2 * H, 2 * W)
    assert bool(jnp.all(jnp.isfinite(out)))

    ref = _reference_forward(w, b, gamma, beta, x)
    err = float(jnp.max(jnp.abs(out - ref)))
    assert err < 7.5e-2, f"max abs err {err}"

    print("KERNEL_OK")
</pallas_src>

<mosaic_0001>
module attributes {stable_mosaic.version = 11 : i64} {
  func.func @_convt_subpixel_kernel(%arg0: i32, %arg1: memref<256x128xbf16, #tpu.memory_space<vmem>>, %arg2: memref<256x128xbf16, #tpu.memory_space<vmem>>, %arg3: memref<256x128xbf16, #tpu.memory_space<vmem>>, %arg4: memref<256x128xbf16, #tpu.memory_space<vmem>>, %arg5: memref<9x128x32xbf16, #tpu.memory_space<vmem>>, %arg6: memref<1x32xf32, #tpu.memory_space<vmem>>, %arg7: memref<256x128xf32, #tpu.memory_space<vmem>>) attributes {dimension_semantics = [#tpu.dimension_semantics<parallel>], iteration_bounds = array<i64: 2>, scalar_prefetch = 0 : i64, scratch_operands = 0 : i64, tpu.core_type = #tpu.core_type<tc>, window_params = [{transform_indices = @transform_0, window_bounds = array<i64: 256, 128>}, {transform_indices = @transform_1, window_bounds = array<i64: 256, 128>}, {transform_indices = @transform_2, window_bounds = array<i64: 256, 128>}, {transform_indices = @transform_3, window_bounds = array<i64: 256, 128>}, {pipeline_mode = #tpu.pipeline_mode<synchronous>, transform_indices = @transform_4, window_bounds = array<i64: 9, 128, 32>}, {pipeline_mode = #tpu.pipeline_mode<synchronous>, transform_indices = @transform_5, window_bounds = array<i64: 1, 32>}, {transform_indices = @transform_6, window_bounds = array<i64: 256, 128>}]} {
    %c0 = arith.constant 0 : index
    %c0_0 = arith.constant 0 : index
    %0 = vector.load %arg1[%c0, %c0_0] : memref<256x128xbf16, #tpu.memory_space<vmem>>, vector<256x128xbf16>
    %c0_1 = arith.constant 0 : index
    %c0_2 = arith.constant 0 : index
    %1 = vector.load %arg2[%c0_1, %c0_2] : memref<256x128xbf16, #tpu.memory_space<vmem>>, vector<256x128xbf16>
    %c0_3 = arith.constant 0 : index
    %c0_4 = arith.constant 0 : index
    %2 = vector.load %arg3[%c0_3, %c0_4] : memref<256x128xbf16, #tpu.memory_space<vmem>>, vector<256x128xbf16>
    %c0_5 = arith.constant 0 : index
    %c0_6 = arith.constant 0 : index
    %3 = vector.load %arg4[%c0_5, %c0_6] : memref<256x128xbf16, #tpu.memory_space<vmem>>, vector<256x128xbf16>
    %c0_7 = arith.constant 0 : index
    %c0_8 = arith.constant 0 : index
    %4 = vector.load %arg6[%c0_7, %c0_8] : memref<1x32xf32, #tpu.memory_space<vmem>>, vector<1x32xf32>
    %c0_9 = arith.constant 0 : index
    %c0_10 = arith.constant 0 : index
    %c0_11 = arith.constant 0 : index
    %5 = vector.load %arg5[%c0_9, %c0_10, %c0_11] : memref<9x128x32xbf16, #tpu.memory_space<vmem>>, vector<1x128x32xbf16>
    %6 = vector.shape_cast %5 : vector<1x128x32xbf16> to vector<128x32xbf16>
    %cst = arith.constant dense<0.000000e+00> : vector<256x32xf32>
    %7 = tpu.matmul %0, %6, %cst {dimension_numbers = #tpu.dot_dimension_numbers<[1], [0], [0], [1], [0, 0, 1, 1], [], []>} : vector<256x128xbf16>, vector<128x32xbf16>, vector<256x32xf32> -> vector<256x32xf32>
    %8 = vector.broadcast %4 : vector<1x32xf32> to vector<256x32xf32>
    %9 = arith.addf %7, %8 : vector<256x32xf32>
    %c1 = arith.constant 1 : index
    %c0_12 = arith.constant 0 : index
    %c0_13 = arith.constant 0 : index
    %10 = vector.load %arg5[%c1, %c0_12, %c0_13] : memref<9x128x32xbf16, #tpu.memory_space<vmem>>, vector<1x128x32xbf16>
    %11 = vector.shape_cast %10 : vector<1x128x32xbf16> to vector<128x32xbf16>
    %cst_14 = arith.constant dense<0.000000e+00> : vector<256x32xf32>
    %12 = tpu.matmul %0, %11, %cst_14 {dimension_numbers = #tpu.dot_dimension_numbers<[1], [0], [0], [1], [0, 0, 1, 1], [], []>} : vector<256x128xbf16>, vector<128x32xbf16>, vector<256x32xf32> -> vector<256x32xf32>
    %c2 = arith.constant 2 : index
    %c0_15 = arith.constant 0 : index
    %c0_16 = arith.constant 0 : index
    %13 = vector.load %arg5[%c2, %c0_15, %c0_16] : memref<9x128x32xbf16, #tpu.memory_space<vmem>>, vector<1x128x32xbf16>
    %14 = vector.shape_cast %13 : vector<1x128x32xbf16> to vector<128x32xbf16>
    %cst_17 = arith.constant dense<0.000000e+00> : vector<256x32xf32>
    %15 = tpu.matmul %1, %14, %cst_17 {dimension_numbers = #tpu.dot_dimension_numbers<[1], [0], [0], [1], [0, 0, 1, 1], [], []>} : vector<256x128xbf16>, vector<128x32xbf16>, vector<256x32xf32> -> vector<256x32xf32>
    %16 = arith.addf %12, %15 : vector<256x32xf32>
    %17 = vector.broadcast %4 : vector<1x32xf32> to vector<256x32xf32>
    %18 = arith.addf %16, %17 : vector<256x32xf32>
    %c3 = arith.constant 3 : index
    %c0_18 = arith.constant 0 : index
    %c0_19 = arith.constant 0 : index
    %19 = vector.load %arg5[%c3, %c0_18, %c0_19] : memref<9x128x32xbf16, #tpu.memory_space<vmem>>, vector<1x128x32xbf16>
    %20 = vector.shape_cast %19 : vector<1x128x32xbf16> to vector<128x32xbf16>
    %cst_20 = arith.constant dense<0.000000e+00> : vector<256x32xf32>
    %21 = tpu.matmul %0, %20, %cst_20 {dimension_numbers = #tpu.dot_dimension_numbers<[1], [0], [0], [1], [0, 0, 1, 1], [], []>} : vector<256x128xbf16>, vector<128x32xbf16>, vector<256x32xf32> -> vector<256x32xf32>
    %c4 = arith.constant 4 : index
    %c0_21 = arith.constant 0 : index
    %c0_22 = arith.constant 0 : index
    %22 = vector.load %arg5[%c4, %c0_21, %c0_22] : memref<9x128x32xbf16, #tpu.memory_space<vmem>>, vector<1x128x32xbf16>
    %23 = vector.shape_cast %22 : vector<1x128x32xbf16> to vector<128x32xbf16>
    %cst_23 = arith.constant dense<0.000000e+00> : vector<256x32xf32>
    %24 = tpu.matmul %2, %23, %cst_23 {dimension_numbers = #tpu.dot_dimension_numbers<[1], [0], [0], [1], [0, 0, 1, 1], [], []>} : vector<256x128xbf16>, vector<128x32xbf16>, vector<256x32xf32> -> vector<256x32xf32>
    %25 = arith.addf %21, %24 : vector<256x32xf32>
    %26 = vector.broadcast %4 : vector<1x32xf32> to vector<256x32xf32>
    %27 = arith.addf %25, %26 : vector<256x32xf32>
    %c5 = arith.constant 5 : index
    %c0_24 = arith.constant 0 : index
    %c0_25 = arith.constant 0 : index
    %28 = vector.load %arg5[%c5, %c0_24, %c0_25] : memref<9x128x32xbf16, #tpu.memory_space<vmem>>, vector<1x128x32xbf16>
    %29 = vector.shape_cast %28 : vector<1x128x32xbf16> to vector<128x32xbf16>
    %cst_26 = arith.constant dense<0.000000e+00> : vector<256x32xf32>
    %30 = tpu.matmul %0, %29, %cst_26 {dimension_numbers = #tpu.dot_dimension_numbers<[1], [0], [0], [1], [0, 0, 1, 1], [], []>} : vector<256x128xbf16>, vector<128x32xbf16>, vector<256x32xf32> -> vector<256x32xf32>
    %c6 = arith.constant 6 : index
    %c0_27 = arith.constant 0 : index
    %c0_28 = arith.constant 0 : index
    %31 = vector.load %arg5[%c6, %c0_27, %c0_28] : memref<9x128x32xbf16, #tpu.memory_space<vmem>>, vector<1x128x32xbf16>
    %32 = vector.shape_cast %31 : vector<1x128x32xbf16> to vector<128x32xbf16>
    %cst_29 = arith.constant dense<0.000000e+00> : vector<256x32xf32>
    %33 = tpu.matmul %1, %32, %cst_29 {dimension_numbers = #tpu.dot_dimension_numbers<[1], [0], [0], [1], [0, 0, 1, 1], [], []>} : vector<256x128xbf16>, vector<128x32xbf16>, vector<256x32xf32> -> vector<256x32xf32>
    %34 = arith.addf %30, %33 : vector<256x32xf32>
    %c7 = arith.constant 7 : index
    %c0_30 = arith.constant 0 : index
    %c0_31 = arith.constant 0 : index
    %35 = vector.load %arg5[%c7, %c0_30, %c0_31] : memref<9x128x32xbf16, #tpu.memory_space<vmem>>, vector<1x128x32xbf16>
    %36 = vector.shape_cast %35 : vector<1x128x32xbf16> to vector<128x32xbf16>
    %cst_32 = arith.constant dense<0.000000e+00> : vector<256x32xf32>
    %37 = tpu.matmul %2, %36, %cst_32 {dimension_numbers = #tpu.dot_dimension_numbers<[1], [0], [0], [1], [0, 0, 1, 1], [], []>} : vector<256x128xbf16>, vector<128x32xbf16>, vector<256x32xf32> -> vector<256x32xf32>
    %38 = arith.addf %34, %37 : vector<256x32xf32>
    %c8 = arith.constant 8 : index
    %c0_33 = arith.constant 0 : index
    %c0_34 = arith.constant 0 : index
    %39 = vector.load %arg5[%c8, %c0_33, %c0_34] : memref<9x128x32xbf16, #tpu.memory_space<vmem>>, vector<1x128x32xbf16>
    %40 = vector.shape_cast %39 : vector<1x128x32xbf16> to vector<128x32xbf16>
    %cst_35 = arith.constant dense<0.000000e+00> : vector<256x32xf32>
    %41 = tpu.matmul %3, %40, %cst_35 {dimension_numbers = #tpu.dot_dimension_numbers<[1], [0], [0], [1], [0, 0, 1, 1], [], []>} : vector<256x128xbf16>, vector<128x32xbf16>, vector<256x32xf32> -> vector<256x32xf32>
    %42 = arith.addf %38, %41 : vector<256x32xf32>
    %43 = vector.broadcast %4 : vector<1x32xf32> to vector<256x32xf32>
    %44 = arith.addf %42, %43 : vector<256x32xf32>
    %45 = tpu.concatenate %9, %18, %27, %44 in 1 : vector<256x32xf32>, vector<256x32xf32>, vector<256x32xf32>, vector<256x32xf32> -> vector<256x128xf32>
    %c0_36 = arith.constant 0 : index
    %c0_37 = arith.constant 0 : index
    %46 = vector.load %arg7[%c0_36, %c0_37] : memref<256x128xf32, #tpu.memory_space<vmem>>, vector<256x128xf32>
    tpu.vector_store %arg7[%c0_36, %c0_37], %45 {strides = array<i32>} : memref<256x128xf32, #tpu.memory_space<vmem>>, vector<256x128xf32>,
    return
  }
  func.func @transform_0(%arg0: i32) -> (i32, i32) {
    %c0_i32 = arith.constant 0 : i32
    %c0_i32_0 = arith.constant 0 : i32
    return %arg0, %c0_i32 : i32, i32
  }
  func.func @transform_1(%arg0: i32) -> (i32, i32) {
    %c0_i32 = arith.constant 0 : i32
    %c0_i32_0 = arith.constant 0 : i32
    return %arg0, %c0_i32 : i32, i32
  }
  func.func @transform_2(%arg0: i32) -> (i32, i32) {
    %c0_i32 = arith.constant 0 : i32
    %c0_i32_0 = arith.constant 0 : i32
    return %arg0, %c0_i32 : i32, i32
  }
  func.func @transform_3(%arg0: i32) -> (i32, i32) {
    %c0_i32 = arith.constant 0 : i32
    %c0_i32_0 = arith.constant 0 : i32
    return %arg0, %c0_i32 : i32, i32
  }
  func.func @transform_4(%arg0: i32) -> (i32, i32, i32) {
    %c0_i32 = arith.constant 0 : i32
    %c0_i32_0 = arith.constant 0 : i32
    %c0_i32_1 = arith.constant 0 : i32
    %c0_i32_2 = arith.constant 0 : i32
    return %c0_i32, %c0_i32_0, %c0_i32_1 : i32, i32, i32
  }
  func.func @transform_5(%arg0: i32) -> (i32, i32) {
    %c0_i32 = arith.constant 0 : i32
    %c0_i32_0 = arith.constant 0 : i32
    %c0_i32_1 = arith.constant 0 : i32
    return %c0_i32, %c0_i32_0 : i32, i32
  }
  func.func @transform_6(%arg0: i32) -> (i32, i32) {
    %c0_i32 = arith.constant 0 : i32
    %c0_i32_0 = arith.constant 0 : i32
    return %arg0, %c0_i32 : i32, i32
  }
}

module attributes {stable_mosaic.version = 11 : i64} {
  func.func @_bn_stats_kernel(%arg0: i32, %arg1: memref<256x128xf32, #tpu.memory_space<vmem>>, %arg2: memref<1x128xf32, #tpu.memory_space<vmem>>, %arg3: memref<1x128xf32, #tpu.memory_space<vmem>>) attributes {dimension_semantics = [#tpu.dimension_semantics<arbitrary>], iteration_bounds = array<i64: 2>, scalar_prefetch = 0 : i64, scratch_operands = 0 : i64, tpu.core_type = #tpu.core_type<tc>, window_params = [{transform_indices = @transform_0, window_bounds = array<i64: 256, 128>}, {pipeline_mode = #tpu.pipeline_mode<synchronous>, transform_indices = @transform_1, window_bounds = array<i64: 1, 128>}, {pipeline_mode = #tpu.pipeline_mode<synchronous>, transform_indices = @transform_2, window_bounds = array<i64: 1, 128>}]} {
    %c0_i32 = arith.constant 0 : i32
    %0 = arith.cmpi eq, %arg0, %c0_i32 : i32
    %1 = arith.extui %0 : i1 to i32
    %c0_i32_0 = arith.constant 0 : i32
    %2 = arith.cmpi ne, %1, %c0_i32_0 : i32
    scf.if %2 {
      %cst_12 = arith.constant 0.000000e+00 : f32
      %23 = vector.broadcast %cst_12 : f32 to vector<1x128xf32>
      %c0_13 = arith.constant 0 : index
      %c0_14 = arith.constant 0 : index
      %24 = vector.load %arg2[%c0_13, %c0_14] : memref<1x128xf32, #tpu.memory_space<vmem>>, vector<1x128xf32>
      tpu.vector_store %arg2[%c0_13, %c0_14], %23 {strides = array<i32>} : memref<1x128xf32, #tpu.memory_space<vmem>>, vector<1x128xf32>,
      %cst_15 = arith.constant 0.000000e+00 : f32
      %25 = vector.broadcast %cst_15 : f32 to vector<1x128xf32>
      %c0_16 = arith.constant 0 : index
      %c0_17 = arith.constant 0 : index
      %26 = vector.load %arg3[%c0_16, %c0_17] : memref<1x128xf32, #tpu.memory_space<vmem>>, vector<1x128xf32>
      tpu.vector_store %arg3[%c0_16, %c0_17], %25 {strides = array<i32>} : memref<1x128xf32, #tpu.memory_space<vmem>>, vector<1x128xf32>,
    } else {
    }
    %c256_i32 = arith.constant 256 : i32
    %3 = arith.muli %arg0, %c256_i32 : i32
    %4 = tpu.iota {dimensions = array<i32: 0>} : vector<256x128xi32>
    %5 = vector.broadcast %3 : i32 to vector<256x128xi32>
    %6 = arith.addi %5, %4 : vector<256x128xi32>
    %c512_i32 = arith.constant 512 : i32
    %7 = vector.broadcast %c512_i32 : i32 to vector<256x128xi32>
    %8 = arith.cmpi slt, %6, %7 : vector<256x128xi32>
    %c0 = arith.constant 0 : index
    %c0_1 = arith.constant 0 : index
    %9 = vector.load %arg1[%c0, %c0_1] : memref<256x128xf32, #tpu.memory_space<vmem>>, vector<256x128xf32>
    %cst = arith.constant 0.000000e+00 : f32
    %10 = vector.broadcast %cst : f32 to vector<256x128xf32>
    %11 = arith.select %8, %9, %10 : vector<256x128xi1>, vector<256x128xf32>
    %c0_2 = arith.constant 0 : index
    %c0_3 = arith.constant 0 : index
    %12 = vector.load %arg2[%c0_2, %c0_3] : memref<1x128xf32, #tpu.memory_space<vmem>>, vector<1x128xf32>
    %cst_4 = arith.constant dense<0.000000e+00> : vector<128xf32>
    %13 = vector.multi_reduction <add>, %11, %cst_4 [0] : vector<256x128xf32> to vector<128xf32>
    %14 = vector.shape_cast %13 : vector<128xf32> to vector<1x128xf32>
    %15 = arith.addf %12, %14 : vector<1x128xf32>
    %c0_5 = arith.constant 0 : index
    %c0_6 = arith.constant 0 : index
    %16 = vector.load %arg2[%c0_5, %c0_6] : memref<1x128xf32, #tpu.memory_space<vmem>>, vector<1x128xf32>
    tpu.vector_store %arg2[%c0_5, %c0_6], %15 {strides = array<i32>} : memref<1x128xf32, #tpu.memory_space<vmem>>, vector<1x128xf32>,
    %c0_7 = arith.constant 0 : index
    %c0_8 = arith.constant 0 : index
    %17 = vector.load %arg3[%c0_7, %c0_8] : memref<1x128xf32, #tpu.memory_space<vmem>>, vector<1x128xf32>
    %18 = arith.mulf %11, %11 : vector<256x128xf32>
    %cst_9 = arith.constant dense<0.000000e+00> : vector<128xf32>
    %19 = vector.multi_reduction <add>, %18, %cst_9 [0] : vector<256x128xf32> to vector<128xf32>
    %20 = vector.shape_cast %19 : vector<128xf32> to vector<1x128xf32>
    %21 = arith.addf %17, %20 : vector<1x128xf32>
    %c0_10 = arith.constant 0 : index
    %c0_11 = arith.constant 0 : index
    %22 = vector.load %arg3[%c0_10, %c0_11] : memref<1x128xf32, #tpu.memory_space<vmem>>, vector<1x128xf32>
    tpu.vector_store %arg3[%c0_10, %c0_11], %21 {strides = array<i32>} : memref<1x128xf32, #tpu.memory_space<vmem>>, vector<1x128xf32>,
    return
  }
  func.func @transform_0(%arg0: i32) -> (i32, i32) {
    %c0_i32 = arith.constant 0 : i32
    %c0_i32_0 = arith.constant 0 : i32
    return %arg0, %c0_i32 : i32, i32
  }
  func.func @transform_1(%arg0: i32) -> (i32, i32) {
    %c0_i32 = arith.constant 0 : i32
    %c0_i32_0 = arith.constant 0 : i32
    %c0_i32_1 = arith.constant 0 : i32
    return %c0_i32, %c0_i32_0 : i32, i32
  }
  func.func @transform_2(%arg0: i32) -> (i32, i32) {
    %c0_i32 = arith.constant 0 : i32
    %c0_i32_0 = arith.constant 0 : i32
    %c0_i32_1 = arith.constant 0 : i32
    return %c0_i32, %c0_i32_0 : i32, i32
  }
}

module attributes {stable_mosaic.version = 11 : i64} {
  func.func @_bn_apply_kernel(%arg0: i32, %arg1: memref<256x128xf32, #tpu.memory_space<vmem>>, %arg2: memref<1x128xf32, #tpu.memory_space<vmem>>, %arg3: memref<1x128xf32, #tpu.memory_space<vmem>>, %arg4: memref<256x128xf32, #tpu.memory_space<vmem>>) attributes {dimension_semantics = [#tpu.dimension_semantics<parallel>], iteration_bounds = array<i64: 2>, scalar_prefetch = 0 : i64, scratch_operands = 0 : i64, tpu.core_type = #tpu.core_type<tc>, window_params = [{transform_indices = @transform_0, window_bounds = array<i64: 256, 128>}, {pipeline_mode = #tpu.pipeline_mode<synchronous>, transform_indices = @transform_1, window_bounds = array<i64: 1, 128>}, {pipeline_mode = #tpu.pipeline_mode<synchronous>, transform_indices = @transform_2, window_bounds = array<i64: 1, 128>}, {transform_indices = @transform_3, window_bounds = array<i64: 256, 128>}]} {
    %c0 = arith.constant 0 : index
    %c0_0 = arith.constant 0 : index
    %0 = vector.load %arg1[%c0, %c0_0] : memref<256x128xf32, #tpu.memory_space<vmem>>, vector<256x128xf32>
    %c0_1 = arith.constant 0 : index
    %c0_2 = arith.constant 0 : index
    %1 = vector.load %arg2[%c0_1, %c0_2] : memref<1x128xf32, #tpu.memory_space<vmem>>, vector<1x128xf32>
    %2 = vector.broadcast %1 : vector<1x128xf32> to vector<256x128xf32>
    %3 = arith.mulf %0, %2 : vector<256x128xf32>
    %c0_3 = arith.constant 0 : index
    %c0_4 = arith.constant 0 : index
    %4 = vector.load %arg3[%c0_3, %c0_4] : memref<1x128xf32, #tpu.memory_space<vmem>>, vector<1x128xf32>
    %5 = vector.broadcast %4 : vector<1x128xf32> to vector<256x128xf32>
    %6 = arith.addf %3, %5 : vector<256x128xf32>
    %cst = arith.constant 0.000000e+00 : f32
    %7 = vector.broadcast %cst : f32 to vector<256x128xf32>
    %8 = arith.cmpf oge, %6, %7 : vector<256x128xf32>
    %cst_5 = arith.constant 0.00999999977 : f32
    %9 = vector.broadcast %cst_5 : f32 to vector<256x128xf32>
    %10 = arith.mulf %9, %6 : vector<256x128xf32>
    %11 = arith.select %8, %6, %10 : vector<256x128xi1>, vector<256x128xf32>
    %c0_6 = arith.constant 0 : index
    %c0_7 = arith.constant 0 : index
    %12 = vector.load %arg4[%c0_6, %c0_7] : memref<256x128xf32, #tpu.memory_space<vmem>>, vector<256x128xf32>
    tpu.vector_store %arg4[%c0_6, %c0_7], %11 {strides = array<i32>} : memref<256x128xf32, #tpu.memory_space<vmem>>, vector<256x128xf32>,
    return
  }
  func.func @transform_0(%arg0: i32) -> (i32, i32) {
    %c0_i32 = arith.constant 0 : i32
    %c0_i32_0 = arith.constant 0 : i32
    return %arg0, %c0_i32 : i32, i32
  }
  func.func @transform_1(%arg0: i32) -> (i32, i32) {
    %c0_i32 = arith.constant 0 : i32
    %c0_i32_0 = arith.constant 0 : i32
    %c0_i32_1 = arith.constant 0 : i32
    return %c0_i32, %c0_i32_0 : i32, i32
  }
  func.func @transform_2(%arg0: i32) -> (i32, i32) {
    %c0_i32 = arith.constant 0 : i32
    %c0_i32_0 = arith.constant 0 : i32
    %c0_i32_1 = arith.constant 0 : i32
    return %c0_i32, %c0_i32_0 : i32, i32
  }
  func.func @transform_3(%arg0: i32) -> (i32, i32) {
    %c0_i32 = arith.constant 0 : i32
    %c0_i32_0 = arith.constant 0 : i32
    return %arg0, %c0_i32 : i32, i32
  }
}

</mosaic_0001>

<llo_original>
// kernel: tile.18
$region0: #{tile.18}
  #allocation0 [shape = 's32[1]{0}', space=sflag, size = 0x4, scoped, tag = 'scoped memory for tile.18']
  %s0 = inlined_call_operand.vmem [shape: f32[32], index: 0, kind: input, shape index: {}]
  %s1 = inlined_call_operand.vmem [shape: f32[4,32], index: 1, kind: output, shape index: {}]
  // Predicated region
  $region2: #{tile.18} parent=0 // pred_check
    _
  $region3: #{tile.18} parent=0 // pred_check_branch
    %3 = sbr.rel (0) target = $region5
  $region4: #{tile.18} parent=0 // pred_region
    _
  $region5: #{tile.18} parent=0 // pred_fallthru
    _
  %v4 = vld [vmem:[%s0] ss:$0 sm:$0xff]
  %5 = vst [vmem:[%s1] sm:$0xf] %v4

// kernel: tile.19
$region0: #{tile.19}
  %s0 = inlined_call_operand.vmem [shape: f32[4,32], index: 0, kind: input, shape index: {}]
  %s1 = inlined_call_operand.vmem [shape: f32[1,128], index: 1, kind: output, shape index: {}]
  $region1: #{tile.19} parent=0
    #allocation0 [shape = 'u8[4096]{0}', space=vmem, size = 0x1000, scoped, tag = 'scoped mem for output reshape']
    #allocation1 [shape = 'u8[4096]{0}', space=vmem, size = 0x1000, scoped, tag = 'scoped mem for input reshape']
    %s3 = sshllo.u32 0, 4
    %v4 = vld [vmem:[%s0] sm:%s3]
    %5 = vst [vmem:[#allocation1] sm:%s3] %v4
    %v6 = vld [vmem:[#allocation1] sm:$0x1]
    %vm7 = vcmask 261120
    %8 = vst.msk [vmem:[#allocation0] sm:$0x1] %vm7, %v6
    %s9 = scalar_lea.vmem [#allocation1], 3
    %v10 = vld [vmem:[%s9] sm:$0x1]
    %11 = vrot.lane.b32.xlu0 %v10, 96
    %v12 = vpop.permute.xlu0 %11
    %vm13 = vcmask 1048320
    %14 = vst.msk [vmem:[#allocation0] sm:$0x1] %vm13, %v12
    %s15 = scalar_lea.vmem [#allocation1], 2
    %v16 = vld [vmem:[%s15] sm:$0x1]
    %17 = vrot.lane.b32.xlu0 %v16, 64
    %v18 = vpop.permute.xlu0 %17
    %vm19 = vcmask 785920
    %20 = vst.msk [vmem:[#allocation0] sm:$0x1] %vm19, %v18
    %s21 = scalar_lea.vmem [#allocation1], 1
    %v22 = vld [vmem:[%s21] sm:$0x1]
    %23 = vrot.lane.b32.xlu0 %v22, 32
    %v24 = vpop.permute.xlu0 %23
    %vm25 = vcmask 523520
    %26 = vst.msk [vmem:[#allocation0] sm:$0x1] %vm25, %v24
    %s28 = sshllo.u32 0, 1
    %v30 = vld [vmem:[#allocation0] sm:%s28]
    %s31 = sshllo.u32 0, 1
    %32 = vst [vmem:[%s1] sm:%s31] %v30

// kernel: convt_block_forward.4
$region0: #{convt_block_forward.4}
  #allocation0 [shape = 'u32[]', space=smem, size = 0x4, offset = 0x4, fixed_abs, tag = 'smem constant byte address 0x4 - core index']
  #allocation1 [shape = 'u32[144,128]{1,0:T(1,128)}', space=vmem, size = 0x12000, scoped, tag = 'internal scratch']
  %s0 = inlined_call_operand.vmem [shape: f32[512,128], index: 0, kind: input, shape index: {}]
  %s1 = inlined_call_operand.vmem [shape: f32[1,128], index: 1, kind: output, shape index: {0}]
  %s2 = inlined_call_operand.vmem [shape: f32[1,128], index: 2, kind: output, shape index: {1}]
  %3 = xla_tuple %s1, %s2
  %s4 = sld [smem:[#allocation0]]
  $region49: #{convt_block_forward.4} parent=0
    _
  %s6 = ssub.s32 1, %s4
  %s7 = scalar_select 0, %s6, %s4
  loop: start=0, step=1, limit=4
  $region2: #{convt_block_forward.4} parent=0 // loop_pre_header
    _
  $region3: #{convt_block_forward.4} parent=0 // loop_header
    %s9 = sphi 0, %s13
    %p10 = scmp.ge.s32.totalorder %s9, 4
    %s19 = sphi 0, %s21
    %s22 = sphi 0, %s19
    %s23 = sphi 0, %s22
    %s39 = sphi 0, %s23
    %s43 = sphi 0, %s43
    %s45 = sphi 0, %s43
    %s46 = sphi 0, %s45
    %s60 = sphi 0, %s46
    %s64 = sphi 0, %s64
    %s66 = sphi 0, %s64
    %s67 = sphi 0, %s66
    %s81 = sphi 0, %s67
  $region4: #{convt_block_forward.4} parent=0 // loop_header_branch
    %12 = sbr.rel (%p10) target = $region8
  $region5: #{convt_block_forward.4} parent=0 // loop_body
    %s14 = ssub.s32 %s9, 1
    %s15 = ssub.s32 %s9, 2
    %s16 = sadd.s32 %s9, 1
    %s17 = ssub.s32 %s9, %s16
    %p18 = scmp.eq.s32.totalorder %s17, 0
    %s20 = sadd.s32 %s19, 1
    %s21 = scalar_select %p18, %s19, %s20
    %p24 = pneg %p18
    %p25 = scmp.eq.s32.totalorder %s9, 1
    %p26 = por %p24, %p25
    %p27 = scmp.ne.s32.totalorder %s19, %s22
    %p28 = scmp.eq.s32.totalorder %s9, 0
    %p29 = por %p27, %p28
    %p30 = scmp.ne.s32.totalorder %s19, %s22
    %p31 = scmp.eq.s32.totalorder %s14, 1
    %p32 = por %p30, %p31
    %p33 = scmp.ne.s32.totalorder %s22, %s23
    %p34 = scmp.eq.s32.totalorder %s14, 0
    %p35 = por %p33, %p34
    %p36 = scmp.ne.s32.totalorder %s22, %s23
    %p37 = scmp.eq.s32.totalorder %s15, 1
    %p38 = por %p36, %p37
    %p40 = scmp.ne.s32.totalorder %s23, %s39
    %p41 = scmp.eq.s32.totalorder %s15, 0
    %p42 = por %p40, %p41
    %s44 = sadd.s32 %s43, 1
    %p47 = scmp.eq.s32.totalorder %s9, 1
    %p48 = scmp.ne.s32.totalorder %s43, %s45
    %p49 = scmp.eq.s32.totalorder %s9, 0
    %p50 = por %p48, %p49
    %p51 = scmp.ne.s32.totalorder %s43, %s45
    %p52 = scmp.eq.s32.totalorder %s14, 1
    %p53 = por %p51, %p52
    %p54 = scmp.ne.s32.totalorder %s45, %s46
    %p55 = scmp.eq.s32.totalorder %s14, 0
    %p56 = por %p54, %p55
    %p57 = scmp.ne.s32.totalorder %s45, %s46
    %p58 = scmp.eq.s32.totalorder %s15, 1
    %p59 = por %p57, %p58
    %p61 = scmp.ne.s32.totalorder %s46, %s60
    %p62 = scmp.eq.s32.totalorder %s15, 0
    %p63 = por %p61, %p62
    %s65 = sadd.s32 %s64, 1
    %p68 = scmp.eq.s32.totalorder %s9, 1
    %p69 = scmp.ne.s32.totalorder %s64, %s66
    %p70 = scmp.eq.s32.totalorder %s9, 0
    %p71 = por %p69, %p70
    %p72 = scmp.ne.s32.totalorder %s64, %s66
    %p73 = scmp.eq.s32.totalorder %s14, 1
    %p74 = por %p72, %p73
    %p75 = scmp.ne.s32.totalorder %s66, %s67
    %p76 = scmp.eq.s32.totalorder %s14, 0
    %p77 = por %p75, %p76
    %p78 = scmp.ne.s32.totalorder %s66, %s67
    %p79 = scmp.eq.s32.totalorder %s15, 1
    %p80 = por %p78, %p79
    %p82 = scmp.ne.s32.totalorder %s67, %s81
    %p83 = scmp.eq.s32.totalorder %s15, 0
    %p84 = por %p82, %p83
    %p85 = scmp.le.s32.totalorder 1, %s9
    %p86 = scmp.lt.s32.totalorder %s9, 3
    %p87 = pnand %p85, %p86
    %p88 = pneg %p87
    // Predicated region
    $region9: #{convt_block_forward.4} parent=5 // pred_check
      _
    $region10: #{convt_block_forward.4} parent=5 // pred_check_branch
      %90 = sbr.rel (%p87) target = $region12
    $region11: #{convt_block_forward.4} parent=5 // pred_region
      %s91 = ssub.s32 %s9, 1
    $region12: #{convt_block_forward.4} parent=5 // pred_fallthru
      _
    %p92 = scmp.lt.s32.totalorder %s9, 2
    // Predicated region
    $region13: #{convt_block_forward.4} parent=5 // pred_check
      %p93 = pneg %p92
    $region14: #{convt_block_forward.4} parent=5 // pred_check_branch
      %95 = sbr.rel (%p93) target = $region16
    $region15: #{convt_block_forward.4} parent=5 // pred_region
      // Predicated region
      $region17: #{convt_block_forward.4} parent=15 // pred_check
        %p96 = pneg %p29
      $region18: #{convt_block_forward.4} parent=15 // pred_check_branch
        %98 = sbr.rel (%p96) target = $region20
      $region19: #{convt_block_forward.4} parent=15 // pred_region
        %s99 = smul.u32 32, %s9
        %p100 = scmp.lt.s32.totalorder %s99, 63
        %s101 = scalar_select %p100, %s99, 63
        %s102 = smul.addr %s101, 8
        %s103 = scalar_lea.vmem %s0, %s102
        %s104 = smul.u32 32, %s9
      $region20: #{convt_block_forward.4} parent=15 // pred_fallthru
        _
    $region16: #{convt_block_forward.4} parent=5 // pred_fallthru
      _
    %p105 = scmp.le.s32.totalorder 1, %s9
    %p106 = scmp.lt.s32.totalorder %s9, 3
    %p107 = pnand %p105, %p106
    %p108 = pneg %p107
    // Predicated region
    $region21: #{convt_block_forward.4} parent=5 // pred_check
      _
    $region22: #{convt_block_forward.4} parent=5 // pred_check_branch
      %110 = sbr.rel (%p107) target = $region24
    $region23: #{convt_block_forward.4} parent=5 // pred_region
      %s111 = ssub.s32 %s9, 1
      %s112 = smul.u32 32, %s14
      %p113 = scmp.lt.s32.totalorder %s112, 63
      %s114 = scalar_select %p113, %s112, 63
      %s115 = smul.addr %s114, 8
      %s116 = scalar_lea.vmem %s0, %s115
      %p117 = pneg %p35
      %p118 = pneg %p32
      %p119 = pneg %p56
      %p120 = pneg %p53
      %p121 = pneg %p77
      %p122 = pneg %p74
      %s123 = smul.u32 32, %s14
      %p124 = scmp.lt.s32.totalorder %s123, 63
      %s125 = scalar_select %p124, %s123, 63
      %s126 = smul.addr %s125, 8
      %s127 = scalar_lea.vmem %s0, %s126
      %s128 = smul.u32 32, %s14
      %p129 = scmp.eq.s32.totalorder %s14, 0
      // Predicated region
      $region25: #{convt_block_forward.4} parent=23 // pred_check
        %p130 = pneg %p129
      $region26: #{convt_block_forward.4} parent=23 // pred_check_branch
        %132 = sbr.rel (%p130) target = $region28
      $region27: #{convt_block_forward.4} parent=23 // pred_region
        %133 = vst [vmem:[%s1] sm:$0x1] 0.0
        %134 = vst [vmem:[%s2] sm:$0x1] 0.0
      $region28: #{convt_block_forward.4} parent=23 // pred_fallthru
        _
      %s135 = smul.u32 %s14, 256
      %v136 = vlaneseq
      %v137 = vshrl.u32 %v136, 7
      %v138 = vadd.s32 %v137, 8
      %v139 = vadd.s32 %v137, 16
      %v140 = vadd.s32 %v137, 24
      %v141 = vadd.s32 %v137, 32
      %v142 = vadd.s32 %v137, 40
      %v143 = vadd.s32 %v137, 48
      %v144 = vadd.s32 %v137, 56
      %v145 = vadd.s32 %v137, 64
      %v146 = vadd.s32 %v137, 72
      %v147 = vadd.s32 %v137, 80
      %v148 = vadd.s32 %v137, 88
      %v149 = vadd.s32 %v137, 96
      %v150 = vadd.s32 %v137, 104
      %v151 = vadd.s32 %v137, 112
      %v152 = vadd.s32 %v137, 120
      %v153 = vadd.s32 %v137, 128
      %v154 = vadd.s32 %v137, 136
      %v155 = vadd.s32 %v137, 144
      %v156 = vadd.s32 %v137, 152
      %v157 = vadd.s32 %v137, 160
      %v158 = vadd.s32 %v137, 168
      %v159 = vadd.s32 %v137, 176
      %v160 = vadd.s32 %v137, 184
      %v161 = vadd.s32 %v137, 192
      %v162 = vadd.s32 %v137, 200
      %v163 = vadd.s32 %v137, 208
      %v164 = vadd.s32 %v137, 216
      %v165 = vadd.s32 %v137, 224
      %v166 = vadd.s32 %v137, 232
      %v167 = vadd.s32 %v137, 240
      %v168 = vadd.s32 %v137, 248
      %v169 = vstv %s135
      %v170 = vadd.s32 %v169, %v137
      %v171 = vadd.s32 %v169, %v138
      %v172 = vadd.s32 %v169, %v139
      %v173 = vadd.s32 %v169, %v140
      %v174 = vadd.s32 %v169, %v141
      %v175 = vadd.s32 %v169, %v142
      %v176 = vadd.s32 %v169, %v143
      %v177 = vadd.s32 %v169, %v144
      %v178 = vadd.s32 %v169, %v145
      %v179 = vadd.s32 %v169, %v146
      %v180 = vadd.s32 %v169, %v147
      %v181 = vadd.s32 %v169, %v148
      %v182 = vadd.s32 %v169, %v149
      %v183 = vadd.s32 %v169, %v150
      %v184 = vadd.s32 %v169, %v151
      %v185 = vadd.s32 %v169, %v152
      %v186 = vadd.s32 %v169, %v153
      %v187 = vadd.s32 %v169, %v154
      %v188 = vadd.s32 %v169, %v155
      %v189 = vadd.s32 %v169, %v156
      %v190 = vadd.s32 %v169, %v157
      %v191 = vadd.s32 %v169, %v158
      %v192 = vadd.s32 %v169, %v159
      %v193 = vadd.s32 %v169, %v160
      %v194 = vadd.s32 %v169, %v161
      %v195 = vadd.s32 %v169, %v162
      %v196 = vadd.s32 %v169, %v163
      %v197 = vadd.s32 %v169, %v164
      %v198 = vadd.s32 %v169, %v165
      %v199 = vadd.s32 %v169, %v166
      %v200 = vadd.s32 %v169, %v167
      %v201 = vadd.s32 %v169, %v168
      %vm202 = vcmp.lt.s32.totalorder %v170, 512
      %vm203 = vcmp.lt.s32.totalorder %v171, 512
      %vm204 = vcmp.lt.s32.totalorder %v172, 512
      %vm205 = vcmp.lt.s32.totalorder %v173, 512
      %vm206 = vcmp.lt.s32.totalorder %v174, 512
      %vm207 = vcmp.lt.s32.totalorder %v175, 512
      %vm208 = vcmp.lt.s32.totalorder %v176, 512
      %vm209 = vcmp.lt.s32.totalorder %v177, 512
      %vm210 = vcmp.lt.s32.totalorder %v178, 512
      %vm211 = vcmp.lt.s32.totalorder %v179, 512
      %vm212 = vcmp.lt.s32.totalorder %v180, 512
      %vm213 = vcmp.lt.s32.totalorder %v181, 512
      %vm214 = vcmp.lt.s32.totalorder %v182, 512
      %vm215 = vcmp.lt.s32.totalorder %v183, 512
      %vm216 = vcmp.lt.s32.totalorder %v184, 512
      %vm217 = vcmp.lt.s32.totalorder %v185, 512
      %vm218 = vcmp.lt.s32.totalorder %v186, 512
      %vm219 = vcmp.lt.s32.totalorder %v187, 512
      %vm220 = vcmp.lt.s32.totalorder %v188, 512
      %vm221 = vcmp.lt.s32.totalorder %v189, 512
      %vm222 = vcmp.lt.s32.totalorder %v190, 512
      %vm223 = vcmp.lt.s32.totalorder %v191, 512
      %vm224 = vcmp.lt.s32.totalorder %v192, 512
      %vm225 = vcmp.lt.s32.totalorder %v193, 512
      %vm226 = vcmp.lt.s32.totalorder %v194, 512
      %vm227 = vcmp.lt.s32.totalorder %v195, 512
      %vm228 = vcmp.lt.s32.totalorder %v196, 512
      %vm229 = vcmp.lt.s32.totalorder %v197, 512
      %vm230 = vcmp.lt.s32.totalorder %v198, 512
      %vm231 = vcmp.lt.s32.totalorder %v199, 512
      %vm232 = vcmp.lt.s32.totalorder %v200, 512
      %vm233 = vcmp.lt.s32.totalorder %v201, 512
      %v234 = vld [vmem:[%s127] sm:$0xff]
      %v235 = vld [vmem:[%s127 + $0x8] sm:$0xff]
      %v236 = vld [vmem:[%s127 + $0x10] sm:$0xff]
      %v237 = vld [vmem:[%s127 + $0x18] sm:$0xff]
      %v238 = vld [vmem:[%s127 + $0x20] sm:$0xff]
      %v239 = vld [vmem:[%s127 + $0x28] sm:$0xff]
      %v240 = vld [vmem:[%s127 + $0x30] sm:$0xff]
      %v241 = vld [vmem:[%s127 + $0x38] sm:$0xff]
      %v242 = vld [vmem:[%s127 + $0x40] sm:$0xff]
      %v243 = vld [vmem:[%s127 + $0x48] sm:$0xff]
      %v244 = vld [vmem:[%s127 + $0x50] sm:$0xff]
      %v245 = vld [vmem:[%s127 + $0x58] sm:$0xff]
      %v246 = vld [vmem:[%s127 + $0x60] sm:$0xff]
      %v247 = vld [vmem:[%s127 + $0x68] sm:$0xff]
      %v248 = vld [vmem:[%s127 + $0x70] sm:$0xff]
      %v249 = vld [vmem:[%s127 + $0x78] sm:$0xff]
      %v250 = vld [vmem:[%s127 + $0x80] sm:$0xff]
      %v251 = vld [vmem:[%s127 + $0x88] sm:$0xff]
      %v252 = vld [vmem:[%s127 + $0x90] sm:$0xff]
      %v253 = vld [vmem:[%s127 + $0x98] sm:$0xff]
      %v254 = vld [vmem:[%s127 + $0xa0] sm:$0xff]
      %v255 = vld [vmem:[%s127 + $0xa8] sm:$0xff]
      %v256 = vld [vmem:[%s127 + $0xb0] sm:$0xff]
      %v257 = vld [vmem:[%s127 + $0xb8] sm:$0xff]
      %v258 = vld [vmem:[%s127 + $0xc0] sm:$0xff]
      %v259 = vld [vmem:[%s127 + $0xc8] sm:$0xff]
      %v260 = vld [vmem:[%s127 + $0xd0] sm:$0xff]
      %v261 = vld [vmem:[%s127 + $0xd8] sm:$0xff]
      %v262 = vld [vmem:[%s127 + $0xe0] sm:$0xff]
      %v263 = vld [vmem:[%s127 + $0xe8] sm:$0xff]
      %v264 = vld [vmem:[%s127 + $0xf0] sm:$0xff]
      %v265 = vld [vmem:[%s127 + $0xf8] sm:$0xff]
      %v266 = vsel %vm202, %v234, 0.0
      %v267 = vsel %vm203, %v235, 0.0
      %v268 = vsel %vm204, %v236, 0.0
      %v269 = vsel %vm205, %v237, 0.0
      %v270 = vsel %vm206, %v238, 0.0
      %v271 = vsel %vm207, %v239, 0.0
      %v272 = vsel %vm208, %v240, 0.0
      %v273 = vsel %vm209, %v241, 0.0
      %v274 = vsel %vm210, %v242, 0.0
      %v275 = vsel %vm211, %v243, 0.0
      %v276 = vsel %vm212, %v244, 0.0
      %v277 = vsel %vm213, %v245, 0.0
      %v278 = vsel %vm214, %v246, 0.0
      %v279 = vsel %vm215, %v247, 0.0
      %v280 = vsel %vm216, %v248, 0.0
      %v281 = vsel %vm217, %v249, 0.0
      %v282 = vsel %vm218, %v250, 0.0
      %v283 = vsel %vm219, %v251, 0.0
      %v284 = vsel %vm220, %v252, 0.0
      %v285 = vsel %vm221, %v253, 0.0
      %v286 = vsel %vm222, %v254, 0.0
      %v287 = vsel %vm223, %v255, 0.0
      %v288 = vsel %vm224, %v256, 0.0
      %v289 = vsel %vm225, %v257, 0.0
      %v290 = vsel %vm226, %v258, 0.0
      %v291 = vsel %vm227, %v259, 0.0
      %v292 = vsel %vm228, %v260, 0.0
      %v293 = vsel %vm229, %v261, 0.0
      %v294 = vsel %vm230, %v262, 0.0
      %v295 = vsel %vm231, %v263, 0.0
      %v296 = vsel %vm232, %v264, 0.0
      %v297 = vsel %vm233, %v265, 0.0
      %v298 = vld [vmem:[%s1] sm:$0x1]
      %v299 = vadd.f32 %v266, %v267
      %v300 = vadd.f32 %v299, %v268
      %v301 = vadd.f32 %v300, %v269
      %v302 = vadd.f32 %v301, %v270
      %v303 = vadd.f32 %v302, %v271
      %v304 = vadd.f32 %v303, %v272
      %v305 = vadd.f32 %v304, %v273
      %v306 = vadd.f32 %v305, %v274
      %v307 = vadd.f32 %v306, %v275
      %v308 = vadd.f32 %v307, %v276
      %v309 = vadd.f32 %v308, %v277
      %v310 = vadd.f32 %v309, %v278
      %v311 = vadd.f32 %v310, %v279
      %v312 = vadd.f32 %v311, %v280
      %v313 = vadd.f32 %v312, %v281
      %v314 = vadd.f32 %v313, %v282
      %v315 = vadd.f32 %v314, %v283
      %v316 = vadd.f32 %v315, %v284
      %v317 = vadd.f32 %v316, %v285
      %v318 = vadd.f32 %v317, %v286
      %v319 = vadd.f32 %v318, %v287
      %v320 = vadd.f32 %v319, %v288
      %v321 = vadd.f32 %v320, %v289
      %v322 = vadd.f32 %v321, %v290
      %v323 = vadd.f32 %v322, %v291
      %v324 = vadd.f32 %v323, %v292
      %v325 = vadd.f32 %v324, %v293
      %v326 = vadd.f32 %v325, %v294
      %v327 = vadd.f32 %v326, %v295
      %v328 = vadd.f32 %v327, %v296
      %v329 = vadd.f32 %v328, %v297
      %v330 = vrot.slane %v329, 4
      %v331 = vadd.f32 %v329, %v330
      %v332 = vrot.slane %v331, 2
      %v333 = vadd.f32 %v331, %v332
      %v334 = vrot.slane %v333, 1
      %v335 = vadd.f32 %v333, %v334
      %v336 = vadd.f32 %v298, %v335
      %337 = vst [vmem:[%s1] sm:$0x1] %v336
      %v338 = vld [vmem:[%s2] sm:$0x1]
      %v339 = vmul.f32 %v266, %v266
      %v340 = vmul.f32 %v267, %v267
      %v341 = vmul.f32 %v268, %v268
      %v342 = vmul.f32 %v269, %v269
      %v343 = vmul.f32 %v270, %v270
      %v344 = vmul.f32 %v271, %v271
      %v345 = vmul.f32 %v272, %v272
      %v346 = vmul.f32 %v273, %v273
      %v347 = vmul.f32 %v274, %v274
      %v348 = vmul.f32 %v275, %v275
      %v349 = vmul.f32 %v276, %v276
      %v350 = vmul.f32 %v277, %v277
      %v351 = vmul.f32 %v278, %v278
      %v352 = vmul.f32 %v279, %v279
      %v353 = vmul.f32 %v280, %v280
      %v354 = vmul.f32 %v281, %v281
      %v355 = vmul.f32 %v282, %v282
      %v356 = vmul.f32 %v283, %v283
      %v357 = vmul.f32 %v284, %v284
      %v358 = vmul.f32 %v285, %v285
      %v359 = vmul.f32 %v286, %v286
      %v360 = vmul.f32 %v287, %v287
      %v361 = vmul.f32 %v288, %v288
      %v362 = vmul.f32 %v289, %v289
      %v363 = vmul.f32 %v290, %v290
      %v364 = vmul.f32 %v291, %v291
      %v365 = vmul.f32 %v292, %v292
      %v366 = vmul.f32 %v293, %v293
      %v367 = vmul.f32 %v294, %v294
      %v368 = vmul.f32 %v295, %v295
      %v369 = vmul.f32 %v296, %v296
      %v370 = vmul.f32 %v297, %v297
      %v371 = vadd.f32 %v339, %v340
      %v372 = vadd.f32 %v371, %v341
      %v373 = vadd.f32 %v372, %v342
      %v374 = vadd.f32 %v373, %v343
      %v375 = vadd.f32 %v374, %v344
      %v376 = vadd.f32 %v375, %v345
      %v377 = vadd.f32 %v376, %v346
      %v378 = vadd.f32 %v377, %v347
      %v379 = vadd.f32 %v378, %v348
      %v380 = vadd.f32 %v379, %v349
      %v381 = vadd.f32 %v380, %v350
      %v382 = vadd.f32 %v381, %v351
      %v383 = vadd.f32 %v382, %v352
      %v384 = vadd.f32 %v383, %v353
      %v385 = vadd.f32 %v384, %v354
      %v386 = vadd.f32 %v385, %v355
      %v387 = vadd.f32 %v386, %v356
      %v388 = vadd.f32 %v387, %v357
      %v389 = vadd.f32 %v388, %v358
      %v390 = vadd.f32 %v389, %v359
      %v391 = vadd.f32 %v390, %v360
      %v392 = vadd.f32 %v391, %v361
      %v393 = vadd.f32 %v392, %v362
      %v394 = vadd.f32 %v393, %v363
      %v395 = vadd.f32 %v394, %v364
      %v396 = vadd.f32 %v395, %v365
      %v397 = vadd.f32 %v396, %v366
      %v398 = vadd.f32 %v397, %v367
      %v399 = vadd.f32 %v398, %v368
      %v400 = vadd.f32 %v399, %v369
      %v401 = vadd.f32 %v400, %v370
      %v402 = vrot.slane %v401, 4
      %v403 = vadd.f32 %v401, %v402
      %v404 = vrot.slane %v403, 2
      %v405 = vadd.f32 %v403, %v404
      %v406 = vrot.slane %v405, 1
      %v407 = vadd.f32 %v405, %v406
      %v408 = vadd.f32 %v338, %v407
      %409 = vst [vmem:[%s2] sm:$0x1] %v408
      // Predicated region
      $region29: #{convt_block_forward.4} parent=23 // pred_check
        %p410 = pneg %p53
      $region30: #{convt_block_forward.4} parent=23 // pred_check_branch
        %412 = sbr.rel (%p410) target = $region32
      $region31: #{convt_block_forward.4} parent=23 // pred_region
        _
      $region32: #{convt_block_forward.4} parent=23 // pred_fallthru
        _
      // Predicated region
      $region33: #{convt_block_forward.4} parent=23 // pred_check
        %p413 = pneg %p74
      $region34: #{convt_block_forward.4} parent=23 // pred_check_branch
        %415 = sbr.rel (%p413) target = $region36
      $region35: #{convt_block_forward.4} parent=23 // pred_region
        _
      $region36: #{convt_block_forward.4} parent=23 // pred_fallthru
        _
      // Predicated region
      $region37: #{convt_block_forward.4} parent=23 // pred_check
        %p416 = pneg %p53
      $region38: #{convt_block_forward.4} parent=23 // pred_check_branch
        %418 = sbr.rel (%p416) target = $region40
      $region39: #{convt_block_forward.4} parent=23 // pred_region
        _
      $region40: #{convt_block_forward.4} parent=23 // pred_fallthru
        _
      // Predicated region
      $region41: #{convt_block_forward.4} parent=23 // pred_check
        %p419 = pneg %p74
      $region42: #{convt_block_forward.4} parent=23 // pred_check_branch
        %421 = sbr.rel (%p419) target = $region44
      $region43: #{convt_block_forward.4} parent=23 // pred_region
        _
      $region44: #{convt_block_forward.4} parent=23 // pred_fallthru
        _
    $region24: #{convt_block_forward.4} parent=5 // pred_fallthru
      _
    %p422 = scmp.le.s32.totalorder 2, %s9
    // Predicated region
    $region45: #{convt_block_forward.4} parent=5 // pred_check
      %p423 = pneg %p422
    $region46: #{convt_block_forward.4} parent=5 // pred_check_branch
      %425 = sbr.rel (%p423) target = $region48
    $region47: #{convt_block_forward.4} parent=5 // pred_region
      %s426 = ssub.s32 %s9, 2
    $region48: #{convt_block_forward.4} parent=5 // pred_fallthru
      _
  $region6: #{convt_block_forward.4} parent=0 // loop_footer
    %s13 = sadd.s32 1, %s9
  $region7: #{convt_block_forward.4} parent=0 // loop_footer_branch
    %8 = sbr.rel target = $region3
  $region8: #{convt_block_forward.4} parent=0 // loop_exit
    _

// kernel: convt_block_forward.5
$region0: #{convt_block_forward.5}
  #allocation0 [shape = 'u32[]', space=smem, size = 0x4, offset = 0x4, fixed_abs, tag = 'smem constant byte address 0x4 - core index']
  #allocation1 [shape = 'u32[144,128]{1,0:T(1,128)}', space=vmem, size = 0x12000, scoped, tag = 'internal scratch']
  %s0 = inlined_call_operand.vmem [shape: f32[512,128], index: 0, kind: input, shape index: {}]
  %s1 = inlined_call_operand.vmem [shape: f32[1,128], index: 1, kind: input, shape index: {}]
  %s2 = inlined_call_operand.vmem [shape: f32[1,128], index: 2, kind: input, shape index: {}]
  %s3 = inlined_call_operand.vmem [shape: f32[512,128], index: 3, kind: output, shape index: {}]
  %s4 = sld [smem:[#allocation0]]
  $region45: #{convt_block_forward.5} parent=0
    _
  %s6 = ssub.s32 1, %s4
  %s7 = scalar_select 0, %s6, %s4
  loop: start=0, step=1, limit=4
  $region2: #{convt_block_forward.5} parent=0 // loop_pre_header
    _
  $region3: #{convt_block_forward.5} parent=0 // loop_header
    %s9 = sphi 0, %s13
    %p10 = scmp.ge.s32.totalorder %s9, 4
    %s19 = sphi 0, %s21
    %s22 = sphi 0, %s19
    %s23 = sphi 0, %s22
    %s39 = sphi 0, %s23
    %s43 = sphi 0, %s43
    %s45 = sphi 0, %s43
    %s46 = sphi 0, %s45
    %s60 = sphi 0, %s46
    %s64 = sphi 0, %s64
    %s66 = sphi 0, %s64
    %s67 = sphi 0, %s66
    %s81 = sphi 0, %s67
    %s87 = sphi 0, %s89
    %s90 = sphi 0, %s87
    %s91 = sphi 0, %s90
    %s107 = sphi 0, %s91
  $region4: #{convt_block_forward.5} parent=0 // loop_header_branch
    %12 = sbr.rel (%p10) target = $region8
  $region5: #{convt_block_forward.5} parent=0 // loop_body
    %s14 = ssub.s32 %s9, 1
    %s15 = ssub.s32 %s9, 2
    %s16 = sadd.s32 %s9, 1
    %s17 = ssub.s32 %s9, %s16
    %p18 = scmp.eq.s32.totalorder %s17, 0
    %s20 = sadd.s32 %s19, 1
    %s21 = scalar_select %p18, %s19, %s20
    %p24 = pneg %p18
    %p25 = scmp.eq.s32.totalorder %s9, 1
    %p26 = por %p24, %p25
    %p27 = scmp.ne.s32.totalorder %s19, %s22
    %p28 = scmp.eq.s32.totalorder %s9, 0
    %p29 = por %p27, %p28
    %p30 = scmp.ne.s32.totalorder %s19, %s22
    %p31 = scmp.eq.s32.totalorder %s14, 1
    %p32 = por %p30, %p31
    %p33 = scmp.ne.s32.totalorder %s22, %s23
    %p34 = scmp.eq.s32.totalorder %s14, 0
    %p35 = por %p33, %p34
    %p36 = scmp.ne.s32.totalorder %s22, %s23
    %p37 = scmp.eq.s32.totalorder %s15, 1
    %p38 = por %p36, %p37
    %p40 = scmp.ne.s32.totalorder %s23, %s39
    %p41 = scmp.eq.s32.totalorder %s15, 0
    %p42 = por %p40, %p41
    %s44 = sadd.s32 %s43, 1
    %p47 = scmp.eq.s32.totalorder %s9, 1
    %p48 = scmp.ne.s32.totalorder %s43, %s45
    %p49 = scmp.eq.s32.totalorder %s9, 0
    %p50 = por %p48, %p49
    %p51 = scmp.ne.s32.totalorder %s43, %s45
    %p52 = scmp.eq.s32.totalorder %s14, 1
    %p53 = por %p51, %p52
    %p54 = scmp.ne.s32.totalorder %s45, %s46
    %p55 = scmp.eq.s32.totalorder %s14, 0
    %p56 = por %p54, %p55
    %p57 = scmp.ne.s32.totalorder %s45, %s46
    %p58 = scmp.eq.s32.totalorder %s15, 1
    %p59 = por %p57, %p58
    %p61 = scmp.ne.s32.totalorder %s46, %s60
    %p62 = scmp.eq.s32.totalorder %s15, 0
    %p63 = por %p61, %p62
    %s65 = sadd.s32 %s64, 1
    %p68 = scmp.eq.s32.totalorder %s9, 1
    %p69 = scmp.ne.s32.totalorder %s64, %s66
    %p70 = scmp.eq.s32.totalorder %s9, 0
    %p71 = por %p69, %p70
    %p72 = scmp.ne.s32.totalorder %s64, %s66
    %p73 = scmp.eq.s32.totalorder %s14, 1
    %p74 = por %p72, %p73
    %p75 = scmp.ne.s32.totalorder %s66, %s67
    %p76 = scmp.eq.s32.totalorder %s14, 0
    %p77 = por %p75, %p76
    %p78 = scmp.ne.s32.totalorder %s66, %s67
    %p79 = scmp.eq.s32.totalorder %s15, 1
    %p80 = por %p78, %p79
    %p82 = scmp.ne.s32.totalorder %s67, %s81
    %p83 = scmp.eq.s32.totalorder %s15, 0
    %p84 = por %p82, %p83
    %s85 = ssub.s32 %s9, %s16
    %p86 = scmp.eq.s32.totalorder %s85, 0
    %s88 = sadd.s32 %s87, 1
    %s89 = scalar_select %p86, %s87, %s88
    %p92 = pneg %p86
    %p93 = scmp.eq.s32.totalorder %s9, 1
    %p94 = por %p92, %p93
    %p95 = scmp.ne.s32.totalorder %s87, %s90
    %p96 = scmp.eq.s32.totalorder %s9, 0
    %p97 = por %p95, %p96
    %p98 = scmp.ne.s32.totalorder %s87, %s90
    %p99 = scmp.eq.s32.totalorder %s14, 1
    %p100 = por %p98, %p99
    %p101 = scmp.ne.s32.totalorder %s90, %s91
    %p102 = scmp.eq.s32.totalorder %s14, 0
    %p103 = por %p101, %p102
    %p104 = scmp.ne.s32.totalorder %s90, %s91
    %p105 = scmp.eq.s32.totalorder %s15, 1
    %p106 = por %p104, %p105
    %p108 = scmp.ne.s32.totalorder %s91, %s107
    %p109 = scmp.eq.s32.totalorder %s15, 0
    %p110 = por %p108, %p109
    %p111 = scmp.le.s32.totalorder 1, %s9
    %p112 = scmp.lt.s32.totalorder %s9, 3
    %p113 = pnand %p111, %p112
    %p114 = pneg %p113
    // Predicated region
    $region9: #{convt_block_forward.5} parent=5 // pred_check
      _
    $region10: #{convt_block_forward.5} parent=5 // pred_check_branch
      %116 = sbr.rel (%p113) target = $region12
    $region11: #{convt_block_forward.5} parent=5 // pred_region
      %s117 = ssub.s32 %s9, 1
      // Predicated region
      $region13: #{convt_block_forward.5} parent=11 // pred_check
        %p118 = pneg %p56
      $region14: #{convt_block_forward.5} parent=11 // pred_check_branch
        %120 = sbr.rel (%p118) target = $region16
      $region15: #{convt_block_forward.5} parent=11 // pred_region
        _
      $region16: #{convt_block_forward.5} parent=11 // pred_fallthru
        _
      // Predicated region
      $region17: #{convt_block_forward.5} parent=11 // pred_check
        %p121 = pneg %p77
      $region18: #{convt_block_forward.5} parent=11 // pred_check_branch
        %123 = sbr.rel (%p121) target = $region20
      $region19: #{convt_block_forward.5} parent=11 // pred_region
        _
      $region20: #{convt_block_forward.5} parent=11 // pred_fallthru
        _
    $region12: #{convt_block_forward.5} parent=5 // pred_fallthru
      _
    %p124 = scmp.lt.s32.totalorder %s9, 2
    // Predicated region
    $region21: #{convt_block_forward.5} parent=5 // pred_check
      %p125 = pneg %p124
    $region22: #{convt_block_forward.5} parent=5 // pred_check_branch
      %127 = sbr.rel (%p125) target = $region24
    $region23: #{convt_block_forward.5} parent=5 // pred_region
      // Predicated region
      $region25: #{convt_block_forward.5} parent=23 // pred_check
        %p128 = pneg %p29
      $region26: #{convt_block_forward.5} parent=23 // pred_check_branch
        %130 = sbr.rel (%p128) target = $region28
      $region27: #{convt_block_forward.5} parent=23 // pred_region
        %s131 = smul.u32 32, %s9
        %p132 = scmp.lt.s32.totalorder %s131, 63
        %s133 = scalar_select %p132, %s131, 63
        %s134 = smul.addr %s133, 8
        %s135 = scalar_lea.vmem %s0, %s134
        %s136 = smul.u32 32, %s9
      $region28: #{convt_block_forward.5} parent=23 // pred_fallthru
        _
    $region24: #{convt_block_forward.5} parent=5 // pred_fallthru
      _
    %p137 = scmp.le.s32.totalorder 1, %s9
    %p138 = scmp.lt.s32.totalorder %s9, 3
    %p139 = pnand %p137, %p138
    %p140 = pneg %p139
    // Predicated region
    $region29: #{convt_block_forward.5} parent=5 // pred_check
      _
    $region30: #{convt_block_forward.5} parent=5 // pred_check_branch
      %142 = sbr.rel (%p139) target = $region32
    $region31: #{convt_block_forward.5} parent=5 // pred_region
      %s143 = ssub.s32 %s9, 1
      %s144 = smul.u32 32, %s14
      %p145 = scmp.lt.s32.totalorder %s144, 63
      %s146 = scalar_select %p145, %s144, 63
      %s147 = smul.addr %s146, 8
      %s148 = scalar_lea.vmem %s0, %s147
      %p149 = pneg %p35
      %p150 = pneg %p32
      %p151 = pneg %p56
      %p152 = pneg %p53
      %p153 = pneg %p77
      %p154 = pneg %p74
      %p155 = pneg %p103
      %p156 = pneg %p100
      %s157 = smul.u32 32, %s14
      %p158 = scmp.lt.s32.totalorder %s157, 63
      %s159 = scalar_select %p158, %s157, 63
      %s160 = smul.addr %s159, 8
      %s161 = scalar_lea.vmem %s3, %s160
      %s162 = smul.u32 32, %s14
      %p163 = scmp.lt.s32.totalorder %s162, 63
      %s164 = scalar_select %p163, %s162, 63
      %s165 = smul.addr %s164, 8
      %s166 = scalar_lea.vmem %s0, %s165
      %s167 = smul.u32 32, %s14
      %s168 = smul.u32 32, %s14
      %p169 = scmp.lt.s32.totalorder %s168, 63
      %s170 = scalar_select %p169, %s168, 63
      %s171 = smul.addr %s170, 8
      %s172 = scalar_lea.vmem %s3, %s171
      %s173 = smul.u32 32, %s14
      %v174 = vld [vmem:[%s166] sm:$0xff]
      %v175 = vld [vmem:[%s166 + $0x8] sm:$0xff]
      %v176 = vld [vmem:[%s166 + $0x10] sm:$0xff]
      %v177 = vld [vmem:[%s166 + $0x18] sm:$0xff]
      %v178 = vld [vmem:[%s166 + $0x20] sm:$0xff]
      %v179 = vld [vmem:[%s166 + $0x28] sm:$0xff]
      %v180 = vld [vmem:[%s166 + $0x30] sm:$0xff]
      %v181 = vld [vmem:[%s166 + $0x38] sm:$0xff]
      %v182 = vld [vmem:[%s166 + $0x40] sm:$0xff]
      %v183 = vld [vmem:[%s166 + $0x48] sm:$0xff]
      %v184 = vld [vmem:[%s166 + $0x50] sm:$0xff]
      %v185 = vld [vmem:[%s166 + $0x58] sm:$0xff]
      %v186 = vld [vmem:[%s166 + $0x60] sm:$0xff]
      %v187 = vld [vmem:[%s166 + $0x68] sm:$0xff]
      %v188 = vld [vmem:[%s166 + $0x70] sm:$0xff]
      %v189 = vld [vmem:[%s166 + $0x78] sm:$0xff]
      %v190 = vld [vmem:[%s166 + $0x80] sm:$0xff]
      %v191 = vld [vmem:[%s166 + $0x88] sm:$0xff]
      %v192 = vld [vmem:[%s166 + $0x90] sm:$0xff]
      %v193 = vld [vmem:[%s166 + $0x98] sm:$0xff]
      %v194 = vld [vmem:[%s166 + $0xa0] sm:$0xff]
      %v195 = vld [vmem:[%s166 + $0xa8] sm:$0xff]
      %v196 = vld [vmem:[%s166 + $0xb0] sm:$0xff]
      %v197 = vld [vmem:[%s166 + $0xb8] sm:$0xff]
      %v198 = vld [vmem:[%s166 + $0xc0] sm:$0xff]
      %v199 = vld [vmem:[%s166 + $0xc8] sm:$0xff]
      %v200 = vld [vmem:[%s166 + $0xd0] sm:$0xff]
      %v201 = vld [vmem:[%s166 + $0xd8] sm:$0xff]
      %v202 = vld [vmem:[%s166 + $0xe0] sm:$0xff]
      %v203 = vld [vmem:[%s166 + $0xe8] sm:$0xff]
      %v204 = vld [vmem:[%s166 + $0xf0] sm:$0xff]
      %v205 = vld [vmem:[%s166 + $0xf8] sm:$0xff]
      %v206 = vld [vmem:[%s1] sm:$0x1]
      %v208 = vlaneseq
      %v209 = vshrl.u32 %v208, 7
      %v210 = vsub.s32 0, %v209
      %v211 = vrot.slane %v206, %v210
      %v213 = vmul.f32 %v174, %v211
      %v214 = vmul.f32 %v175, %v211
      %v215 = vmul.f32 %v176, %v211
      %v216 = vmul.f32 %v177, %v211
      %v217 = vmul.f32 %v178, %v211
      %v218 = vmul.f32 %v179, %v211
      %v219 = vmul.f32 %v180, %v211
      %v220 = vmul.f32 %v181, %v211
      %v221 = vmul.f32 %v182, %v211
      %v222 = vmul.f32 %v183, %v211
      %v223 = vmul.f32 %v184, %v211
      %v224 = vmul.f32 %v185, %v211
      %v225 = vmul.f32 %v186, %v211
      %v226 = vmul.f32 %v187, %v211
      %v227 = vmul.f32 %v188, %v211
      %v228 = vmul.f32 %v189, %v211
      %v229 = vmul.f32 %v190, %v211
      %v230 = vmul.f32 %v191, %v211
      %v231 = vmul.f32 %v192, %v211
      %v232 = vmul.f32 %v193, %v211
      %v233 = vmul.f32 %v194, %v211
      %v234 = vmul.f32 %v195, %v211
      %v235 = vmul.f32 %v196, %v211
      %v236 = vmul.f32 %v197, %v211
      %v237 = vmul.f32 %v198, %v211
      %v238 = vmul.f32 %v199, %v211
      %v239 = vmul.f32 %v200, %v211
      %v240 = vmul.f32 %v201, %v211
      %v241 = vmul.f32 %v202, %v211
      %v242 = vmul.f32 %v203, %v211
      %v243 = vmul.f32 %v204, %v211
      %v244 = vmul.f32 %v205, %v211
      %v245 = vld [vmem:[%s2] sm:$0x1]
      %v247 = vlaneseq
      %v248 = vshrl.u32 %v247, 7
      %v249 = vsub.s32 0, %v248
      %v250 = vrot.slane %v245, %v249
      %v252 = vadd.f32 %v213, %v250
      %v253 = vadd.f32 %v214, %v250
      %v254 = vadd.f32 %v215, %v250
      %v255 = vadd.f32 %v216, %v250
      %v256 = vadd.f32 %v217, %v250
      %v257 = vadd.f32 %v218, %v250
      %v258 = vadd.f32 %v219, %v250
      %v259 = vadd.f32 %v220, %v250
      %v260 = vadd.f32 %v221, %v250
      %v261 = vadd.f32 %v222, %v250
      %v262 = vadd.f32 %v223, %v250
      %v263 = vadd.f32 %v224, %v250
      %v264 = vadd.f32 %v225, %v250
      %v265 = vadd.f32 %v226, %v250
      %v266 = vadd.f32 %v227, %v250
      %v267 = vadd.f32 %v228, %v250
      %v268 = vadd.f32 %v229, %v250
      %v269 = vadd.f32 %v230, %v250
      %v270 = vadd.f32 %v231, %v250
      %v271 = vadd.f32 %v232, %v250
      %v272 = vadd.f32 %v233, %v250
      %v273 = vadd.f32 %v234, %v250
      %v274 = vadd.f32 %v235, %v250
      %v275 = vadd.f32 %v236, %v250
      %v276 = vadd.f32 %v237, %v250
      %v277 = vadd.f32 %v238, %v250
      %v278 = vadd.f32 %v239, %v250
      %v279 = vadd.f32 %v240, %v250
      %v280 = vadd.f32 %v241, %v250
      %v281 = vadd.f32 %v242, %v250
      %v282 = vadd.f32 %v243, %v250
      %v283 = vadd.f32 %v244, %v250
      %vm284 = vcmp.ge.f32.partialorder %v252, 0.0
      %vm285 = vcmp.ge.f32.partialorder %v253, 0.0
      %vm286 = vcmp.ge.f32.partialorder %v254, 0.0
      %vm287 = vcmp.ge.f32.partialorder %v255, 0.0
      %vm288 = vcmp.ge.f32.partialorder %v256, 0.0
      %vm289 = vcmp.ge.f32.partialorder %v257, 0.0
      %vm290 = vcmp.ge.f32.partialorder %v258, 0.0
      %vm291 = vcmp.ge.f32.partialorder %v259, 0.0
      %vm292 = vcmp.ge.f32.partialorder %v260, 0.0
      %vm293 = vcmp.ge.f32.partialorder %v261, 0.0
      %vm294 = vcmp.ge.f32.partialorder %v262, 0.0
      %vm295 = vcmp.ge.f32.partialorder %v263, 0.0
      %vm296 = vcmp.ge.f32.partialorder %v264, 0.0
      %vm297 = vcmp.ge.f32.partialorder %v265, 0.0
      %vm298 = vcmp.ge.f32.partialorder %v266, 0.0
      %vm299 = vcmp.ge.f32.partialorder %v267, 0.0
      %vm300 = vcmp.ge.f32.partialorder %v268, 0.0
      %vm301 = vcmp.ge.f32.partialorder %v269, 0.0
      %vm302 = vcmp.ge.f32.partialorder %v270, 0.0
      %vm303 = vcmp.ge.f32.partialorder %v271, 0.0
      %vm304 = vcmp.ge.f32.partialorder %v272, 0.0
      %vm305 = vcmp.ge.f32.partialorder %v273, 0.0
      %vm306 = vcmp.ge.f32.partialorder %v274, 0.0
      %vm307 = vcmp.ge.f32.partialorder %v275, 0.0
      %vm308 = vcmp.ge.f32.partialorder %v276, 0.0
      %vm309 = vcmp.ge.f32.partialorder %v277, 0.0
      %vm310 = vcmp.ge.f32.partialorder %v278, 0.0
      %vm311 = vcmp.ge.f32.partialorder %v279, 0.0
      %vm312 = vcmp.ge.f32.partialorder %v280, 0.0
      %vm313 = vcmp.ge.f32.partialorder %v281, 0.0
      %vm314 = vcmp.ge.f32.partialorder %v282, 0.0
      %vm315 = vcmp.ge.f32.partialorder %v283, 0.0
      %v316 = vmul.f32 %v252, 0.01
      %v317 = vmul.f32 %v253, 0.01
      %v318 = vmul.f32 %v254, 0.01
      %v319 = vmul.f32 %v255, 0.01
      %v320 = vmul.f32 %v256, 0.01
      %v321 = vmul.f32 %v257, 0.01
      %v322 = vmul.f32 %v258, 0.01
      %v323 = vmul.f32 %v259, 0.01
      %v324 = vmul.f32 %v260, 0.01
      %v325 = vmul.f32 %v261, 0.01
      %v326 = vmul.f32 %v262, 0.01
      %v327 = vmul.f32 %v263, 0.01
      %v328 = vmul.f32 %v264, 0.01
      %v329 = vmul.f32 %v265, 0.01
      %v330 = vmul.f32 %v266, 0.01
      %v331 = vmul.f32 %v267, 0.01
      %v332 = vmul.f32 %v268, 0.01
      %v333 = vmul.f32 %v269, 0.01
      %v334 = vmul.f32 %v270, 0.01
      %v335 = vmul.f32 %v271, 0.01
      %v336 = vmul.f32 %v272, 0.01
      %v337 = vmul.f32 %v273, 0.01
      %v338 = vmul.f32 %v274, 0.01
      %v339 = vmul.f32 %v275, 0.01
      %v340 = vmul.f32 %v276, 0.01
      %v341 = vmul.f32 %v277, 0.01
      %v342 = vmul.f32 %v278, 0.01
      %v343 = vmul.f32 %v279, 0.01
      %v344 = vmul.f32 %v280, 0.01
      %v345 = vmul.f32 %v281, 0.01
      %v346 = vmul.f32 %v282, 0.01
      %v347 = vmul.f32 %v283, 0.01
      %v348 = vsel %vm284, %v252, %v316
      %v349 = vsel %vm285, %v253, %v317
      %v350 = vsel %vm286, %v254, %v318
      %v351 = vsel %vm287, %v255, %v319
      %v352 = vsel %vm288, %v256, %v320
      %v353 = vsel %vm289, %v257, %v321
      %v354 = vsel %vm290, %v258, %v322
      %v355 = vsel %vm291, %v259, %v323
      %v356 = vsel %vm292, %v260, %v324
      %v357 = vsel %vm293, %v261, %v325
      %v358 = vsel %vm294, %v262, %v326
      %v359 = vsel %vm295, %v263, %v327
      %v360 = vsel %vm296, %v264, %v328
      %v361 = vsel %vm297, %v265, %v329
      %v362 = vsel %vm298, %v266, %v330
      %v363 = vsel %vm299, %v267, %v331
      %v364 = vsel %vm300, %v268, %v332
      %v365 = vsel %vm301, %v269, %v333
      %v366 = vsel %vm302, %v270, %v334
      %v367 = vsel %vm303, %v271, %v335
      %v368 = vsel %vm304, %v272, %v336
      %v369 = vsel %vm305, %v273, %v337
      %v370 = vsel %vm306, %v274, %v338
      %v371 = vsel %vm307, %v275, %v339
      %v372 = vsel %vm308, %v276, %v340
      %v373 = vsel %vm309, %v277, %v341
      %v374 = vsel %vm310, %v278, %v342
      %v375 = vsel %vm311, %v279, %v343
      %v376 = vsel %vm312, %v280, %v344
      %v377 = vsel %vm313, %v281, %v345
      %v378 = vsel %vm314, %v282, %v346
      %v379 = vsel %vm315, %v283, %v347
      %380 = vst [vmem:[%s172] sm:$0xff] %v348
      %381 = vst [vmem:[%s172 + $0x8] sm:$0xff] %v349
      %382 = vst [vmem:[%s172 + $0x10] sm:$0xff] %v350
      %383 = vst [vmem:[%s172 + $0x18] sm:$0xff] %v351
      %384 = vst [vmem:[%s172 + $0x20] sm:$0xff] %v352
      %385 = vst [vmem:[%s172 + $0x28] sm:$0xff] %v353
      %386 = vst [vmem:[%s172 + $0x30] sm:$0xff] %v354
      %387 = vst [vmem:[%s172 + $0x38] sm:$0xff] %v355
      %388 = vst [vmem:[%s172 + $0x40] sm:$0xff] %v356
      %389 = vst [vmem:[%s172 + $0x48] sm:$0xff] %v357
      %390 = vst [vmem:[%s172 + $0x50] sm:$0xff] %v358
      %391 = vst [vmem:[%s172 + $0x58] sm:$0xff] %v359
      %392 = vst [vmem:[%s172 + $0x60] sm:$0xff] %v360
      %393 = vst [vmem:[%s172 + $0x68] sm:$0xff] %v361
      %394 = vst [vmem:[%s172 + $0x70] sm:$0xff] %v362
      %395 = vst [vmem:[%s172 + $0x78] sm:$0xff] %v363
      %396 = vst [vmem:[%s172 + $0x80] sm:$0xff] %v364
      %397 = vst [vmem:[%s172 + $0x88] sm:$0xff] %v365
      %398 = vst [vmem:[%s172 + $0x90] sm:$0xff] %v366
      %399 = vst [vmem:[%s172 + $0x98] sm:$0xff] %v367
      %400 = vst [vmem:[%s172 + $0xa0] sm:$0xff] %v368
      %401 = vst [vmem:[%s172 + $0xa8] sm:$0xff] %v369
      %402 = vst [vmem:[%s172 + $0xb0] sm:$0xff] %v370
      %403 = vst [vmem:[%s172 + $0xb8] sm:$0xff] %v371
      %404 = vst [vmem:[%s172 + $0xc0] sm:$0xff] %v372
      %405 = vst [vmem:[%s172 + $0xc8] sm:$0xff] %v373
      %406 = vst [vmem:[%s172 + $0xd0] sm:$0xff] %v374
      %407 = vst [vmem:[%s172 + $0xd8] sm:$0xff] %v375
      %408 = vst [vmem:[%s172 + $0xe0] sm:$0xff] %v376
      %409 = vst [vmem:[%s172 + $0xe8] sm:$0xff] %v377
      %410 = vst [vmem:[%s172 + $0xf0] sm:$0xff] %v378
      %411 = vst [vmem:[%s172 + $0xf8] sm:$0xff] %v379
      %s412 = smul.u32 32, %s14
      %p413 = scmp.lt.s32.totalorder %s412, 63
      %s414 = scalar_select %p413, %s412, 63
      %s415 = smul.addr %s414, 8
      %s416 = scalar_lea.vmem %s3, %s415
      // Predicated region
      $region33: #{convt_block_forward.5} parent=31 // pred_check
        %p417 = pneg %p100
      $region34: #{convt_block_forward.5} parent=31 // pred_check_branch
        %419 = sbr.rel (%p417) target = $region36
      $region35: #{convt_block_forward.5} parent=31 // pred_region
        %s420 = smul.u32 32, %s14
      $region36: #{convt_block_forward.5} parent=31 // pred_fallthru
        _
    $region32: #{convt_block_forward.5} parent=5 // pred_fallthru
      _
    %p421 = scmp.le.s32.totalorder 2, %s9
    // Predicated region
    $region37: #{convt_block_forward.5} parent=5 // pred_check
      %p422 = pneg %p421
    $region38: #{convt_block_forward.5} parent=5 // pred_check_branch
      %424 = sbr.rel (%p422) target = $region40
    $region39: #{convt_block_forward.5} parent=5 // pred_region
      %s425 = ssub.s32 %s9, 2
      // Predicated region
      $region41: #{convt_block_forward.5} parent=39 // pred_check
        %p426 = pneg %p106
      $region42: #{convt_block_forward.5} parent=39 // pred_check_branch
        %428 = sbr.rel (%p426) target = $region44
      $region43: #{convt_block_forward.5} parent=39 // pred_region
        %s429 = smul.u32 32, %s15
        %p430 = scmp.lt.s32.totalorder %s429, 63
        %s431 = scalar_select %p430, %s429, 63
        %s432 = smul.addr %s431, 8
        %s433 = scalar_lea.vmem %s3, %s432
      $region44: #{convt_block_forward.5} parent=39 // pred_fallthru
        _
    $region40: #{convt_block_forward.5} parent=5 // pred_fallthru
      _
  $region6: #{convt_block_forward.5} parent=0 // loop_footer
    %s13 = sadd.s32 1, %s9
  $region7: #{convt_block_forward.5} parent=0 // loop_footer_branch
    %8 = sbr.rel target = $region3
  $region8: #{convt_block_forward.5} parent=0 // loop_exit
    _

// kernel: convt_block_forward.3
$region0: #{convt_block_forward.3}
  #allocation0 [shape = 'u32[]', space=smem, size = 0x4, offset = 0x4, fixed_abs, tag = 'smem constant byte address 0x4 - core index']
  #allocation1 [shape = 'u32[144,128]{1,0:T(1,128)}', space=vmem, size = 0x12000, scoped, tag = 'internal scratch']
  %s0 = inlined_call_operand.vmem [shape: bf16[512,128], index: 0, kind: input, shape index: {}]
  %s1 = inlined_call_operand.vmem [shape: bf16[512,128], index: 1, kind: input, shape index: {}]
  %s2 = inlined_call_operand.vmem [shape: bf16[512,128], index: 2, kind: input, shape index: {}]
  %s3 = inlined_call_operand.vmem [shape: bf16[512,128], index: 3, kind: input, shape index: {}]
  %s4 = inlined_call_operand.vmem [shape: bf16[9,128,32], index: 4, kind: input, shape index: {}]
  %s5 = inlined_call_operand.vmem [shape: f32[1,32], index: 5, kind: input, shape index: {}]
  %s6 = inlined_call_operand.vmem [shape: f32[512,128], index: 6, kind: output, shape index: {}]
  %s7 = sld [smem:[#allocation0]]
  $region57: #{convt_block_forward.3} parent=0
    _
  %s9 = ssub.s32 1, %s7
  %s10 = scalar_select 0, %s9, %s7
  loop: start=0, step=1, limit=4
  $region2: #{convt_block_forward.3} parent=0 // loop_pre_header
    _
  $region3: #{convt_block_forward.3} parent=0 // loop_header
    %s12 = sphi 0, %s16
    %p13 = scmp.ge.s32.totalorder %s12, 4
    %s22 = sphi 0, %s24
    %s25 = sphi 0, %s22
    %s26 = sphi 0, %s25
    %s42 = sphi 0, %s26
    %s48 = sphi 0, %s50
    %s51 = sphi 0, %s48
    %s52 = sphi 0, %s51
    %s68 = sphi 0, %s52
    %s74 = sphi 0, %s76
    %s77 = sphi 0, %s74
    %s78 = sphi 0, %s77
    %s94 = sphi 0, %s78
    %s100 = sphi 0, %s102
    %s103 = sphi 0, %s100
    %s104 = sphi 0, %s103
    %s120 = sphi 0, %s104
    %s124 = sphi 0, %s124
    %s126 = sphi 0, %s124
    %s127 = sphi 0, %s126
    %s141 = sphi 0, %s127
    %s145 = sphi 0, %s145
    %s147 = sphi 0, %s145
    %s148 = sphi 0, %s147
    %s162 = sphi 0, %s148
    %s168 = sphi 0, %s170
    %s171 = sphi 0, %s168
    %s172 = sphi 0, %s171
    %s188 = sphi 0, %s172
  $region4: #{convt_block_forward.3} parent=0 // loop_header_branch
    %15 = sbr.rel (%p13) target = $region8
  $region5: #{convt_block_forward.3} parent=0 // loop_body
    %s17 = ssub.s32 %s12, 1
    %s18 = ssub.s32 %s12, 2
    %s19 = sadd.s32 %s12, 1
    %s20 = ssub.s32 %s12, %s19
    %p21 = scmp.eq.s32.totalorder %s20, 0
    %s23 = sadd.s32 %s22, 1
    %s24 = scalar_select %p21, %s22, %s23
    %p27 = pneg %p21
    %p28 = scmp.eq.s32.totalorder %s12, 1
    %p29 = por %p27, %p28
    %p30 = scmp.ne.s32.totalorder %s22, %s25
    %p31 = scmp.eq.s32.totalorder %s12, 0
    %p32 = por %p30, %p31
    %p33 = scmp.ne.s32.totalorder %s22, %s25
    %p34 = scmp.eq.s32.totalorder %s17, 1
    %p35 = por %p33, %p34
    %p36 = scmp.ne.s32.totalorder %s25, %s26
    %p37 = scmp.eq.s32.totalorder %s17, 0
    %p38 = por %p36, %p37
    %p39 = scmp.ne.s32.totalorder %s25, %s26
    %p40 = scmp.eq.s32.totalorder %s18, 1
    %p41 = por %p39, %p40
    %p43 = scmp.ne.s32.totalorder %s26, %s42
    %p44 = scmp.eq.s32.totalorder %s18, 0
    %p45 = por %p43, %p44
    %s46 = ssub.s32 %s12, %s19
    %p47 = scmp.eq.s32.totalorder %s46, 0
    %s49 = sadd.s32 %s48, 1
    %s50 = scalar_select %p47, %s48, %s49
    %p53 = pneg %p47
    %p54 = scmp.eq.s32.totalorder %s12, 1
    %p55 = por %p53, %p54
    %p56 = scmp.ne.s32.totalorder %s48, %s51
    %p57 = scmp.eq.s32.totalorder %s12, 0
    %p58 = por %p56, %p57
    %p59 = scmp.ne.s32.totalorder %s48, %s51
    %p60 = scmp.eq.s32.totalorder %s17, 1
    %p61 = por %p59, %p60
    %p62 = scmp.ne.s32.totalorder %s51, %s52
    %p63 = scmp.eq.s32.totalorder %s17, 0
    %p64 = por %p62, %p63
    %p65 = scmp.ne.s32.totalorder %s51, %s52
    %p66 = scmp.eq.s32.totalorder %s18, 1
    %p67 = por %p65, %p66
    %p69 = scmp.ne.s32.totalorder %s52, %s68
    %p70 = scmp.eq.s32.totalorder %s18, 0
    %p71 = por %p69, %p70
    %s72 = ssub.s32 %s12, %s19
    %p73 = scmp.eq.s32.totalorder %s72, 0
    %s75 = sadd.s32 %s74, 1
    %s76 = scalar_select %p73, %s74, %s75
    %p79 = pneg %p73
    %p80 = scmp.eq.s32.totalorder %s12, 1
    %p81 = por %p79, %p80
    %p82 = scmp.ne.s32.totalorder %s74, %s77
    %p83 = scmp.eq.s32.totalorder %s12, 0
    %p84 = por %p82, %p83
    %p85 = scmp.ne.s32.totalorder %s74, %s77
    %p86 = scmp.eq.s32.totalorder %s17, 1
    %p87 = por %p85, %p86
    %p88 = scmp.ne.s32.totalorder %s77, %s78
    %p89 = scmp.eq.s32.totalorder %s17, 0
    %p90 = por %p88, %p89
    %p91 = scmp.ne.s32.totalorder %s77, %s78
    %p92 = scmp.eq.s32.totalorder %s18, 1
    %p93 = por %p91, %p92
    %p95 = scmp.ne.s32.totalorder %s78, %s94
    %p96 = scmp.eq.s32.totalorder %s18, 0
    %p97 = por %p95, %p96
    %s98 = ssub.s32 %s12, %s19
    %p99 = scmp.eq.s32.totalorder %s98, 0
    %s101 = sadd.s32 %s100, 1
    %s102 = scalar_select %p99, %s100, %s101
    %p105 = pneg %p99
    %p106 = scmp.eq.s32.totalorder %s12, 1
    %p107 = por %p105, %p106
    %p108 = scmp.ne.s32.totalorder %s100, %s103
    %p109 = scmp.eq.s32.totalorder %s12, 0
    %p110 = por %p108, %p109
    %p111 = scmp.ne.s32.totalorder %s100, %s103
    %p112 = scmp.eq.s32.totalorder %s17, 1
    %p113 = por %p111, %p112
    %p114 = scmp.ne.s32.totalorder %s103, %s104
    %p115 = scmp.eq.s32.totalorder %s17, 0
    %p116 = por %p114, %p115
    %p117 = scmp.ne.s32.totalorder %s103, %s104
    %p118 = scmp.eq.s32.totalorder %s18, 1
    %p119 = por %p117, %p118
    %p121 = scmp.ne.s32.totalorder %s104, %s120
    %p122 = scmp.eq.s32.totalorder %s18, 0
    %p123 = por %p121, %p122
    %s125 = sadd.s32 %s124, 1
    %p128 = scmp.eq.s32.totalorder %s12, 1
    %p129 = scmp.ne.s32.totalorder %s124, %s126
    %p130 = scmp.eq.s32.totalorder %s12, 0
    %p131 = por %p129, %p130
    %p132 = scmp.ne.s32.totalorder %s124, %s126
    %p133 = scmp.eq.s32.totalorder %s17, 1
    %p134 = por %p132, %p133
    %p135 = scmp.ne.s32.totalorder %s126, %s127
    %p136 = scmp.eq.s32.totalorder %s17, 0
    %p137 = por %p135, %p136
    %p138 = scmp.ne.s32.totalorder %s126, %s127
    %p139 = scmp.eq.s32.totalorder %s18, 1
    %p140 = por %p138, %p139
    %p142 = scmp.ne.s32.totalorder %s127, %s141
    %p143 = scmp.eq.s32.totalorder %s18, 0
    %p144 = por %p142, %p143
    %s146 = sadd.s32 %s145, 1
    %p149 = scmp.eq.s32.totalorder %s12, 1
    %p150 = scmp.ne.s32.totalorder %s145, %s147
    %p151 = scmp.eq.s32.totalorder %s12, 0
    %p152 = por %p150, %p151
    %p153 = scmp.ne.s32.totalorder %s145, %s147
    %p154 = scmp.eq.s32.totalorder %s17, 1
    %p155 = por %p153, %p154
    %p156 = scmp.ne.s32.totalorder %s147, %s148
    %p157 = scmp.eq.s32.totalorder %s17, 0
    %p158 = por %p156, %p157
    %p159 = scmp.ne.s32.totalorder %s147, %s148
    %p160 = scmp.eq.s32.totalorder %s18, 1
    %p161 = por %p159, %p160
    %p163 = scmp.ne.s32.totalorder %s148, %s162
    %p164 = scmp.eq.s32.totalorder %s18, 0
    %p165 = por %p163, %p164
    %s166 = ssub.s32 %s12, %s19
    %p167 = scmp.eq.s32.totalorder %s166, 0
    %s169 = sadd.s32 %s168, 1
    %s170 = scalar_select %p167, %s168, %s169
    %p173 = pneg %p167
    %p174 = scmp.eq.s32.totalorder %s12, 1
    %p175 = por %p173, %p174
    %p176 = scmp.ne.s32.totalorder %s168, %s171
    %p177 = scmp.eq.s32.totalorder %s12, 0
    %p178 = por %p176, %p177
    %p179 = scmp.ne.s32.totalorder %s168, %s171
    %p180 = scmp.eq.s32.totalorder %s17, 1
    %p181 = por %p179, %p180
    %p182 = scmp.ne.s32.totalorder %s171, %s172
    %p183 = scmp.eq.s32.totalorder %s17, 0
    %p184 = por %p182, %p183
    %p185 = scmp.ne.s32.totalorder %s171, %s172
    %p186 = scmp.eq.s32.totalorder %s18, 1
    %p187 = por %p185, %p186
    %p189 = scmp.ne.s32.totalorder %s172, %s188
    %p190 = scmp.eq.s32.totalorder %s18, 0
    %p191 = por %p189, %p190
    %p192 = scmp.le.s32.totalorder 1, %s12
    %p193 = scmp.lt.s32.totalorder %s12, 3
    %p194 = pnand %p192, %p193
    %p195 = pneg %p194
    // Predicated region
    $region9: #{convt_block_forward.3} parent=5 // pred_check
      _
    $region10: #{convt_block_forward.3} parent=5 // pred_check_branch
      %197 = sbr.rel (%p194) target = $region12
    $region11: #{convt_block_forward.3} parent=5 // pred_region
      %s198 = ssub.s32 %s12, 1
      // Predicated region
      $region13: #{convt_block_forward.3} parent=11 // pred_check
        %p199 = pneg %p137
      $region14: #{convt_block_forward.3} parent=11 // pred_check_branch
        %201 = sbr.rel (%p199) target = $region16
      $region15: #{convt_block_forward.3} parent=11 // pred_region
        _
      $region16: #{convt_block_forward.3} parent=11 // pred_fallthru
        _
      // Predicated region
      $region17: #{convt_block_forward.3} parent=11 // pred_check
        %p202 = pneg %p158
      $region18: #{convt_block_forward.3} parent=11 // pred_check_branch
        %204 = sbr.rel (%p202) target = $region20
      $region19: #{convt_block_forward.3} parent=11 // pred_region
        _
      $region20: #{convt_block_forward.3} parent=11 // pred_fallthru
        _
    $region12: #{convt_block_forward.3} parent=5 // pred_fallthru
      _
    %p205 = scmp.lt.s32.totalorder %s12, 2
    // Predicated region
    $region21: #{convt_block_forward.3} parent=5 // pred_check
      %p206 = pneg %p205
    $region22: #{convt_block_forward.3} parent=5 // pred_check_branch
      %208 = sbr.rel (%p206) target = $region24
    $region23: #{convt_block_forward.3} parent=5 // pred_region
      // Predicated region
      $region25: #{convt_block_forward.3} parent=23 // pred_check
        %p209 = pneg %p32
      $region26: #{convt_block_forward.3} parent=23 // pred_check_branch
        %211 = sbr.rel (%p209) target = $region28
      $region27: #{convt_block_forward.3} parent=23 // pred_region
        %s212 = smul.u32 32, %s12
        %p213 = scmp.lt.s32.totalorder %s212, 63
        %s214 = scalar_select %p213, %s212, 63
        %s215 = smul.addr %s214, 4
        %s216 = scalar_lea.vmem %s0, %s215
        %s217 = smul.u32 32, %s12
      $region28: #{convt_block_forward.3} parent=23 // pred_fallthru
        _
      // Predicated region
      $region29: #{convt_block_forward.3} parent=23 // pred_check
        %p218 = pneg %p58
      $region30: #{convt_block_forward.3} parent=23 // pred_check_branch
        %220 = sbr.rel (%p218) target = $region32
      $region31: #{convt_block_forward.3} parent=23 // pred_region
        %s221 = smul.u32 32, %s12
        %p222 = scmp.lt.s32.totalorder %s221, 63
        %s223 = scalar_select %p222, %s221, 63
        %s224 = smul.addr %s223, 4
        %s225 = scalar_lea.vmem %s1, %s224
        %s226 = smul.u32 32, %s12
      $region32: #{convt_block_forward.3} parent=23 // pred_fallthru
        _
      // Predicated region
      $region33: #{convt_block_forward.3} parent=23 // pred_check
        %p227 = pneg %p84
      $region34: #{convt_block_forward.3} parent=23 // pred_check_branch
        %229 = sbr.rel (%p227) target = $region36
      $region35: #{convt_block_forward.3} parent=23 // pred_region
        %s230 = smul.u32 32, %s12
        %p231 = scmp.lt.s32.totalorder %s230, 63
        %s232 = scalar_select %p231, %s230, 63
        %s233 = smul.addr %s232, 4
        %s234 = scalar_lea.vmem %s2, %s233
        %s235 = smul.u32 32, %s12
      $region36: #{convt_block_forward.3} parent=23 // pred_fallthru
        _
      // Predicated region
      $region37: #{convt_block_forward.3} parent=23 // pred_check
        %p236 = pneg %p110
      $region38: #{convt_block_forward.3} parent=23 // pred_check_branch
        %238 = sbr.rel (%p236) target = $region40
      $region39: #{convt_block_forward.3} parent=23 // pred_region
        %s239 = smul.u32 32, %s12
        %p240 = scmp.lt.s32.totalorder %s239, 63
        %s241 = scalar_select %p240, %s239, 63
        %s242 = smul.addr %s241, 4
        %s243 = scalar_lea.vmem %s3, %s242
        %s244 = smul.u32 32, %s12
      $region40: #{convt_block_forward.3} parent=23 // pred_fallthru
        _
    $region24: #{convt_block_forward.3} parent=5 // pred_fallthru
      _
    %p245 = scmp.le.s32.totalorder 1, %s12
    %p246 = scmp.lt.s32.totalorder %s12, 3
    %p247 = pnand %p245, %p246
    %p248 = pneg %p247
    // Predicated region
    $region41: #{convt_block_forward.3} parent=5 // pred_check
      _
    $region42: #{convt_block_forward.3} parent=5 // pred_check_branch
      %250 = sbr.rel (%p247) target = $region44
    $region43: #{convt_block_forward.3} parent=5 // pred_region
      %s251 = ssub.s32 %s12, 1
      %s252 = smul.u32 32, %s17
      %p253 = scmp.lt.s32.totalorder %s252, 63
      %s254 = scalar_select %p253, %s252, 63
      %s255 = smul.addr %s254, 4
      %s256 = scalar_lea.vmem %s0, %s255
      %p257 = pneg %p38
      %p258 = pneg %p35
      %s259 = smul.u32 32, %s17
      %p260 = scmp.lt.s32.totalorder %s259, 63
      %s261 = scalar_select %p260, %s259, 63
      %s262 = smul.addr %s261, 4
      %s263 = scalar_lea.vmem %s1, %s262
      %p264 = pneg %p64
      %p265 = pneg %p61
      %s266 = smul.u32 32, %s17
      %p267 = scmp.lt.s32.totalorder %s266, 63
      %s268 = scalar_select %p267, %s266, 63
      %s269 = smul.addr %s268, 4
      %s270 = scalar_lea.vmem %s2, %s269
      %p271 = pneg %p90
      %p272 = pneg %p87
      %s273 = smul.u32 32, %s17
      %p274 = scmp.lt.s32.totalorder %s273, 63
      %s275 = scalar_select %p274, %s273, 63
      %s276 = smul.addr %s275, 4
      %s277 = scalar_lea.vmem %s3, %s276
      %p278 = pneg %p116
      %p279 = pneg %p113
      %p280 = pneg %p137
      %p281 = pneg %p134
      %p282 = pneg %p158
      %p283 = pneg %p155
      %p284 = pneg %p184
      %p285 = pneg %p181
      %s286 = smul.u32 32, %s17
      %p287 = scmp.lt.s32.totalorder %s286, 63
      %s288 = scalar_select %p287, %s286, 63
      %s289 = smul.addr %s288, 8
      %s290 = scalar_lea.vmem %s6, %s289
      %s291 = smul.u32 32, %s17
      %p292 = scmp.lt.s32.totalorder %s291, 63
      %s293 = scalar_select %p292, %s291, 63
      %s294 = smul.addr %s293, 4
      %s295 = scalar_lea.vmem %s0, %s294
      %s296 = smul.u32 32, %s17
      %s297 = smul.u32 32, %s17
      %p298 = scmp.lt.s32.totalorder %s297, 63
      %s299 = scalar_select %p298, %s297, 63
      %s300 = smul.addr %s299, 4
      %s301 = scalar_lea.vmem %s1, %s300
      %s302 = smul.u32 32, %s17
      %s303 = smul.u32 32, %s17
      %p304 = scmp.lt.s32.totalorder %s303, 63
      %s305 = scalar_select %p304, %s303, 63
      %s306 = smul.addr %s305, 4
      %s307 = scalar_lea.vmem %s2, %s306
      %s308 = smul.u32 32, %s17
      %s309 = smul.u32 32, %s17
      %p310 = scmp.lt.s32.totalorder %s309, 63
      %s311 = scalar_select %p310, %s309, 63
      %s312 = smul.addr %s311, 4
      %s313 = scalar_lea.vmem %s3, %s312
      %s314 = smul.u32 32, %s17
      %s315 = smul.u32 32, %s17
      %p316 = scmp.lt.s32.totalorder %s315, 63
      %s317 = scalar_select %p316, %s315, 63
      %s318 = smul.addr %s317, 8
      %s319 = scalar_lea.vmem %s6, %s318
      %s320 = smul.u32 32, %s17
      %v322 = vld [vmem:[%s295] sm:$0xf]
      %v323 = vld [vmem:[%s295 + $0x4] sm:$0xf]
      %v324 = vld [vmem:[%s295 + $0x8] sm:$0xf]
      %v325 = vld [vmem:[%s295 + $0xc] sm:$0xf]
      %v326 = vld [vmem:[%s295 + $0x10] sm:$0xf]
      %v327 = vld [vmem:[%s295 + $0x14] sm:$0xf]
      %v328 = vld [vmem:[%s295 + $0x18] sm:$0xf]
      %v329 = vld [vmem:[%s295 + $0x1c] sm:$0xf]
      %v330 = vld [vmem:[%s295 + $0x20] sm:$0xf]
      %v331 = vld [vmem:[%s295 + $0x24] sm:$0xf]
      %v332 = vld [vmem:[%s295 + $0x28] sm:$0xf]
      %v333 = vld [vmem:[%s295 + $0x2c] sm:$0xf]
      %v334 = vld [vmem:[%s295 + $0x30] sm:$0xf]
      %v335 = vld [vmem:[%s295 + $0x34] sm:$0xf]
      %v336 = vld [vmem:[%s295 + $0x38] sm:$0xf]
      %v337 = vld [vmem:[%s295 + $0x3c] sm:$0xf]
      %v338 = vld [vmem:[%s295 + $0x40] sm:$0xf]
      %v339 = vld [vmem:[%s295 + $0x44] sm:$0xf]
      %v340 = vld [vmem:[%s295 + $0x48] sm:$0xf]
      %v341 = vld [vmem:[%s295 + $0x4c] sm:$0xf]
      %v342 = vld [vmem:[%s295 + $0x50] sm:$0xf]
      %v343 = vld [vmem:[%s295 + $0x54] sm:$0xf]
      %v344 = vld [vmem:[%s295 + $0x58] sm:$0xf]
      %v345 = vld [vmem:[%s295 + $0x5c] sm:$0xf]
      %v346 = vld [vmem:[%s295 + $0x60] sm:$0xf]
      %v347 = vld [vmem:[%s295 + $0x64] sm:$0xf]
      %v348 = vld [vmem:[%s295 + $0x68] sm:$0xf]
      %v349 = vld [vmem:[%s295 + $0x6c] sm:$0xf]
      %v350 = vld [vmem:[%s295 + $0x70] sm:$0xf]
      %v351 = vld [vmem:[%s295 + $0x74] sm:$0xf]
      %v352 = vld [vmem:[%s295 + $0x78] sm:$0xf]
      %v353 = vld [vmem:[%s295 + $0x7c] sm:$0xf]
      %v354 = vld [vmem:[%s301] sm:$0xf]
      %v355 = vld [vmem:[%s301 + $0x4] sm:$0xf]
      %v356 = vld [vmem:[%s301 + $0x8] sm:$0xf]
      %v357 = vld [vmem:[%s301 + $0xc] sm:$0xf]
      %v358 = vld [vmem:[%s301 + $0x10] sm:$0xf]
      %v359 = vld [vmem:[%s301 + $0x14] sm:$0xf]
      %v360 = vld [vmem:[%s301 + $0x18] sm:$0xf]
      %v361 = vld [vmem:[%s301 + $0x1c] sm:$0xf]
      %v362 = vld [vmem:[%s301 + $0x20] sm:$0xf]
      %v363 = vld [vmem:[%s301 + $0x24] sm:$0xf]
      %v364 = vld [vmem:[%s301 + $0x28] sm:$0xf]
      %v365 = vld [vmem:[%s301 + $0x2c] sm:$0xf]
      %v366 = vld [vmem:[%s301 + $0x30] sm:$0xf]
      %v367 = vld [vmem:[%s301 + $0x34] sm:$0xf]
      %v368 = vld [vmem:[%s301 + $0x38] sm:$0xf]
      %v369 = vld [vmem:[%s301 + $0x3c] sm:$0xf]
      %v370 = vld [vmem:[%s301 + $0x40] sm:$0xf]
      %v371 = vld [vmem:[%s301 + $0x44] sm:$0xf]
      %v372 = vld [vmem:[%s301 + $0x48] sm:$0xf]
      %v373 = vld [vmem:[%s301 + $0x4c] sm:$0xf]
      %v374 = vld [vmem:[%s301 + $0x50] sm:$0xf]
      %v375 = vld [vmem:[%s301 + $0x54] sm:$0xf]
      %v376 = vld [vmem:[%s301 + $0x58] sm:$0xf]
      %v377 = vld [vmem:[%s301 + $0x5c] sm:$0xf]
      %v378 = vld [vmem:[%s301 + $0x60] sm:$0xf]
      %v379 = vld [vmem:[%s301 + $0x64] sm:$0xf]
      %v380 = vld [vmem:[%s301 + $0x68] sm:$0xf]
      %v381 = vld [vmem:[%s301 + $0x6c] sm:$0xf]
      %v382 = vld [vmem:[%s301 + $0x70] sm:$0xf]
      %v383 = vld [vmem:[%s301 + $0x74] sm:$0xf]
      %v384 = vld [vmem:[%s301 + $0x78] sm:$0xf]
      %v385 = vld [vmem:[%s301 + $0x7c] sm:$0xf]
      %v386 = vld [vmem:[%s307] sm:$0xf]
      %v387 = vld [vmem:[%s307 + $0x4] sm:$0xf]
      %v388 = vld [vmem:[%s307 + $0x8] sm:$0xf]
      %v389 = vld [vmem:[%s307 + $0xc] sm:$0xf]
      %v390 = vld [vmem:[%s307 + $0x10] sm:$0xf]
      %v391 = vld [vmem:[%s307 + $0x14] sm:$0xf]
      %v392 = vld [vmem:[%s307 + $0x18] sm:$0xf]
      %v393 = vld [vmem:[%s307 + $0x1c] sm:$0xf]
      %v394 = vld [vmem:[%s307 + $0x20] sm:$0xf]
      %v395 = vld [vmem:[%s307 + $0x24] sm:$0xf]
      %v396 = vld [vmem:[%s307 + $0x28] sm:$0xf]
      %v397 = vld [vmem:[%s307 + $0x2c] sm:$0xf]
      %v398 = vld [vmem:[%s307 + $0x30] sm:$0xf]
      %v399 = vld [vmem:[%s307 + $0x34] sm:$0xf]
      %v400 = vld [vmem:[%s307 + $0x38] sm:$0xf]
      %v401 = vld [vmem:[%s307 + $0x3c] sm:$0xf]
      %v402 = vld [vmem:[%s307 + $0x40] sm:$0xf]
      %v403 = vld [vmem:[%s307 + $0x44] sm:$0xf]
      %v404 = vld [vmem:[%s307 + $0x48] sm:$0xf]
      %v405 = vld [vmem:[%s307 + $0x4c] sm:$0xf]
      %v406 = vld [vmem:[%s307 + $0x50] sm:$0xf]
      %v407 = vld [vmem:[%s307 + $0x54] sm:$0xf]
      %v408 = vld [vmem:[%s307 + $0x58] sm:$0xf]
      %v409 = vld [vmem:[%s307 + $0x5c] sm:$0xf]
      %v410 = vld [vmem:[%s307 + $0x60] sm:$0xf]
      %v411 = vld [vmem:[%s307 + $0x64] sm:$0xf]
      %v412 = vld [vmem:[%s307 + $0x68] sm:$0xf]
      %v413 = vld [vmem:[%s307 + $0x6c] sm:$0xf]
      %v414 = vld [vmem:[%s307 + $0x70] sm:$0xf]
      %v415 = vld [vmem:[%s307 + $0x74] sm:$0xf]
      %v416 = vld [vmem:[%s307 + $0x78] sm:$0xf]
      %v417 = vld [vmem:[%s307 + $0x7c] sm:$0xf]
      %v418 = vld [vmem:[%s313] sm:$0xf]
      %v419 = vld [vmem:[%s313 + $0x4] sm:$0xf]
      %v420 = vld [vmem:[%s313 + $0x8] sm:$0xf]
      %v421 = vld [vmem:[%s313 + $0xc] sm:$0xf]
      %v422 = vld [vmem:[%s313 + $0x10] sm:$0xf]
      %v423 = vld [vmem:[%s313 + $0x14] sm:$0xf]
      %v424 = vld [vmem:[%s313 + $0x18] sm:$0xf]
      %v425 = vld [vmem:[%s313 + $0x1c] sm:$0xf]
      %v426 = vld [vmem:[%s313 + $0x20] sm:$0xf]
      %v427 = vld [vmem:[%s313 + $0x24] sm:$0xf]
      %v428 = vld [vmem:[%s313 + $0x28] sm:$0xf]
      %v429 = vld [vmem:[%s313 + $0x2c] sm:$0xf]
      %v430 = vld [vmem:[%s313 + $0x30] sm:$0xf]
      %v431 = vld [vmem:[%s313 + $0x34] sm:$0xf]
      %v432 = vld [vmem:[%s313 + $0x38] sm:$0xf]
      %v433 = vld [vmem:[%s313 + $0x3c] sm:$0xf]
      %v434 = vld [vmem:[%s313 + $0x40] sm:$0xf]
      %v435 = vld [vmem:[%s313 + $0x44] sm:$0xf]
      %v436 = vld [vmem:[%s313 + $0x48] sm:$0xf]
      %v437 = vld [vmem:[%s313 + $0x4c] sm:$0xf]
      %v438 = vld [vmem:[%s313 + $0x50] sm:$0xf]
      %v439 = vld [vmem:[%s313 + $0x54] sm:$0xf]
      %v440 = vld [vmem:[%s313 + $0x58] sm:$0xf]
      %v441 = vld [vmem:[%s313 + $0x5c] sm:$0xf]
      %v442 = vld [vmem:[%s313 + $0x60] sm:$0xf]
      %v443 = vld [vmem:[%s313 + $0x64] sm:$0xf]
      %v444 = vld [vmem:[%s313 + $0x68] sm:$0xf]
      %v445 = vld [vmem:[%s313 + $0x6c] sm:$0xf]
      %v446 = vld [vmem:[%s313 + $0x70] sm:$0xf]
      %v447 = vld [vmem:[%s313 + $0x74] sm:$0xf]
      %v448 = vld [vmem:[%s313 + $0x78] sm:$0xf]
      %v449 = vld [vmem:[%s313 + $0x7c] sm:$0xf]
      %v450 = vld [vmem:[%s5] sm:$0x1]
      %v451 = vld [vmem:[%s4] sm:$0xf]
      %v452 = vld [vmem:[%s4 + $0x4] sm:$0xf]
      %v453 = vld [vmem:[%s4 + $0x8] sm:$0xf]
      %v454 = vld [vmem:[%s4 + $0xc] sm:$0xf]
      %v455 = vld [vmem:[%s4 + $0x10] sm:$0xf]
      %v456 = vld [vmem:[%s4 + $0x14] sm:$0xf]
      %v457 = vld [vmem:[%s4 + $0x18] sm:$0xf]
      %v458 = vld [vmem:[%s4 + $0x1c] sm:$0xf]
      %v459 = vld [vmem:[%s4 + $0x20] sm:$0xf]
      %v460 = vld [vmem:[%s4 + $0x24] sm:$0xf]
      %v461 = vld [vmem:[%s4 + $0x28] sm:$0xf]
      %v462 = vld [vmem:[%s4 + $0x2c] sm:$0xf]
      %v463 = vld [vmem:[%s4 + $0x30] sm:$0xf]
      %v464 = vld [vmem:[%s4 + $0x34] sm:$0xf]
      %v465 = vld [vmem:[%s4 + $0x38] sm:$0xf]
      %v466 = vld [vmem:[%s4 + $0x3c] sm:$0xf]
      %v468 = vlaneseq
      %v469 = vshrl.u32 %v468, 7
      %v470 = vsub.s32 0, %v469
      %v471 = vrot.slane %v450, %v470
      %v505 = vunpack.c.l.b16 %v322
      %v506 = vunpack.c.l.b16 %v323
      %v507 = vunpack.c.l.b16 %v324
      %v508 = vunpack.c.l.b16 %v325
      %v509 = vunpack.c.l.b16 %v326
      %v510 = vunpack.c.l.b16 %v327
      %v511 = vunpack.c.l.b16 %v328
      %v512 = vunpack.c.l.b16 %v329
      %v513 = vunpack.c.l.b16 %v330
      %v514 = vunpack.c.l.b16 %v331
      %v515 = vunpack.c.l.b16 %v332
      %v516 = vunpack.c.l.b16 %v333
      %v517 = vunpack.c.l.b16 %v334
      %v518 = vunpack.c.l.b16 %v335
      %v519 = vunpack.c.l.b16 %v336
      %v520 = vunpack.c.l.b16 %v337
      %v521 = vunpack.c.l.b16 %v338
      %v522 = vunpack.c.l.b16 %v339
      %v523 = vunpack.c.l.b16 %v340
      %v524 = vunpack.c.l.b16 %v341
      %v525 = vunpack.c.l.b16 %v342
      %v526 = vunpack.c.l.b16 %v343
      %v527 = vunpack.c.l.b16 %v344
      %v528 = vunpack.c.l.b16 %v345
      %v529 = vunpack.c.l.b16 %v346
      %v530 = vunpack.c.l.b16 %v347
      %v531 = vunpack.c.l.b16 %v348
      %v532 = vunpack.c.l.b16 %v349
      %v533 = vunpack.c.l.b16 %v350
      %v534 = vunpack.c.l.b16 %v351
      %v535 = vunpack.c.l.b16 %v352
      %v536 = vunpack.c.l.b16 %v353
      %v537 = vpack.c.b16 %v506, %v505
      %v538 = vpack.c.b16 %v508, %v507
      %v539 = vpack.c.b16 %v510, %v509
      %v540 = vpack.c.b16 %v512, %v511
      %v541 = vpack.c.b16 %v514, %v513
      %v542 = vpack.c.b16 %v516, %v515
      %v543 = vpack.c.b16 %v518, %v517
      %v544 = vpack.c.b16 %v520, %v519
      %v545 = vpack.c.b16 %v522, %v521
      %v546 = vpack.c.b16 %v524, %v523
      %v547 = vpack.c.b16 %v526, %v525
      %v548 = vpack.c.b16 %v528, %v527
      %v549 = vpack.c.b16 %v530, %v529
      %v550 = vpack.c.b16 %v532, %v531
      %v551 = vpack.c.b16 %v534, %v533
      %v552 = vpack.c.b16 %v536, %v535
      %v585 = vunpack.c.l.b16 %v451
      %v586 = vunpack.c.l.b16 %v452
      %v587 = vunpack.c.l.b16 %v453
      %v588 = vunpack.c.l.b16 %v454
      %v589 = vunpack.c.l.b16 %v455
      %v590 = vunpack.c.l.b16 %v456
      %v591 = vunpack.c.l.b16 %v457
      %v592 = vunpack.c.l.b16 %v458
      %v593 = vunpack.c.l.b16 %v459
      %v594 = vunpack.c.l.b16 %v460
      %v595 = vunpack.c.l.b16 %v461
      %v596 = vunpack.c.l.b16 %v462
      %v597 = vunpack.c.l.b16 %v463
      %v598 = vunpack.c.l.b16 %v464
      %v599 = vunpack.c.l.b16 %v465
      %v600 = vunpack.c.l.b16 %v466
      %v601 = vpack.c.b16 %v586, %v585
      %v602 = vpack.c.b16 %v588, %v587
      %v603 = vpack.c.b16 %v590, %v589
      %v604 = vpack.c.b16 %v592, %v591
      %v605 = vpack.c.b16 %v594, %v593
      %v606 = vpack.c.b16 %v596, %v595
      %v607 = vpack.c.b16 %v598, %v597
      %v608 = vpack.c.b16 %v600, %v599
      %617 = vmatprep.subr.bf16.mxu0 0
      %618 = vmatpush1.bf16.msra.mxu0 %v601
      %619 = vmatprep.subr.bf16.mxu0 0
      %620 = vmatpush1.bf16.msra.mxu0 %v602
      %621 = vmatprep.subr.bf16.mxu0 0
      %622 = vmatpush1.bf16.msra.mxu0 %v603
      %623 = vmatprep.subr.bf16.mxu0 0
      %624 = vmatpush1.bf16.msra.mxu0 %v604
      %625 = vmatprep.subr.bf16.mxu0 0
      %626 = vmatpush1.bf16.msra.mxu0 %v605
      %627 = vmatprep.subr.bf16.mxu0 0
      %628 = vmatpush1.bf16.msra.mxu0 %v606
      %629 = vmatprep.subr.bf16.mxu0 0
      %630 = vmatpush1.bf16.msra.mxu0 %v607
      %631 = vmatprep.subr.bf16.mxu0 0
      %632 = vmatpush1.bf16.msra.mxu0 %v608
      %633 = vmatprep.subr.bf16.mxu0 0
      %634 = vmatpush1.bf16.msra.mxu0 0
      %635 = vmatprep.subr.bf16.mxu0 0
      %636 = vmatpush1.bf16.msra.mxu0 0
      %637 = vmatprep.subr.bf16.mxu0 0
      %638 = vmatpush1.bf16.msra.mxu0 0
      %639 = vmatprep.subr.bf16.mxu0 0
      %640 = vmatpush1.bf16.msra.mxu0 0
      %641 = vmatprep.subr.bf16.mxu0 0
      %642 = vmatpush1.bf16.msra.mxu0 0
      %643 = vmatprep.subr.bf16.mxu0 0
      %644 = vmatpush1.bf16.msra.mxu0 0
      %645 = vmatprep.subr.bf16.mxu0 0
      %646 = vmatpush1.bf16.msra.mxu0 0
      %647 = vmatprep.subr.bf16.mxu0 0
      %648 = vmatpush1.bf16.msra.mxu0 0
      %649 = vmatprep.mubr.bf16.mxu0 0
      %650 = vmatmul.mubr.bf16.gmra.mrb[0].mxu0 %v537
      %v651 = vpop.f32.mrb[0].mxu0
      %v652 = vadd.f32 %v471, %v651
      %v653 = vpop.f32.mrb[0].mxu0
      %v654 = vpop.f32.mrb[0].mxu0
      %v655 = vadd.f32 %v471, %v654
      %v656 = vpop.f32.mrb[0].mxu0
      %657 = vmatprep.mubr.bf16.mxu0 0
      %658 = vmatmul.mubr.bf16.gmra.mrb[0].mxu0 %v538
      %v659 = vpop.f32.mrb[0].mxu0
      %v660 = vadd.f32 %v471, %v659
      %v661 = vpop.f32.mrb[0].mxu0
      %v662 = vpop.f32.mrb[0].mxu0
      %v663 = vadd.f32 %v471, %v662
      %v664 = vpop.f32.mrb[0].mxu0
      %665 = vmatprep.mubr.bf16.mxu0 0
      %666 = vmatmul.mubr.bf16.gmra.mrb[0].mxu0 %v539
      %v667 = vpop.f32.mrb[0].mxu0
      %v668 = vadd.f32 %v471, %v667
      %v669 = vpop.f32.mrb[0].mxu0
      %v670 = vpop.f32.mrb[0].mxu0
      %v671 = vadd.f32 %v471, %v670
      %v672 = vpop.f32.mrb[0].mxu0
      %673 = vmatprep.mubr.bf16.mxu0 0
      %674 = vmatmul.mubr.bf16.gmra.mrb[0].mxu0 %v540
      %v675 = vpop.f32.mrb[0].mxu0
      %v676 = vadd.f32 %v471, %v675
      %v677 = vpop.f32.mrb[0].mxu0
      %v678 = vpop.f32.mrb[0].mxu0
      %v679 = vadd.f32 %v471, %v678
      %v680 = vpop.f32.mrb[0].mxu0
      %681 = vmatprep.mubr.bf16.mxu0 0
      %682 = vmatmul.mubr.bf16.gmra.mrb[0].mxu0 %v541
      %v683 = vpop.f32.mrb[0].mxu0
      %v684 = vadd.f32 %v471, %v683
      %v685 = vpop.f32.mrb[0].mxu0
      %v686 = vpop.f32.mrb[0].mxu0
      %v687 = vadd.f32 %v471, %v686
      %v688 = vpop.f32.mrb[0].mxu0
      %689 = vmatprep.mubr.bf16.mxu0 0
      %690 = vmatmul.mubr.bf16.gmra.mrb[0].mxu0 %v542
      %v691 = vpop.f32.mrb[0].mxu0
      %v692 = vadd.f32 %v471, %v691
      %v693 = vpop.f32.mrb[0].mxu0
      %v694 = vpop.f32.mrb[0].mxu0
      %v695 = vadd.f32 %v471, %v694
      %v696 = vpop.f32.mrb[0].mxu0
      %697 = vmatprep.mubr.bf16.mxu0 0
      %698 = vmatmul.mubr.bf16.gmra.mrb[0].mxu0 %v543
      %v699 = vpop.f32.mrb[0].mxu0
      %v700 = vadd.f32 %v471, %v699
      %v701 = vpop.f32.mrb[0].mxu0
      %v702 = vpop.f32.mrb[0].mxu0
      %v703 = vadd.f32 %v471, %v702
      %v704 = vpop.f32.mrb[0].mxu0
      %705 = vmatprep.mubr.bf16.mxu0 0
      %706 = vmatmul.mubr.bf16.gmra.mrb[0].mxu0 %v544
      %v707 = vpop.f32.mrb[0].mxu0
      %v708 = vadd.f32 %v471, %v707
      %v709 = vpop.f32.mrb[0].mxu0
      %v710 = vpop.f32.mrb[0].mxu0
      %v711 = vadd.f32 %v471, %v710
      %v712 = vpop.f32.mrb[0].mxu0
      %713 = vmatprep.mubr.bf16.mxu0 0
      %714 = vmatmul.mubr.bf16.gmra.mrb[0].mxu0 %v545
      %v715 = vpop.f32.mrb[0].mxu0
      %v716 = vadd.f32 %v471, %v715
      %v717 = vpop.f32.mrb[0].mxu0
      %v718 = vpop.f32.mrb[0].mxu0
      %v719 = vadd.f32 %v471, %v718
      %v720 = vpop.f32.mrb[0].mxu0
      %721 = vmatprep.mubr.bf16.mxu0 0
      %722 = vmatmul.mubr.bf16.gmra.mrb[0].mxu0 %v546
      %v723 = vpop.f32.mrb[0].mxu0
      %v724 = vadd.f32 %v471, %v723
      %v725 = vpop.f32.mrb[0].mxu0
      %v726 = vpop.f32.mrb[0].mxu0
      %v727 = vadd.f32 %v471, %v726
      %v728 = vpop.f32.mrb[0].mxu0
      %729 = vmatprep.mubr.bf16.mxu0 0
      %730 = vmatmul.mubr.bf16.gmra.mrb[0].mxu0 %v547
      %v731 = vpop.f32.mrb[0].mxu0
      %v732 = vadd.f32 %v471, %v731
      %v733 = vpop.f32.mrb[0].mxu0
      %v734 = vpop.f32.mrb[0].mxu0
      %v735 = vadd.f32 %v471, %v734
      %v736 = vpop.f32.mrb[0].mxu0
      %737 = vmatprep.mubr.bf16.mxu0 0
      %738 = vmatmul.mubr.bf16.gmra.mrb[0].mxu0 %v548
      %v739 = vpop.f32.mrb[0].mxu0
      %v740 = vadd.f32 %v471, %v739
      %v741 = vpop.f32.mrb[0].mxu0
      %v742 = vpop.f32.mrb[0].mxu0
      %v743 = vadd.f32 %v471, %v742
      %v744 = vpop.f32.mrb[0].mxu0
      %745 = vmatprep.mubr.bf16.mxu0 0
      %746 = vmatmul.mubr.bf16.gmra.mrb[0].mxu0 %v549
      %v747 = vpop.f32.mrb[0].mxu0
      %v748 = vadd.f32 %v471, %v747
      %v749 = vpop.f32.mrb[0].mxu0
      %v750 = vpop.f32.mrb[0].mxu0
      %v751 = vadd.f32 %v471, %v750
      %v752 = vpop.f32.mrb[0].mxu0
      %753 = vmatprep.mubr.bf16.mxu0 0
      %754 = vmatmul.mubr.bf16.gmra.mrb[0].mxu0 %v550
      %v755 = vpop.f32.mrb[0].mxu0
      %v756 = vadd.f32 %v471, %v755
      %v757 = vpop.f32.mrb[0].mxu0
      %v758 = vpop.f32.mrb[0].mxu0
      %v759 = vadd.f32 %v471, %v758
      %v760 = vpop.f32.mrb[0].mxu0
      %761 = vmatprep.mubr.bf16.mxu0 0
      %762 = vmatmul.mubr.bf16.gmra.mrb[0].mxu0 %v551
      %v763 = vpop.f32.mrb[0].mxu0
      %v764 = vadd.f32 %v471, %v763
      %v765 = vpop.f32.mrb[0].mxu0
      %v766 = vpop.f32.mrb[0].mxu0
      %v767 = vadd.f32 %v471, %v766
      %v768 = vpop.f32.mrb[0].mxu0
      %769 = vmatprep.mubr.bf16.mxu0 0
      %770 = vmatmul.mubr.bf16.gmra.mrb[0].mxu0 %v552
      %v771 = vpop.f32.mrb[0].mxu0
      %v772 = vadd.f32 %v471, %v771
      %v773 = vpop.f32.mrb[0].mxu0
      %v774 = vpop.f32.mrb[0].mxu0
      %v775 = vadd.f32 %v471, %v774
      %v776 = vpop.f32.mrb[0].mxu0
      %777 = vdwg.mxu0
      %s778 = scalar_lea.vmem %s4, 64
      %v779 = vld [vmem:[%s778] sm:$0xf]
      %v780 = vld [vmem:[%s778 + $0x4] sm:$0xf]
      %v781 = vld [vmem:[%s778 + $0x8] sm:$0xf]
      %v782 = vld [vmem:[%s778 + $0xc] sm:$0xf]
      %v783 = vld [vmem:[%s778 + $0x10] sm:$0xf]
      %v784 = vld [vmem:[%s778 + $0x14] sm:$0xf]
      %v785 = vld [vmem:[%s778 + $0x18] sm:$0xf]
      %v786 = vld [vmem:[%s778 + $0x1c] sm:$0xf]
      %v787 = vld [vmem:[%s778 + $0x20] sm:$0xf]
      %v788 = vld [vmem:[%s778 + $0x24] sm:$0xf]
      %v789 = vld [vmem:[%s778 + $0x28] sm:$0xf]
      %v790 = vld [vmem:[%s778 + $0x2c] sm:$0xf]
      %v791 = vld [vmem:[%s778 + $0x30] sm:$0xf]
      %v792 = vld [vmem:[%s778 + $0x34] sm:$0xf]
      %v793 = vld [vmem:[%s778 + $0x38] sm:$0xf]
      %v794 = vld [vmem:[%s778 + $0x3c] sm:$0xf]
      %s795 = scalar_lea.vmem %s4, 128
      %v796 = vld [vmem:[%s795] sm:$0xf]
      %v797 = vld [vmem:[%s795 + $0x4] sm:$0xf]
      %v798 = vld [vmem:[%s795 + $0x8] sm:$0xf]
      %v799 = vld [vmem:[%s795 + $0xc] sm:$0xf]
      %v800 = vld [vmem:[%s795 + $0x10] sm:$0xf]
      %v801 = vld [vmem:[%s795 + $0x14] sm:$0xf]
      %v802 = vld [vmem:[%s795 + $0x18] sm:$0xf]
      %v803 = vld [vmem:[%s795 + $0x1c] sm:$0xf]
      %v804 = vld [vmem:[%s795 + $0x20] sm:$0xf]
      %v805 = vld [vmem:[%s795 + $0x24] sm:$0xf]
      %v806 = vld [vmem:[%s795 + $0x28] sm:$0xf]
      %v807 = vld [vmem:[%s795 + $0x2c] sm:$0xf]
      %v808 = vld [vmem:[%s795 + $0x30] sm:$0xf]
      %v809 = vld [vmem:[%s795 + $0x34] sm:$0xf]
      %v810 = vld [vmem:[%s795 + $0x38] sm:$0xf]
      %v811 = vld [vmem:[%s795 + $0x3c] sm:$0xf]
      %v844 = vunpack.c.l.b16 %v354
      %v845 = vunpack.c.l.b16 %v355
      %v846 = vunpack.c.l.b16 %v356
      %v847 = vunpack.c.l.b16 %v357
      %v848 = vunpack.c.l.b16 %v358
      %v849 = vunpack.c.l.b16 %v359
      %v850 = vunpack.c.l.b16 %v360
      %v851 = vunpack.c.l.b16 %v361
      %v852 = vunpack.c.l.b16 %v362
      %v853 = vunpack.c.l.b16 %v363
      %v854 = vunpack.c.l.b16 %v364
      %v855 = vunpack.c.l.b16 %v365
      %v856 = vunpack.c.l.b16 %v366
      %v857 = vunpack.c.l.b16 %v367
      %v858 = vunpack.c.l.b16 %v368
      %v859 = vunpack.c.l.b16 %v369
      %v860 = vunpack.c.l.b16 %v370
      %v861 = vunpack.c.l.b16 %v371
      %v862 = vunpack.c.l.b16 %v372
      %v863 = vunpack.c.l.b16 %v373
      %v864 = vunpack.c.l.b16 %v374
      %v865 = vunpack.c.l.b16 %v375
      %v866 = vunpack.c.l.b16 %v376
      %v867 = vunpack.c.l.b16 %v377
      %v868 = vunpack.c.l.b16 %v378
      %v869 = vunpack.c.l.b16 %v379
      %v870 = vunpack.c.l.b16 %v380
      %v871 = vunpack.c.l.b16 %v381
      %v872 = vunpack.c.l.b16 %v382
      %v873 = vunpack.c.l.b16 %v383
      %v874 = vunpack.c.l.b16 %v384
      %v875 = vunpack.c.l.b16 %v385
      %v876 = vpack.c.b16 %v845, %v844
      %v877 = vpack.c.b16 %v847, %v846
      %v878 = vpack.c.b16 %v849, %v848
      %v879 = vpack.c.b16 %v851, %v850
      %v880 = vpack.c.b16 %v853, %v852
      %v881 = vpack.c.b16 %v855, %v854
      %v882 = vpack.c.b16 %v857, %v856
      %v883 = vpack.c.b16 %v859, %v858
      %v884 = vpack.c.b16 %v861, %v860
      %v885 = vpack.c.b16 %v863, %v862
      %v886 = vpack.c.b16 %v865, %v864
      %v887 = vpack.c.b16 %v867, %v866
      %v888 = vpack.c.b16 %v869, %v868
      %v889 = vpack.c.b16 %v871, %v870
      %v890 = vpack.c.b16 %v873, %v872
      %v891 = vpack.c.b16 %v875, %v874
      %v924 = vunpack.c.l.b16 %v796
      %v925 = vunpack.c.l.b16 %v797
      %v926 = vunpack.c.l.b16 %v798
      %v927 = vunpack.c.l.b16 %v799
      %v928 = vunpack.c.l.b16 %v800
      %v929 = vunpack.c.l.b16 %v801
      %v930 = vunpack.c.l.b16 %v802
      %v931 = vunpack.c.l.b16 %v803
      %v932 = vunpack.c.l.b16 %v804
      %v933 = vunpack.c.l.b16 %v805
      %v934 = vunpack.c.l.b16 %v806
      %v935 = vunpack.c.l.b16 %v807
      %v936 = vunpack.c.l.b16 %v808
      %v937 = vunpack.c.l.b16 %v809
      %v938 = vunpack.c.l.b16 %v810
      %v939 = vunpack.c.l.b16 %v811
      %v940 = vpack.c.b16 %v925, %v924
      %v941 = vpack.c.b16 %v927, %v926
      %v942 = vpack.c.b16 %v929, %v928
      %v943 = vpack.c.b16 %v931, %v930
      %v944 = vpack.c.b16 %v933, %v932
      %v945 = vpack.c.b16 %v935, %v934
      %v946 = vpack.c.b16 %v937, %v936
      %v947 = vpack.c.b16 %v939, %v938
      %956 = vmatprep.subr.bf16.mxu0 0
      %957 = vmatpush1.bf16.msra.mxu0 %v940
      %958 = vmatprep.subr.bf16.mxu0 0
      %959 = vmatpush1.bf16.msra.mxu0 %v941
      %960 = vmatprep.subr.bf16.mxu0 0
      %961 = vmatpush1.bf16.msra.mxu0 %v942
      %962 = vmatprep.subr.bf16.mxu0 0
      %963 = vmatpush1.bf16.msra.mxu0 %v943
      %964 = vmatprep.subr.bf16.mxu0 0
      %965 = vmatpush1.bf16.msra.mxu0 %v944
      %966 = vmatprep.subr.bf16.mxu0 0
      %967 = vmatpush1.bf16.msra.mxu0 %v945
      %968 = vmatprep.subr.bf16.mxu0 0
      %969 = vmatpush1.bf16.msra.mxu0 %v946
      %970 = vmatprep.subr.bf16.mxu0 0
      %971 = vmatpush1.bf16.msra.mxu0 %v947
      %972 = vmatprep.subr.bf16.mxu0 0
      %973 = vmatpush1.bf16.msra.mxu0 0
      %974 = vmatprep.subr.bf16.mxu0 0
      %975 = vmatpush1.bf16.msra.mxu0 0
      %976 = vmatprep.subr.bf16.mxu0 0
      %977 = vmatpush1.bf16.msra.mxu0 0
      %978 = vmatprep.subr.bf16.mxu0 0
      %979 = vmatpush1.bf16.msra.mxu0 0
      %980 = vmatprep.subr.bf16.mxu0 0
      %981 = vmatpush1.bf16.msra.mxu0 0
      %982 = vmatprep.subr.bf16.mxu0 0
      %983 = vmatpush1.bf16.msra.mxu0 0
      %984 = vmatprep.subr.bf16.mxu0 0
      %985 = vmatpush1.bf16.msra.mxu0 0
      %986 = vmatprep.subr.bf16.mxu0 0
      %987 = vmatpush1.bf16.msra.mxu0 0
      %988 = vmatprep.mubr.bf16.mxu0 0
      %989 = vmatmul.mubr.bf16.gmra.mrb[0].mxu0 %v876
      %v990 = vpop.f32.mrb[0].mxu0
      %v991 = vadd.f32 0.0, %v990
      %v992 = vpop.f32.mrb[0].mxu0
      %v993 = vpop.f32.mrb[0].mxu0
      %v994 = vadd.f32 0.0, %v993
      %v995 = vpop.f32.mrb[0].mxu0
      %996 = vmatprep.mubr.bf16.mxu0 0
      %997 = vmatmul.mubr.bf16.gmra.mrb[0].mxu0 %v877
      %v998 = vpop.f32.mrb[0].mxu0
      %v999 = vadd.f32 0.0, %v998
      %v1000 = vpop.f32.mrb[0].mxu0
      %v1001 = vpop.f32.mrb[0].mxu0
      %v1002 = vadd.f32 0.0, %v1001
      %v1003 = vpop.f32.mrb[0].mxu0
      %1004 = vmatprep.mubr.bf16.mxu0 0
      %1005 = vmatmul.mubr.bf16.gmra.mrb[0].mxu0 %v878
      %v1006 = vpop.f32.mrb[0].mxu0
      %v1007 = vadd.f32 0.0, %v1006
      %v1008 = vpop.f32.mrb[0].mxu0
      %v1009 = vpop.f32.mrb[0].mxu0
      %v1010 = vadd.f32 0.0, %v1009
      %v1011 = vpop.f32.mrb[0].mxu0
      %1012 = vmatprep.mubr.bf16.mxu0 0
      %1013 = vmatmul.mubr.bf16.gmra.mrb[0].mxu0 %v879
      %v1014 = vpop.f32.mrb[0].mxu0
      %v1015 = vadd.f32 0.0, %v1014
      %v1016 = vpop.f32.mrb[0].mxu0
      %v1017 = vpop.f32.mrb[0].mxu0
      %v1018 = vadd.f32 0.0, %v1017
      %v1019 = vpop.f32.mrb[0].mxu0
      %1020 = vmatprep.mubr.bf16.mxu0 0
      %1021 = vmatmul.mubr.bf16.gmra.mrb[0].mxu0 %v880
      %v1022 = vpop.f32.mrb[0].mxu0
      %v1023 = vadd.f32 0.0, %v1022
      %v1024 = vpop.f32.mrb[0].mxu0
      %v1025 = vpop.f32.mrb[0].mxu0
      %v1026 = vadd.f32 0.0, %v1025
      %v1027 = vpop.f32.mrb[0].mxu0
      %1028 = vmatprep.mubr.bf16.mxu0 0
      %1029 = vmatmul.mubr.bf16.gmra.mrb[0].mxu0 %v881
      %v1030 = vpop.f32.mrb[0].mxu0
      %v1031 = vadd.f32 0.0, %v1030
      %v1032 = vpop.f32.mrb[0].mxu0
      %v1033 = vpop.f32.mrb[0].mxu0
      %v1034 = vadd.f32 0.0, %v1033
      %v1035 = vpop.f32.mrb[0].mxu0
      %1036 = vmatprep.mubr.bf16.mxu0 0
      %1037 = vmatmul.mubr.bf16.gmra.mrb[0].mxu0 %v882
      %v1038 = vpop.f32.mrb[0].mxu0
      %v1039 = vadd.f32 0.0, %v1038
      %v1040 = vpop.f32.mrb[0].mxu0
      %v1041 = vpop.f32.mrb[0].mxu0
      %v1042 = vadd.f32 0.0, %v1041
      %v1043 = vpop.f32.mrb[0].mxu0
      %1044 = vmatprep.mubr.bf16.mxu0 0
      %1045 = vmatmul.mubr.bf16.gmra.mrb[0].mxu0 %v883
      %v1046 = vpop.f32.mrb[0].mxu0
      %v1047 = vadd.f32 0.0, %v1046
      %v1048 = vpop.f32.mrb[0].mxu0
      %v1049 = vpop.f32.mrb[0].mxu0
      %v1050 = vadd.f32 0.0, %v1049
      %v1051 = vpop.f32.mrb[0].mxu0
      %1052 = vmatprep.mubr.bf16.mxu0 0
      %1053 = vmatmul.mubr.bf16.gmra.mrb[0].mxu0 %v884
      %v1054 = vpop.f32.mrb[0].mxu0
      %v1055 = vadd.f32 0.0, %v1054
      %v1056 = vpop.f32.mrb[0].mxu0
      %v1057 = vpop.f32.mrb[0].mxu0
      %v1058 = vadd.f32 0.0, %v1057
      %v1059 = vpop.f32.mrb[0].mxu0
      %1060 = vmatprep.mubr.bf16.mxu0 0
      %1061 = vmatmul.mubr.bf16.gmra.mrb[0].mxu0 %v885
      %v1062 = vpop.f32.mrb[0].mxu0
      %v1063 = vadd.f32 0.0, %v1062
      %v1064 = vpop.f32.mrb[0].mxu0
      %v1065 = vpop.f32.mrb[0].mxu0
      %v1066 = vadd.f32 0.0, %v1065
      %v1067 = vpop.f32.mrb[0].mxu0
      %1068 = vmatprep.mubr.bf16.mxu0 0
      %1069 = vmatmul.mubr.bf16.gmra.mrb[0].mxu0 %v886
      %v1070 = vpop.f32.mrb[0].mxu0
      %v1071 = vadd.f32 0.0, %v1070
      %v1072 = vpop.f32.mrb[0].mxu0
      %v1073 = vpop.f32.mrb[0].mxu0
      %v1074 = vadd.f32 0.0, %v1073
      %v1075 = vpop.f32.mrb[0].mxu0
      %1076 = vmatprep.mubr.bf16.mxu0 0
      %1077 = vmatmul.mubr.bf16.gmra.mrb[0].mxu0 %v887
      %v1078 = vpop.f32.mrb[0].mxu0
      %v1079 = vadd.f32 0.0, %v1078
      %v1080 = vpop.f32.mrb[0].mxu0
      %v1081 = vpop.f32.mrb[0].mxu0
      %v1082 = vadd.f32 0.0, %v1081
      %v1083 = vpop.f32.mrb[0].mxu0
      %1084 = vmatprep.mubr.bf16.mxu0 0
      %1085 = vmatmul.mubr.bf16.gmra.mrb[0].mxu0 %v888
      %v1086 = vpop.f32.mrb[0].mxu0
      %v1087 = vadd.f32 0.0, %v1086
      %v1088 = vpop.f32.mrb[0].mxu0
      %v1089 = vpop.f32.mrb[0].mxu0
      %v1090 = vadd.f32 0.0, %v1089
      %v1091 = vpop.f32.mrb[0].mxu0
      %1092 = vmatprep.mubr.bf16.mxu0 0
      %1093 = vmatmul.mubr.bf16.gmra.mrb[0].mxu0 %v889
      %v1094 = vpop.f32.mrb[0].mxu0
      %v1095 = vadd.f32 0.0, %v1094
      %v1096 = vpop.f32.mrb[0].mxu0
      %v1097 = vpop.f32.mrb[0].mxu0
      %v1098 = vadd.f32 0.0, %v1097
      %v1099 = vpop.f32.mrb[0].mxu0
      %1100 = vmatprep.mubr.bf16.mxu0 0
      %1101 = vmatmul.mubr.bf16.gmra.mrb[0].mxu0 %v890
      %v1102 = vpop.f32.mrb[0].mxu0
      %v1103 = vadd.f32 0.0, %v1102
      %v1104 = vpop.f32.mrb[0].mxu0
      %v1105 = vpop.f32.mrb[0].mxu0
      %v1106 = vadd.f32 0.0, %v1105
      %v1107 = vpop.f32.mrb[0].mxu0
      %1108 = vmatprep.mubr.bf16.mxu0 0
      %1109 = vmatmul.mubr.bf16.gmra.mrb[0].mxu0 %v891
      %v1110 = vpop.f32.mrb[0].mxu0
      %v1111 = vadd.f32 0.0, %v1110
      %v1112 = vpop.f32.mrb[0].mxu0
      %v1113 = vpop.f32.mrb[0].mxu0
      %v1114 = vadd.f32 0.0, %v1113
      %v1115 = vpop.f32.mrb[0].mxu0
      %1116 = vdwg.mxu0
      %v1133 = vunpack.c.l.b16 %v779
      %v1134 = vunpack.c.l.b16 %v780
      %v1135 = vunpack.c.l.b16 %v781
      %v1136 = vunpack.c.l.b16 %v782
      %v1137 = vunpack.c.l.b16 %v783
      %v1138 = vunpack.c.l.b16 %v784
      %v1139 = vunpack.c.l.b16 %v785
      %v1140 = vunpack.c.l.b16 %v786
      %v1141 = vunpack.c.l.b16 %v787
      %v1142 = vunpack.c.l.b16 %v788
      %v1143 = vunpack.c.l.b16 %v789
      %v1144 = vunpack.c.l.b16 %v790
      %v1145 = vunpack.c.l.b16 %v791
      %v1146 = vunpack.c.l.b16 %v792
      %v1147 = vunpack.c.l.b16 %v793
      %v1148 = vunpack.c.l.b16 %v794
      %v1149 = vpack.c.b16 %v1134, %v1133
      %v1150 = vpack.c.b16 %v1136, %v1135
      %v1151 = vpack.c.b16 %v1138, %v1137
      %v1152 = vpack.c.b16 %v1140, %v1139
      %v1153 = vpack.c.b16 %v1142, %v1141
      %v1154 = vpack.c.b16 %v1144, %v1143
      %v1155 = vpack.c.b16 %v1146, %v1145
      %v1156 = vpack.c.b16 %v1148, %v1147
      %1165 = vmatprep.subr.bf16.mxu0 0
      %1166 = vmatpush1.bf16.msra.mxu0 %v1149
      %1167 = vmatprep.subr.bf16.mxu0 0
      %1168 = vmatpush1.bf16.msra.mxu0 %v1150
      %1169 = vmatprep.subr.bf16.mxu0 0
      %1170 = vmatpush1.bf16.msra.mxu0 %v1151
      %1171 = vmatprep.subr.bf16.mxu0 0
      %1172 = vmatpush1.bf16.msra.mxu0 %v1152
      %1173 = vmatprep.subr.bf16.mxu0 0
      %1174 = vmatpush1.bf16.msra.mxu0 %v1153
      %1175 = vmatprep.subr.bf16.mxu0 0
      %1176 = vmatpush1.bf16.msra.mxu0 %v1154
      %1177 = vmatprep.subr.bf16.mxu0 0
      %1178 = vmatpush1.bf16.msra.mxu0 %v1155
      %1179 = vmatprep.subr.bf16.mxu0 0
      %1180 = vmatpush1.bf16.msra.mxu0 %v1156
      %1181 = vmatprep.subr.bf16.mxu0 0
      %1182 = vmatpush1.bf16.msra.mxu0 0
      %1183 = vmatprep.subr.bf16.mxu0 0
      %1184 = vmatpush1.bf16.msra.mxu0 0
      %1185 = vmatprep.subr.bf16.mxu0 0
      %1186 = vmatpush1.bf16.msra.mxu0 0
      %1187 = vmatprep.subr.bf16.mxu0 0
      %1188 = vmatpush1.bf16.msra.mxu0 0
      %1189 = vmatprep.subr.bf16.mxu0 0
      %1190 = vmatpush1.bf16.msra.mxu0 0
      %1191 = vmatprep.subr.bf16.mxu0 0
      %1192 = vmatpush1.bf16.msra.mxu0 0
      %1193 = vmatprep.subr.bf16.mxu0 0
      %1194 = vmatpush1.bf16.msra.mxu0 0
      %1195 = vmatprep.subr.bf16.mxu0 0
      %1196 = vmatpush1.bf16.msra.mxu0 0
      %1197 = vmatprep.mubr.bf16.mxu0 0
      %1198 = vmatmul.mubr.bf16.gmra.mrb[0].mxu0 %v537
      %v1199 = vpop.f32.mrb[0].mxu0
      %v1200 = vadd.f32 %v991, %v1199
      %v1201 = vpop.f32.mrb[0].mxu0
      %v1202 = vpop.f32.mrb[0].mxu0
      %v1203 = vadd.f32 %v994, %v1202
      %v1204 = vpop.f32.mrb[0].mxu0
      %1205 = vmatprep.mubr.bf16.mxu0 0
      %1206 = vmatmul.mubr.bf16.gmra.mrb[0].mxu0 %v538
      %v1207 = vpop.f32.mrb[0].mxu0
      %v1208 = vadd.f32 %v999, %v1207
      %v1209 = vpop.f32.mrb[0].mxu0
      %v1210 = vpop.f32.mrb[0].mxu0
      %v1211 = vadd.f32 %v1002, %v1210
      %v1212 = vpop.f32.mrb[0].mxu0
      %1213 = vmatprep.mubr.bf16.mxu0 0
      %1214 = vmatmul.mubr.bf16.gmra.mrb[0].mxu0 %v539
      %v1215 = vpop.f32.mrb[0].mxu0
      %v1216 = vadd.f32 %v1007, %v1215
      %v1217 = vpop.f32.mrb[0].mxu0
      %v1218 = vpop.f32.mrb[0].mxu0
      %v1219 = vadd.f32 %v1010, %v1218
      %v1220 = vpop.f32.mrb[0].mxu0
      %1221 = vmatprep.mubr.bf16.mxu0 0
      %1222 = vmatmul.mubr.bf16.gmra.mrb[0].mxu0 %v540
      %v1223 = vpop.f32.mrb[0].mxu0
      %v1224 = vadd.f32 %v1015, %v1223
      %v1225 = vpop.f32.mrb[0].mxu0
      %v1226 = vpop.f32.mrb[0].mxu0
      %v1227 = vadd.f32 %v1018, %v1226
      %v1228 = vpop.f32.mrb[0].mxu0
      %1229 = vmatprep.mubr.bf16.mxu0 0
      %1230 = vmatmul.mubr.bf16.gmra.mrb[0].mxu0 %v541
      %v1231 = vpop.f32.mrb[0].mxu0
      %v1232 = vadd.f32 %v1023, %v1231
      %v1233 = vpop.f32.mrb[0].mxu0
      %v1234 = vpop.f32.mrb[0].mxu0
      %v1235 = vadd.f32 %v1026, %v1234
      %v1236 = vpop.f32.mrb[0].mxu0
      %1237 = vmatprep.mubr.bf16.mxu0 0
      %1238 = vmatmul.mubr.bf16.gmra.mrb[0].mxu0 %v542
      %v1239 = vpop.f32.mrb[0].mxu0
      %v1240 = vadd.f32 %v1031, %v1239
      %v1241 = vpop.f32.mrb[0].mxu0
      %v1242 = vpop.f32.mrb[0].mxu0
      %v1243 = vadd.f32 %v1034, %v1242
      %v1244 = vpop.f32.mrb[0].mxu0
      %1245 = vmatprep.mubr.bf16.mxu0 0
      %1246 = vmatmul.mubr.bf16.gmra.mrb[0].mxu0 %v543
      %v1247 = vpop.f32.mrb[0].mxu0
      %v1248 = vadd.f32 %v1039, %v1247
      %v1249 = vpop.f32.mrb[0].mxu0
      %v1250 = vpop.f32.mrb[0].mxu0
      %v1251 = vadd.f32 %v1042, %v1250
      %v1252 = vpop.f32.mrb[0].mxu0
      %1253 = vmatprep.mubr.bf16.mxu0 0
      %1254 = vmatmul.mubr.bf16.gmra.mrb[0].mxu0 %v544
      %v1255 = vpop.f32.mrb[0].mxu0
      %v1256 = vadd.f32 %v1047, %v1255
      %v1257 = vpop.f32.mrb[0].mxu0
      %v1258 = vpop.f32.mrb[0].mxu0
      %v1259 = vadd.f32 %v1050, %v1258
      %v1260 = vpop.f32.mrb[0].mxu0
      %1261 = vmatprep.mubr.bf16.mxu0 0
      %1262 = vmatmul.mubr.bf16.gmra.mrb[0].mxu0 %v545
      %v1263 = vpop.f32.mrb[0].mxu0
      %v1264 = vadd.f32 %v1055, %v1263
      %v1265 = vpop.f32.mrb[0].mxu0
      %v1266 = vpop.f32.mrb[0].mxu0
      %v1267 = vadd.f32 %v1058, %v1266
      %v1268 = vpop.f32.mrb[0].mxu0
      %1269 = vmatprep.mubr.bf16.mxu0 0
      %1270 = vmatmul.mubr.bf16.gmra.mrb[0].mxu0 %v546
      %v1271 = vpop.f32.mrb[0].mxu0
      %v1272 = vadd.f32 %v1063, %v1271
      %v1273 = vpop.f32.mrb[0].mxu0
      %v1274 = vpop.f32.mrb[0].mxu0
      %v1275 = vadd.f32 %v1066, %v1274
      %v1276 = vpop.f32.mrb[0].mxu0
      %1277 = vmatprep.mubr.bf16.mxu0 0
      %1278 = vmatmul.mubr.bf16.gmra.mrb[0].mxu0 %v547
      %v1279 = vpop.f32.mrb[0].mxu0
      %v1280 = vadd.f32 %v1071, %v1279
      %v1281 = vpop.f32.mrb[0].mxu0
      %v1282 = vpop.f32.mrb[0].mxu0
      %v1283 = vadd.f32 %v1074, %v1282
      %v1284 = vpop.f32.mrb[0].mxu0
      %1285 = vmatprep.mubr.bf16.mxu0 0
      %1286 = vmatmul.mubr.bf16.gmra.mrb[0].mxu0 %v548
      %v1287 = vpop.f32.mrb[0].mxu0
      %v1288 = vadd.f32 %v1079, %v1287
      %v1289 = vpop.f32.mrb[0].mxu0
      %v1290 = vpop.f32.mrb[0].mxu0
      %v1291 = vadd.f32 %v1082, %v1290
      %v1292 = vpop.f32.mrb[0].mxu0
      %1293 = vmatprep.mubr.bf16.mxu0 0
      %1294 = vmatmul.mubr.bf16.gmra.mrb[0].mxu0 %v549
      %v1295 = vpop.f32.mrb[0].mxu0
      %v1296 = vadd.f32 %v1087, %v1295
      %v1297 = vpop.f32.mrb[0].mxu0
      %v1298 = vpop.f32.mrb[0].mxu0
      %v1299 = vadd.f32 %v1090, %v1298
      %v1300 = vpop.f32.mrb[0].mxu0
      %1301 = vmatprep.mubr.bf16.mxu0 0
      %1302 = vmatmul.mubr.bf16.gmra.mrb[0].mxu0 %v550
      %v1303 = vpop.f32.mrb[0].mxu0
      %v1304 = vadd.f32 %v1095, %v1303
      %v1305 = vpop.f32.mrb[0].mxu0
      %v1306 = vpop.f32.mrb[0].mxu0
      %v1307 = vadd.f32 %v1098, %v1306
      %v1308 = vpop.f32.mrb[0].mxu0
      %1309 = vmatprep.mubr.bf16.mxu0 0
      %1310 = vmatmul.mubr.bf16.gmra.mrb[0].mxu0 %v551
      %v1311 = vpop.f32.mrb[0].mxu0
      %v1312 = vadd.f32 %v1103, %v1311
      %v1313 = vpop.f32.mrb[0].mxu0
      %v1314 = vpop.f32.mrb[0].mxu0
      %v1315 = vadd.f32 %v1106, %v1314
      %v1316 = vpop.f32.mrb[0].mxu0
      %1317 = vmatprep.mubr.bf16.mxu0 0
      %1318 = vmatmul.mubr.bf16.gmra.mrb[0].mxu0 %v552
      %v1319 = vpop.f32.mrb[0].mxu0
      %v1320 = vadd.f32 %v1111, %v1319
      %v1321 = vpop.f32.mrb[0].mxu0
      %v1322 = vpop.f32.mrb[0].mxu0
      %v1323 = vadd.f32 %v1114, %v1322
      %v1324 = vpop.f32.mrb[0].mxu0
      %1325 = vdwg.mxu0
      %v1326 = vadd.f32 %v1200, %v471
      %v1327 = vadd.f32 %v1203, %v471
      %v1328 = vadd.f32 %v1208, %v471
      %v1329 = vadd.f32 %v1211, %v471
      %v1330 = vadd.f32 %v1216, %v471
      %v1331 = vadd.f32 %v1219, %v471
      %v1332 = vadd.f32 %v1224, %v471
      %v1333 = vadd.f32 %v1227, %v471
      %v1334 = vadd.f32 %v1232, %v471
      %v1335 = vadd.f32 %v1235, %v471
      %v1336 = vadd.f32 %v1240, %v471
      %v1337 = vadd.f32 %v1243, %v471
      %v1338 = vadd.f32 %v1248, %v471
      %v1339 = vadd.f32 %v1251, %v471
      %v1340 = vadd.f32 %v1256, %v471
      %v1341 = vadd.f32 %v1259, %v471
      %v1342 = vadd.f32 %v1264, %v471
      %v1343 = vadd.f32 %v1267, %v471
      %v1344 = vadd.f32 %v1272, %v471
      %v1345 = vadd.f32 %v1275, %v471
      %v1346 = vadd.f32 %v1280, %v471
      %v1347 = vadd.f32 %v1283, %v471
      %v1348 = vadd.f32 %v1288, %v471
      %v1349 = vadd.f32 %v1291, %v471
      %v1350 = vadd.f32 %v1296, %v471
      %v1351 = vadd.f32 %v1299, %v471
      %v1352 = vadd.f32 %v1304, %v471
      %v1353 = vadd.f32 %v1307, %v471
      %v1354 = vadd.f32 %v1312, %v471
      %v1355 = vadd.f32 %v1315, %v471
      %v1356 = vadd.f32 %v1320, %v471
      %v1357 = vadd.f32 %v1323, %v471
      %s1358 = scalar_lea.vmem %s4, 192
      %v1359 = vld [vmem:[%s1358] sm:$0xf]
      %v1360 = vld [vmem:[%s1358 + $0x4] sm:$0xf]
      %v1361 = vld [vmem:[%s1358 + $0x8] sm:$0xf]
      %v1362 = vld [vmem:[%s1358 + $0xc] sm:$0xf]
      %v1363 = vld [vmem:[%s1358 + $0x10] sm:$0xf]
      %v1364 = vld [vmem:[%s1358 + $0x14] sm:$0xf]
      %v1365 = vld [vmem:[%s1358 + $0x18] sm:$0xf]
      %v1366 = vld [vmem:[%s1358 + $0x1c] sm:$0xf]
      %v1367 = vld [vmem:[%s1358 + $0x20] sm:$0xf]
      %v1368 = vld [vmem:[%s1358 + $0x24] sm:$0xf]
      %v1369 = vld [vmem:[%s1358 + $0x28] sm:$0xf]
      %v1370 = vld [vmem:[%s1358 + $0x2c] sm:$0xf]
      %v1371 = vld [vmem:[%s1358 + $0x30] sm:$0xf]
      %v1372 = vld [vmem:[%s1358 + $0x34] sm:$0xf]
      %v1373 = vld [vmem:[%s1358 + $0x38] sm:$0xf]
      %v1374 = vld [vmem:[%s1358 + $0x3c] sm:$0xf]
      %s1375 = scalar_lea.vmem %s4, 256
      %v1376 = vld [vmem:[%s1375] sm:$0xf]
      %v1377 = vld [vmem:[%s1375 + $0x4] sm:$0xf]
      %v1378 = vld [vmem:[%s1375 + $0x8] sm:$0xf]
      %v1379 = vld [vmem:[%s1375 + $0xc] sm:$0xf]
      %v1380 = vld [vmem:[%s1375 + $0x10] sm:$0xf]
      %v1381 = vld [vmem:[%s1375 + $0x14] sm:$0xf]
      %v1382 = vld [vmem:[%s1375 + $0x18] sm:$0xf]
      %v1383 = vld [vmem:[%s1375 + $0x1c] sm:$0xf]
      %v1384 = vld [vmem:[%s1375 + $0x20] sm:$0xf]
      %v1385 = vld [vmem:[%s1375 + $0x24] sm:$0xf]
      %v1386 = vld [vmem:[%s1375 + $0x28] sm:$0xf]
      %v1387 = vld [vmem:[%s1375 + $0x2c] sm:$0xf]
      %v1388 = vld [vmem:[%s1375 + $0x30] sm:$0xf]
      %v1389 = vld [vmem:[%s1375 + $0x34] sm:$0xf]
      %v1390 = vld [vmem:[%s1375 + $0x38] sm:$0xf]
      %v1391 = vld [vmem:[%s1375 + $0x3c] sm:$0xf]
      %v1424 = vunpack.c.l.b16 %v386
      %v1425 = vunpack.c.l.b16 %v387
      %v1426 = vunpack.c.l.b16 %v388
      %v1427 = vunpack.c.l.b16 %v389
      %v1428 = vunpack.c.l.b16 %v390
      %v1429 = vunpack.c.l.b16 %v391
      %v1430 = vunpack.c.l.b16 %v392
      %v1431 = vunpack.c.l.b16 %v393
      %v1432 = vunpack.c.l.b16 %v394
      %v1433 = vunpack.c.l.b16 %v395
      %v1434 = vunpack.c.l.b16 %v396
      %v1435 = vunpack.c.l.b16 %v397
      %v1436 = vunpack.c.l.b16 %v398
      %v1437 = vunpack.c.l.b16 %v399
      %v1438 = vunpack.c.l.b16 %v400
      %v1439 = vunpack.c.l.b16 %v401
      %v1440 = vunpack.c.l.b16 %v402
      %v1441 = vunpack.c.l.b16 %v403
      %v1442 = vunpack.c.l.b16 %v404
      %v1443 = vunpack.c.l.b16 %v405
      %v1444 = vunpack.c.l.b16 %v406
      %v1445 = vunpack.c.l.b16 %v407
      %v1446 = vunpack.c.l.b16 %v408
      %v1447 = vunpack.c.l.b16 %v409
      %v1448 = vunpack.c.l.b16 %v410
      %v1449 = vunpack.c.l.b16 %v411
      %v1450 = vunpack.c.l.b16 %v412
      %v1451 = vunpack.c.l.b16 %v413
      %v1452 = vunpack.c.l.b16 %v414
      %v1453 = vunpack.c.l.b16 %v415
      %v1454 = vunpack.c.l.b16 %v416
      %v1455 = vunpack.c.l.b16 %v417
      %v1456 = vpack.c.b16 %v1425, %v1424
      %v1457 = vpack.c.b16 %v1427, %v1426
      %v1458 = vpack.c.b16 %v1429, %v1428
      %v1459 = vpack.c.b16 %v1431, %v1430
      %v1460 = vpack.c.b16 %v1433, %v1432
      %v1461 = vpack.c.b16 %v1435, %v1434
      %v1462 = vpack.c.b16 %v1437, %v1436
      %v1463 = vpack.c.b16 %v1439, %v1438
      %v1464 = vpack.c.b16 %v1441, %v1440
      %v1465 = vpack.c.b16 %v1443, %v1442
      %v1466 = vpack.c.b16 %v1445, %v1444
      %v1467 = vpack.c.b16 %v1447, %v1446
      %v1468 = vpack.c.b16 %v1449, %v1448
      %v1469 = vpack.c.b16 %v1451, %v1450
      %v1470 = vpack.c.b16 %v1453, %v1452
      %v1471 = vpack.c.b16 %v1455, %v1454
      %v1504 = vunpack.c.l.b16 %v1376
      %v1505 = vunpack.c.l.b16 %v1377
      %v1506 = vunpack.c.l.b16 %v1378
      %v1507 = vunpack.c.l.b16 %v1379
      %v1508 = vunpack.c.l.b16 %v1380
      %v1509 = vunpack.c.l.b16 %v1381
      %v1510 = vunpack.c.l.b16 %v1382
      %v1511 = vunpack.c.l.b16 %v1383
      %v1512 = vunpack.c.l.b16 %v1384
      %v1513 = vunpack.c.l.b16 %v1385
      %v1514 = vunpack.c.l.b16 %v1386
      %v1515 = vunpack.c.l.b16 %v1387
      %v1516 = vunpack.c.l.b16 %v1388
      %v1517 = vunpack.c.l.b16 %v1389
      %v1518 = vunpack.c.l.b16 %v1390
      %v1519 = vunpack.c.l.b16 %v1391
      %v1520 = vpack.c.b16 %v1505, %v1504
      %v1521 = vpack.c.b16 %v1507, %v1506
      %v1522 = vpack.c.b16 %v1509, %v1508
      %v1523 = vpack.c.b16 %v1511, %v1510
      %v1524 = vpack.c.b16 %v1513, %v1512
      %v1525 = vpack.c.b16 %v1515, %v1514
      %v1526 = vpack.c.b16 %v1517, %v1516
      %v1527 = vpack.c.b16 %v1519, %v1518
      %1536 = vmatprep.subr.bf16.mxu0 0
      %1537 = vmatpush1.bf16.msra.mxu0 %v1520
      %1538 = vmatprep.subr.bf16.mxu0 0
      %1539 = vmatpush1.bf16.msra.mxu0 %v1521
      %1540 = vmatprep.subr.bf16.mxu0 0
      %1541 = vmatpush1.bf16.msra.mxu0 %v1522
      %1542 = vmatprep.subr.bf16.mxu0 0
      %1543 = vmatpush1.bf16.msra.mxu0 %v1523
      %1544 = vmatprep.subr.bf16.mxu0 0
      %1545 = vmatpush1.bf16.msra.mxu0 %v1524
      %1546 = vmatprep.subr.bf16.mxu0 0
      %1547 = vmatpush1.bf16.msra.mxu0 %v1525
      %1548 = vmatprep.subr.bf16.mxu0 0
      %1549 = vmatpush1.bf16.msra.mxu0 %v1526
      %1550 = vmatprep.subr.bf16.mxu0 0
      %1551 = vmatpush1.bf16.msra.mxu0 %v1527
      %1552 = vmatprep.subr.bf16.mxu0 0
      %1553 = vmatpush1.bf16.msra.mxu0 0
      %1554 = vmatprep.subr.bf16.mxu0 0
      %1555 = vmatpush1.bf16.msra.mxu0 0
      %1556 = vmatprep.subr.bf16.mxu0 0
      %1557 = vmatpush1.bf16.msra.mxu0 0
      %1558 = vmatprep.subr.bf16.mxu0 0
      %1559 = vmatpush1.bf16.msra.mxu0 0
      %1560 = vmatprep.subr.bf16.mxu0 0
      %1561 = vmatpush1.bf16.msra.mxu0 0
      %1562 = vmatprep.subr.bf16.mxu0 0
      %1563 = vmatpush1.bf16.msra.mxu0 0
      %1564 = vmatprep.subr.bf16.mxu0 0
      %1565 = vmatpush1.bf16.msra.mxu0 0
      %1566 = vmatprep.subr.bf16.mxu0 0
      %1567 = vmatpush1.bf16.msra.mxu0 0
      %1568 = vmatprep.mubr.bf16.mxu0 0
      %1569 = vmatmul.mubr.bf16.gmra.mrb[0].mxu0 %v1456
      %v1570 = vpop.f32.mrb[0].mxu0
      %v1571 = vadd.f32 0.0, %v1570
      %v1572 = vpop.f32.mrb[0].mxu0
      %v1573 = vpop.f32.mrb[0].mxu0
      %v1574 = vadd.f32 0.0, %v1573
      %v1575 = vpop.f32.mrb[0].mxu0
      %1576 = vmatprep.mubr.bf16.mxu0 0
      %1577 = vmatmul.mubr.bf16.gmra.mrb[0].mxu0 %v1457
      %v1578 = vpop.f32.mrb[0].mxu0
      %v1579 = vadd.f32 0.0, %v1578
      %v1580 = vpop.f32.mrb[0].mxu0
      %v1581 = vpop.f32.mrb[0].mxu0
      %v1582 = vadd.f32 0.0, %v1581
      %v1583 = vpop.f32.mrb[0].mxu0
      %1584 = vmatprep.mubr.bf16.mxu0 0
      %1585 = vmatmul.mubr.bf16.gmra.mrb[0].mxu0 %v1458
      %v1586 = vpop.f32.mrb[0].mxu0
      %v1587 = vadd.f32 0.0, %v1586
      %v1588 = vpop.f32.mrb[0].mxu0
      %v1589 = vpop.f32.mrb[0].mxu0
      %v1590 = vadd.f32 0.0, %v1589
      %v1591 = vpop.f32.mrb[0].mxu0
      %1592 = vmatprep.mubr.bf16.mxu0 0
      %1593 = vmatmul.mubr.bf16.gmra.mrb[0].mxu0 %v1459
      %v1594 = vpop.f32.mrb[0].mxu0
      %v1595 = vadd.f32 0.0, %v1594
      %v1596 = vpop.f32.mrb[0].mxu0
      %v1597 = vpop.f32.mrb[0].mxu0
      %v1598 = vadd.f32 0.0, %v1597
      %v1599 = vpop.f32.mrb[0].mxu0
      %1600 = vmatprep.mubr.bf16.mxu0 0
      %1601 = vmatmul.mubr.bf16.gmra.mrb[0].mxu0 %v1460
      %v1602 = vpop.f32.mrb[0].mxu0
      %v1603 = vadd.f32 0.0, %v1602
      %v1604 = vpop.f32.mrb[0].mxu0
      %v1605 = vpop.f32.mrb[0].mxu0
      %v1606 = vadd.f32 0.0, %v1605
      %v1607 = vpop.f32.mrb[0].mxu0
      %1608 = vmatprep.mubr.bf16.mxu0 0
      %1609 = vmatmul.mubr.bf16.gmra.mrb[0].mxu0 %v1461
      %v1610 = vpop.f32.mrb[0].mxu0
      %v1611 = vadd.f32 0.0, %v1610
      %v1612 = vpop.f32.mrb[0].mxu0
      %v1613 = vpop.f32.mrb[0].mxu0
      %v1614 = vadd.f32 0.0, %v1613
      %v1615 = vpop.f32.mrb[0].mxu0
      %1616 = vmatprep.mubr.bf16.mxu0 0
      %1617 = vmatmul.mubr.bf16.gmra.mrb[0].mxu0 %v1462
      %v1618 = vpop.f32.mrb[0].mxu0
      %v1619 = vadd.f32 0.0, %v1618
      %v1620 = vpop.f32.mrb[0].mxu0
      %v1621 = vpop.f32.mrb[0].mxu0
      %v1622 = vadd.f32 0.0, %v1621
      %v1623 = vpop.f32.mrb[0].mxu0
      %1624 = vmatprep.mubr.bf16.mxu0 0
      %1625 = vmatmul.mubr.bf16.gmra.mrb[0].mxu0 %v1463
      %v1626 = vpop.f32.mrb[0].mxu0
      %v1627 = vadd.f32 0.0, %v1626
      %v1628 = vpop.f32.mrb[0].mxu0
      %v1629 = vpop.f32.mrb[0].mxu0
      %v1630 = vadd.f32 0.0, %v1629
      %v1631 = vpop.f32.mrb[0].mxu0
      %1632 = vmatprep.mubr.bf16.mxu0 0
      %1633 = vmatmul.mubr.bf16.gmra.mrb[0].mxu0 %v1464
      %v1634 = vpop.f32.mrb[0].mxu0
      %v1635 = vadd.f32 0.0, %v1634
      %v1636 = vpop.f32.mrb[0].mxu0
      %v1637 = vpop.f32.mrb[0].mxu0
      %v1638 = vadd.f32 0.0, %v1637
      %v1639 = vpop.f32.mrb[0].mxu0
      %1640 = vmatprep.mubr.bf16.mxu0 0
      %1641 = vmatmul.mubr.bf16.gmra.mrb[0].mxu0 %v1465
      %v1642 = vpop.f32.mrb[0].mxu0
      %v1643 = vadd.f32 0.0, %v1642
      %v1644 = vpop.f32.mrb[0].mxu0
      %v1645 = vpop.f32.mrb[0].mxu0
      %v1646 = vadd.f32 0.0, %v1645
      %v1647 = vpop.f32.mrb[0].mxu0
      %1648 = vmatprep.mubr.bf16.mxu0 0
      %1649 = vmatmul.mubr.bf16.gmra.mrb[0].mxu0 %v1466
      %v1650 = vpop.f32.mrb[0].mxu0
      %v1651 = vadd.f32 0.0, %v1650
      %v1652 = vpop.f32.mrb[0].mxu0
      %v1653 = vpop.f32.mrb[0].mxu0
      %v1654 = vadd.f32 0.0, %v1653
      %v1655 = vpop.f32.mrb[0].mxu0
      %1656 = vmatprep.mubr.bf16.mxu0 0
      %1657 = vmatmul.mubr.bf16.gmra.mrb[0].mxu0 %v1467
      %v1658 = vpop.f32.mrb[0].mxu0
      %v1659 = vadd.f32 0.0, %v1658
      %v1660 = vpop.f32.mrb[0].mxu0
      %v1661 = vpop.f32.mrb[0].mxu0
      %v1662 = vadd.f32 0.0, %v1661
      %v1663 = vpop.f32.mrb[0].mxu0
      %1664 = vmatprep.mubr.bf16.mxu0 0
      %1665 = vmatmul.mubr.bf16.gmra.mrb[0].mxu0 %v1468
      %v1666 = vpop.f32.mrb[0].mxu0
      %v1667 = vadd.f32 0.0, %v1666
      %v1668 = vpop.f32.mrb[0].mxu0
      %v1669 = vpop.f32.mrb[0].mxu0
      %v1670 = vadd.f32 0.0, %v1669
      %v1671 = vpop.f32.mrb[0].mxu0
      %1672 = vmatprep.mubr.bf16.mxu0 0
      %1673 = vmatmul.mubr.bf16.gmra.mrb[0].mxu0 %v1469
      %v1674 = vpop.f32.mrb[0].mxu0
      %v1675 = vadd.f32 0.0, %v1674
      %v1676 = vpop.f32.mrb[0].mxu0
      %v1677 = vpop.f32.mrb[0].mxu0
      %v1678 = vadd.f32 0.0, %v1677
      %v1679 = vpop.f32.mrb[0].mxu0
      %1680 = vmatprep.mubr.bf16.mxu0 0
      %1681 = vmatmul.mubr.bf16.gmra.mrb[0].mxu0 %v1470
      %v1682 = vpop.f32.mrb[0].mxu0
      %v1683 = vadd.f32 0.0, %v1682
      %v1684 = vpop.f32.mrb[0].mxu0
      %v1685 = vpop.f32.mrb[0].mxu0
      %v1686 = vadd.f32 0.0, %v1685
      %v1687 = vpop.f32.mrb[0].mxu0
      %1688 = vmatprep.mubr.bf16.mxu0 0
      %1689 = vmatmul.mubr.bf16.gmra.mrb[0].mxu0 %v1471
      %v1690 = vpop.f32.mrb[0].mxu0
      %v1691 = vadd.f32 0.0, %v1690
      %v1692 = vpop.f32.mrb[0].mxu0
      %v1693 = vpop.f32.mrb[0].mxu0
      %v1694 = vadd.f32 0.0, %v1693
      %v1695 = vpop.f32.mrb[0].mxu0
      %1696 = vdwg.mxu0
      %v1713 = vunpack.c.l.b16 %v1359
      %v1714 = vunpack.c.l.b16 %v1360
      %v1715 = vunpack.c.l.b16 %v1361
      %v1716 = vunpack.c.l.b16 %v1362
      %v1717 = vunpack.c.l.b16 %v1363
      %v1718 = vunpack.c.l.b16 %v1364
      %v1719 = vunpack.c.l.b16 %v1365
      %v1720 = vunpack.c.l.b16 %v1366
      %v1721 = vunpack.c.l.b16 %v1367
      %v1722 = vunpack.c.l.b16 %v1368
      %v1723 = vunpack.c.l.b16 %v1369
      %v1724 = vunpack.c.l.b16 %v1370
      %v1725 = vunpack.c.l.b16 %v1371
      %v1726 = vunpack.c.l.b16 %v1372
      %v1727 = vunpack.c.l.b16 %v1373
      %v1728 = vunpack.c.l.b16 %v1374
      %v1729 = vpack.c.b16 %v1714, %v1713
      %v1730 = vpack.c.b16 %v1716, %v1715
      %v1731 = vpack.c.b16 %v1718, %v1717
      %v1732 = vpack.c.b16 %v1720, %v1719
      %v1733 = vpack.c.b16 %v1722, %v1721
      %v1734 = vpack.c.b16 %v1724, %v1723
      %v1735 = vpack.c.b16 %v1726, %v1725
      %v1736 = vpack.c.b16 %v1728, %v1727
      %1745 = vmatprep.subr.bf16.mxu0 0
      %1746 = vmatpush1.bf16.msra.mxu0 %v1729
      %1747 = vmatprep.subr.bf16.mxu0 0
      %1748 = vmatpush1.bf16.msra.mxu0 %v1730
      %1749 = vmatprep.subr.bf16.mxu0 0
      %1750 = vmatpush1.bf16.msra.mxu0 %v1731
      %1751 = vmatprep.subr.bf16.mxu0 0
      %1752 = vmatpush1.bf16.msra.mxu0 %v1732
      %1753 = vmatprep.subr.bf16.mxu0 0
      %1754 = vmatpush1.bf16.msra.mxu0 %v1733
      %1755 = vmatprep.subr.bf16.mxu0 0
      %1756 = vmatpush1.bf16.msra.mxu0 %v1734
      %1757 = vmatprep.subr.bf16.mxu0 0
      %1758 = vmatpush1.bf16.msra.mxu0 %v1735
      %1759 = vmatprep.subr.bf16.mxu0 0
      %1760 = vmatpush1.bf16.msra.mxu0 %v1736
      %1761 = vmatprep.subr.bf16.mxu0 0
      %1762 = vmatpush1.bf16.msra.mxu0 0
      %1763 = vmatprep.subr.bf16.mxu0 0
      %1764 = vmatpush1.bf16.msra.mxu0 0
      %1765 = vmatprep.subr.bf16.mxu0 0
      %1766 = vmatpush1.bf16.msra.mxu0 0
      %1767 = vmatprep.subr.bf16.mxu0 0
      %1768 = vmatpush1.bf16.msra.mxu0 0
      %1769 = vmatprep.subr.bf16.mxu0 0
      %1770 = vmatpush1.bf16.msra.mxu0 0
      %1771 = vmatprep.subr.bf16.mxu0 0
      %1772 = vmatpush1.bf16.msra.mxu0 0
      %1773 = vmatprep.subr.bf16.mxu0 0
      %1774 = vmatpush1.bf16.msra.mxu0 0
      %1775 = vmatprep.subr.bf16.mxu0 0
      %1776 = vmatpush1.bf16.msra.mxu0 0
      %1777 = vmatprep.mubr.bf16.mxu0 0
      %1778 = vmatmul.mubr.bf16.gmra.mrb[0].mxu0 %v537
      %v1779 = vpop.f32.mrb[0].mxu0
      %v1780 = vadd.f32 %v1571, %v1779
      %v1781 = vpop.f32.mrb[0].mxu0
      %v1782 = vpop.f32.mrb[0].mxu0
      %v1783 = vadd.f32 %v1574, %v1782
      %v1784 = vpop.f32.mrb[0].mxu0
      %1785 = vmatprep.mubr.bf16.mxu0 0
      %1786 = vmatmul.mubr.bf16.gmra.mrb[0].mxu0 %v538
      %v1787 = vpop.f32.mrb[0].mxu0
      %v1788 = vadd.f32 %v1579, %v1787
      %v1789 = vpop.f32.mrb[0].mxu0
      %v1790 = vpop.f32.mrb[0].mxu0
      %v1791 = vadd.f32 %v1582, %v1790
      %v1792 = vpop.f32.mrb[0].mxu0
      %1793 = vmatprep.mubr.bf16.mxu0 0
      %1794 = vmatmul.mubr.bf16.gmra.mrb[0].mxu0 %v539
      %v1795 = vpop.f32.mrb[0].mxu0
      %v1796 = vadd.f32 %v1587, %v1795
      %v1797 = vpop.f32.mrb[0].mxu0
      %v1798 = vpop.f32.mrb[0].mxu0
      %v1799 = vadd.f32 %v1590, %v1798
      %v1800 = vpop.f32.mrb[0].mxu0
      %1801 = vmatprep.mubr.bf16.mxu0 0
      %1802 = vmatmul.mubr.bf16.gmra.mrb[0].mxu0 %v540
      %v1803 = vpop.f32.mrb[0].mxu0
      %v1804 = vadd.f32 %v1595, %v1803
      %v1805 = vpop.f32.mrb[0].mxu0
      %v1806 = vpop.f32.mrb[0].mxu0
      %v1807 = vadd.f32 %v1598, %v1806
      %v1808 = vpop.f32.mrb[0].mxu0
      %1809 = vmatprep.mubr.bf16.mxu0 0
      %1810 = vmatmul.mubr.bf16.gmra.mrb[0].mxu0 %v541
      %v1811 = vpop.f32.mrb[0].mxu0
      %v1812 = vadd.f32 %v1603, %v1811
      %v1813 = vpop.f32.mrb[0].mxu0
      %v1814 = vpop.f32.mrb[0].mxu0
      %v1815 = vadd.f32 %v1606, %v1814
      %v1816 = vpop.f32.mrb[0].mxu0
      %1817 = vmatprep.mubr.bf16.mxu0 0
      %1818 = vmatmul.mubr.bf16.gmra.mrb[0].mxu0 %v542
      %v1819 = vpop.f32.mrb[0].mxu0
      %v1820 = vadd.f32 %v1611, %v1819
      %v1821 = vpop.f32.mrb[0].mxu0
      %v1822 = vpop.f32.mrb[0].mxu0
      %v1823 = vadd.f32 %v1614, %v1822
      %v1824 = vpop.f32.mrb[0].mxu0
      %1825 = vmatprep.mubr.bf16.mxu0 0
      %1826 = vmatmul.mubr.bf16.gmra.mrb[0].mxu0 %v543
      %v1827 = vpop.f32.mrb[0].mxu0
      %v1828 = vadd.f32 %v1619, %v1827
      %v1829 = vpop.f32.mrb[0].mxu0
      %v1830 = vpop.f32.mrb[0].mxu0
      %v1831 = vadd.f32 %v1622, %v1830
      %v1832 = vpop.f32.mrb[0].mxu0
      %1833 = vmatprep.mubr.bf16.mxu0 0
      %1834 = vmatmul.mubr.bf16.gmra.mrb[0].mxu0 %v544
      %v1835 = vpop.f32.mrb[0].mxu0
      %v1836 = vadd.f32 %v1627, %v1835
      %v1837 = vpop.f32.mrb[0].mxu0
      %v1838 = vpop.f32.mrb[0].mxu0
      %v1839 = vadd.f32 %v1630, %v1838
      %v1840 = vpop.f32.mrb[0].mxu0
      %1841 = vmatprep.mubr.bf16.mxu0 0
      %1842 = vmatmul.mubr.bf16.gmra.mrb[0].mxu0 %v545
      %v1843 = vpop.f32.mrb[0].mxu0
      %v1844 = vadd.f32 %v1635, %v1843
      %v1845 = vpop.f32.mrb[0].mxu0
      %v1846 = vpop.f32.mrb[0].mxu0
      %v1847 = vadd.f32 %v1638, %v1846
      %v1848 = vpop.f32.mrb[0].mxu0
      %1849 = vmatprep.mubr.bf16.mxu0 0
      %1850 = vmatmul.mubr.bf16.gmra.mrb[0].mxu0 %v546
      %v1851 = vpop.f32.mrb[0].mxu0
      %v1852 = vadd.f32 %v1643, %v1851
      %v1853 = vpop.f32.mrb[0].mxu0
      %v1854 = vpop.f32.mrb[0].mxu0
      %v1855 = vadd.f32 %v1646, %v1854
      %v1856 = vpop.f32.mrb[0].mxu0
      %1857 = vmatprep.mubr.bf16.mxu0 0
      %1858 = vmatmul.mubr.bf16.gmra.mrb[0].mxu0 %v547
      %v1859 = vpop.f32.mrb[0].mxu0
      %v1860 = vadd.f32 %v1651, %v1859
      %v1861 = vpop.f32.mrb[0].mxu0
      %v1862 = vpop.f32.mrb[0].mxu0
      %v1863 = vadd.f32 %v1654, %v1862
      %v1864 = vpop.f32.mrb[0].mxu0
      %1865 = vmatprep.mubr.bf16.mxu0 0
      %1866 = vmatmul.mubr.bf16.gmra.mrb[0].mxu0 %v548
      %v1867 = vpop.f32.mrb[0].mxu0
      %v1868 = vadd.f32 %v1659, %v1867
      %v1869 = vpop.f32.mrb[0].mxu0
      %v1870 = vpop.f32.mrb[0].mxu0
      %v1871 = vadd.f32 %v1662, %v1870
      %v1872 = vpop.f32.mrb[0].mxu0
      %1873 = vmatprep.mubr.bf16.mxu0 0
      %1874 = vmatmul.mubr.bf16.gmra.mrb[0].mxu0 %v549
      %v1875 = vpop.f32.mrb[0].mxu0
      %v1876 = vadd.f32 %v1667, %v1875
      %v1877 = vpop.f32.mrb[0].mxu0
      %v1878 = vpop.f32.mrb[0].mxu0
      %v1879 = vadd.f32 %v1670, %v1878
      %v1880 = vpop.f32.mrb[0].mxu0
      %1881 = vmatprep.mubr.bf16.mxu0 0
      %1882 = vmatmul.mubr.bf16.gmra.mrb[0].mxu0 %v550
      %v1883 = vpop.f32.mrb[0].mxu0
      %v1884 = vadd.f32 %v1675, %v1883
      %v1885 = vpop.f32.mrb[0].mxu0
      %v1886 = vpop.f32.mrb[0].mxu0
      %v1887 = vadd.f32 %v1678, %v1886
      %v1888 = vpop.f32.mrb[0].mxu0
      %1889 = vmatprep.mubr.bf16.mxu0 0
      %1890 = vmatmul.mubr.bf16.gmra.mrb[0].mxu0 %v551
      %v1891 = vpop.f32.mrb[0].mxu0
      %v1892 = vadd.f32 %v1683, %v1891
      %v1893 = vpop.f32.mrb[0].mxu0
      %v1894 = vpop.f32.mrb[0].mxu0
      %v1895 = vadd.f32 %v1686, %v1894
      %v1896 = vpop.f32.mrb[0].mxu0
      %1897 = vmatprep.mubr.bf16.mxu0 0
      %1898 = vmatmul.mubr.bf16.gmra.mrb[0].mxu0 %v552
      %v1899 = vpop.f32.mrb[0].mxu0
      %v1900 = vadd.f32 %v1691, %v1899
      %v1901 = vpop.f32.mrb[0].mxu0
      %v1902 = vpop.f32.mrb[0].mxu0
      %v1903 = vadd.f32 %v1694, %v1902
      %v1904 = vpop.f32.mrb[0].mxu0
      %1905 = vdwg.mxu0
      %v1906 = vadd.f32 %v1780, %v471
      %v1907 = vadd.f32 %v1783, %v471
      %v1908 = vadd.f32 %v1788, %v471
      %v1909 = vadd.f32 %v1791, %v471
      %v1910 = vadd.f32 %v1796, %v471
      %v1911 = vadd.f32 %v1799, %v471
      %v1912 = vadd.f32 %v1804, %v471
      %v1913 = vadd.f32 %v1807, %v471
      %v1914 = vadd.f32 %v1812, %v471
      %v1915 = vadd.f32 %v1815, %v471
      %v1916 = vadd.f32 %v1820, %v471
      %v1917 = vadd.f32 %v1823, %v471
      %v1918 = vadd.f32 %v1828, %v471
      %v1919 = vadd.f32 %v1831, %v471
      %v1920 = vadd.f32 %v1836, %v471
      %v1921 = vadd.f32 %v1839, %v471
      %v1922 = vadd.f32 %v1844, %v471
      %v1923 = vadd.f32 %v1847, %v471
      %v1924 = vadd.f32 %v1852, %v471
      %v1925 = vadd.f32 %v1855, %v471
      %v1926 = vadd.f32 %v1860, %v471
      %v1927 = vadd.f32 %v1863, %v471
      %v1928 = vadd.f32 %v1868, %v471
      %v1929 = vadd.f32 %v1871, %v471
      %v1930 = vadd.f32 %v1876, %v471
      %v1931 = vadd.f32 %v1879, %v471
      %v1932 = vadd.f32 %v1884, %v471
      %v1933 = vadd.f32 %v1887, %v471
      %v1934 = vadd.f32 %v1892, %v471
      %v1935 = vadd.f32 %v1895, %v471
      %v1936 = vadd.f32 %v1900, %v471
      %v1937 = vadd.f32 %v1903, %v471
      %s1938 = scalar_lea.vmem %s4, 320
      %v1939 = vld [vmem:[%s1938] sm:$0xf]
      %v1940 = vld [vmem:[%s1938 + $0x4] sm:$0xf]
      %v1941 = vld [vmem:[%s1938 + $0x8] sm:$0xf]
      %v1942 = vld [vmem:[%s1938 + $0xc] sm:$0xf]
      %v1943 = vld [vmem:[%s1938 + $0x10] sm:$0xf]
      %v1944 = vld [vmem:[%s1938 + $0x14] sm:$0xf]
      %v1945 = vld [vmem:[%s1938 + $0x18] sm:$0xf]
      %v1946 = vld [vmem:[%s1938 + $0x1c] sm:$0xf]
      %v1947 = vld [vmem:[%s1938 + $0x20] sm:$0xf]
      %v1948 = vld [vmem:[%s1938 + $0x24] sm:$0xf]
      %v1949 = vld [vmem:[%s1938 + $0x28] sm:$0xf]
      %v1950 = vld [vmem:[%s1938 + $0x2c] sm:$0xf]
      %v1951 = vld [vmem:[%s1938 + $0x30] sm:$0xf]
      %v1952 = vld [vmem:[%s1938 + $0x34] sm:$0xf]
      %v1953 = vld [vmem:[%s1938 + $0x38] sm:$0xf]
      %v1954 = vld [vmem:[%s1938 + $0x3c] sm:$0xf]
      %s1955 = scalar_lea.vmem %s4, 384
      %v1956 = vld [vmem:[%s1955] sm:$0xf]
      %v1957 = vld [vmem:[%s1955 + $0x4] sm:$0xf]
      %v1958 = vld [vmem:[%s1955 + $0x8] sm:$0xf]
      %v1959 = vld [vmem:[%s1955 + $0xc] sm:$0xf]
      %v1960 = vld [vmem:[%s1955 + $0x10] sm:$0xf]
      %v1961 = vld [vmem:[%s1955 + $0x14] sm:$0xf]
      %v1962 = vld [vmem:[%s1955 + $0x18] sm:$0xf]
      %v1963 = vld [vmem:[%s1955 + $0x1c] sm:$0xf]
      %v1964 = vld [vmem:[%s1955 + $0x20] sm:$0xf]
      %v1965 = vld [vmem:[%s1955 + $0x24] sm:$0xf]
      %v1966 = vld [vmem:[%s1955 + $0x28] sm:$0xf]
      %v1967 = vld [vmem:[%s1955 + $0x2c] sm:$0xf]
      %v1968 = vld [vmem:[%s1955 + $0x30] sm:$0xf]
      %v1969 = vld [vmem:[%s1955 + $0x34] sm:$0xf]
      %v1970 = vld [vmem:[%s1955 + $0x38] sm:$0xf]
      %v1971 = vld [vmem:[%s1955 + $0x3c] sm:$0xf]
      %v1988 = vunpack.c.l.b16 %v1956
      %v1989 = vunpack.c.l.b16 %v1957
      %v1990 = vunpack.c.l.b16 %v1958
      %v1991 = vunpack.c.l.b16 %v1959
      %v1992 = vunpack.c.l.b16 %v1960
      %v1993 = vunpack.c.l.b16 %v1961
      %v1994 = vunpack.c.l.b16 %v1962
      %v1995 = vunpack.c.l.b16 %v1963
      %v1996 = vunpack.c.l.b16 %v1964
      %v1997 = vunpack.c.l.b16 %v1965
      %v1998 = vunpack.c.l.b16 %v1966
      %v1999 = vunpack.c.l.b16 %v1967
      %v2000 = vunpack.c.l.b16 %v1968
      %v2001 = vunpack.c.l.b16 %v1969
      %v2002 = vunpack.c.l.b16 %v1970
      %v2003 = vunpack.c.l.b16 %v1971
      %v2004 = vpack.c.b16 %v1989, %v1988
      %v2005 = vpack.c.b16 %v1991, %v1990
      %v2006 = vpack.c.b16 %v1993, %v1992
      %v2007 = vpack.c.b16 %v1995, %v1994
      %v2008 = vpack.c.b16 %v1997, %v1996
      %v2009 = vpack.c.b16 %v1999, %v1998
      %v2010 = vpack.c.b16 %v2001, %v2000
      %v2011 = vpack.c.b16 %v2003, %v2002
      %2020 = vmatprep.subr.bf16.mxu0 0
      %2021 = vmatpush1.bf16.msra.mxu0 %v2004
      %2022 = vmatprep.subr.bf16.mxu0 0
      %2023 = vmatpush1.bf16.msra.mxu0 %v2005
      %2024 = vmatprep.subr.bf16.mxu0 0
      %2025 = vmatpush1.bf16.msra.mxu0 %v2006
      %2026 = vmatprep.subr.bf16.mxu0 0
      %2027 = vmatpush1.bf16.msra.mxu0 %v2007
      %2028 = vmatprep.subr.bf16.mxu0 0
      %2029 = vmatpush1.bf16.msra.mxu0 %v2008
      %2030 = vmatprep.subr.bf16.mxu0 0
      %2031 = vmatpush1.bf16.msra.mxu0 %v2009
      %2032 = vmatprep.subr.bf16.mxu0 0
      %2033 = vmatpush1.bf16.msra.mxu0 %v2010
      %2034 = vmatprep.subr.bf16.mxu0 0
      %2035 = vmatpush1.bf16.msra.mxu0 %v2011
      %2036 = vmatprep.subr.bf16.mxu0 0
      %2037 = vmatpush1.bf16.msra.mxu0 0
      %2038 = vmatprep.subr.bf16.mxu0 0
      %2039 = vmatpush1.bf16.msra.mxu0 0
      %2040 = vmatprep.subr.bf16.mxu0 0
      %2041 = vmatpush1.bf16.msra.mxu0 0
      %2042 = vmatprep.subr.bf16.mxu0 0
      %2043 = vmatpush1.bf16.msra.mxu0 0
      %2044 = vmatprep.subr.bf16.mxu0 0
      %2045 = vmatpush1.bf16.msra.mxu0 0
      %2046 = vmatprep.subr.bf16.mxu0 0
      %2047 = vmatpush1.bf16.msra.mxu0 0
      %2048 = vmatprep.subr.bf16.mxu0 0
      %2049 = vmatpush1.bf16.msra.mxu0 0
      %2050 = vmatprep.subr.bf16.mxu0 0
      %2051 = vmatpush1.bf16.msra.mxu0 0
      %2052 = vmatprep.mubr.bf16.mxu0 0
      %2053 = vmatmul.mubr.bf16.gmra.mrb[0].mxu0 %v876
      %v2054 = vpop.f32.mrb[0].mxu0
      %v2055 = vadd.f32 0.0, %v2054
      %v2056 = vpop.f32.mrb[0].mxu0
      %v2057 = vpop.f32.mrb[0].mxu0
      %v2058 = vadd.f32 0.0, %v2057
      %v2059 = vpop.f32.mrb[0].mxu0
      %2060 = vmatprep.mubr.bf16.mxu0 0
      %2061 = vmatmul.mubr.bf16.gmra.mrb[0].mxu0 %v877
      %v2062 = vpop.f32.mrb[0].mxu0
      %v2063 = vadd.f32 0.0, %v2062
      %v2064 = vpop.f32.mrb[0].mxu0
      %v2065 = vpop.f32.mrb[0].mxu0
      %v2066 = vadd.f32 0.0, %v2065
      %v2067 = vpop.f32.mrb[0].mxu0
      %2068 = vmatprep.mubr.bf16.mxu0 0
      %2069 = vmatmul.mubr.bf16.gmra.mrb[0].mxu0 %v878
      %v2070 = vpop.f32.mrb[0].mxu0
      %v2071 = vadd.f32 0.0, %v2070
      %v2072 = vpop.f32.mrb[0].mxu0
      %v2073 = vpop.f32.mrb[0].mxu0
      %v2074 = vadd.f32 0.0, %v2073
      %v2075 = vpop.f32.mrb[0].mxu0
      %2076 = vmatprep.mubr.bf16.mxu0 0
      %2077 = vmatmul.mubr.bf16.gmra.mrb[0].mxu0 %v879
      %v2078 = vpop.f32.mrb[0].mxu0
      %v2079 = vadd.f32 0.0, %v2078
      %v2080 = vpop.f32.mrb[0].mxu0
      %v2081 = vpop.f32.mrb[0].mxu0
      %v2082 = vadd.f32 0.0, %v2081
      %v2083 = vpop.f32.mrb[0].mxu0
      %2084 = vmatprep.mubr.bf16.mxu0 0
      %2085 = vmatmul.mubr.bf16.gmra.mrb[0].mxu0 %v880
      %v2086 = vpop.f32.mrb[0].mxu0
      %v2087 = vadd.f32 0.0, %v2086
      %v2088 = vpop.f32.mrb[0].mxu0
      %v2089 = vpop.f32.mrb[0].mxu0
      %v2090 = vadd.f32 0.0, %v2089
      %v2091 = vpop.f32.mrb[0].mxu0
      %2092 = vmatprep.mubr.bf16.mxu0 0
      %2093 = vmatmul.mubr.bf16.gmra.mrb[0].mxu0 %v881
      %v2094 = vpop.f32.mrb[0].mxu0
      %v2095 = vadd.f32 0.0, %v2094
      %v2096 = vpop.f32.mrb[0].mxu0
      %v2097 = vpop.f32.mrb[0].mxu0
      %v2098 = vadd.f32 0.0, %v2097
      %v2099 = vpop.f32.mrb[0].mxu0
      %2100 = vmatprep.mubr.bf16.mxu0 0
      %2101 = vmatmul.mubr.bf16.gmra.mrb[0].mxu0 %v882
      %v2102 = vpop.f32.mrb[0].mxu0
      %v2103 = vadd.f32 0.0, %v2102
      %v2104 = vpop.f32.mrb[0].mxu0
      %v2105 = vpop.f32.mrb[0].mxu0
      %v2106 = vadd.f32 0.0, %v2105
      %v2107 = vpop.f32.mrb[0].mxu0
      %2108 = vmatprep.mubr.bf16.mxu0 0
      %2109 = vmatmul.mubr.bf16.gmra.mrb[0].mxu0 %v883
      %v2110 = vpop.f32.mrb[0].mxu0
      %v2111 = vadd.f32 0.0, %v2110
      %v2112 = vpop.f32.mrb[0].mxu0
      %v2113 = vpop.f32.mrb[0].mxu0
      %v2114 = vadd.f32 0.0, %v2113
      %v2115 = vpop.f32.mrb[0].mxu0
      %2116 = vmatprep.mubr.bf16.mxu0 0
      %2117 = vmatmul.mubr.bf16.gmra.mrb[0].mxu0 %v884
      %v2118 = vpop.f32.mrb[0].mxu0
      %v2119 = vadd.f32 0.0, %v2118
      %v2120 = vpop.f32.mrb[0].mxu0
      %v2121 = vpop.f32.mrb[0].mxu0
      %v2122 = vadd.f32 0.0, %v2121
      %v2123 = vpop.f32.mrb[0].mxu0
      %2124 = vmatprep.mubr.bf16.mxu0 0
      %2125 = vmatmul.mubr.bf16.gmra.mrb[0].mxu0 %v885
      %v2126 = vpop.f32.mrb[0].mxu0
      %v2127 = vadd.f32 0.0, %v2126
      %v2128 = vpop.f32.mrb[0].mxu0
      %v2129 = vpop.f32.mrb[0].mxu0
      %v2130 = vadd.f32 0.0, %v2129
      %v2131 = vpop.f32.mrb[0].mxu0
      %2132 = vmatprep.mubr.bf16.mxu0 0
      %2133 = vmatmul.mubr.bf16.gmra.mrb[0].mxu0 %v886
      %v2134 = vpop.f32.mrb[0].mxu0
      %v2135 = vadd.f32 0.0, %v2134
      %v2136 = vpop.f32.mrb[0].mxu0
      %v2137 = vpop.f32.mrb[0].mxu0
      %v2138 = vadd.f32 0.0, %v2137
      %v2139 = vpop.f32.mrb[0].mxu0
      %2140 = vmatprep.mubr.bf16.mxu0 0
      %2141 = vmatmul.mubr.bf16.gmra.mrb[0].mxu0 %v887
      %v2142 = vpop.f32.mrb[0].mxu0
      %v2143 = vadd.f32 0.0, %v2142
      %v2144 = vpop.f32.mrb[0].mxu0
      %v2145 = vpop.f32.mrb[0].mxu0
      %v2146 = vadd.f32 0.0, %v2145
      %v2147 = vpop.f32.mrb[0].mxu0
      %2148 = vmatprep.mubr.bf16.mxu0 0
      %2149 = vmatmul.mubr.bf16.gmra.mrb[0].mxu0 %v888
      %v2150 = vpop.f32.mrb[0].mxu0
      %v2151 = vadd.f32 0.0, %v2150
      %v2152 = vpop.f32.mrb[0].mxu0
      %v2153 = vpop.f32.mrb[0].mxu0
      %v2154 = vadd.f32 0.0, %v2153
      %v2155 = vpop.f32.mrb[0].mxu0
      %2156 = vmatprep.mubr.bf16.mxu0 0
      %2157 = vmatmul.mubr.bf16.gmra.mrb[0].mxu0 %v889
      %v2158 = vpop.f32.mrb[0].mxu0
      %v2159 = vadd.f32 0.0, %v2158
      %v2160 = vpop.f32.mrb[0].mxu0
      %v2161 = vpop.f32.mrb[0].mxu0
      %v2162 = vadd.f32 0.0, %v2161
      %v2163 = vpop.f32.mrb[0].mxu0
      %2164 = vmatprep.mubr.bf16.mxu0 0
      %2165 = vmatmul.mubr.bf16.gmra.mrb[0].mxu0 %v890
      %v2166 = vpop.f32.mrb[0].mxu0
      %v2167 = vadd.f32 0.0, %v2166
      %v2168 = vpop.f32.mrb[0].mxu0
      %v2169 = vpop.f32.mrb[0].mxu0
      %v2170 = vadd.f32 0.0, %v2169
      %v2171 = vpop.f32.mrb[0].mxu0
      %2172 = vmatprep.mubr.bf16.mxu0 0
      %2173 = vmatmul.mubr.bf16.gmra.mrb[0].mxu0 %v891
      %v2174 = vpop.f32.mrb[0].mxu0
      %v2175 = vadd.f32 0.0, %v2174
      %v2176 = vpop.f32.mrb[0].mxu0
      %v2177 = vpop.f32.mrb[0].mxu0
      %v2178 = vadd.f32 0.0, %v2177
      %v2179 = vpop.f32.mrb[0].mxu0
      %2180 = vdwg.mxu0
      %v2197 = vunpack.c.l.b16 %v1939
      %v2198 = vunpack.c.l.b16 %v1940
      %v2199 = vunpack.c.l.b16 %v1941
      %v2200 = vunpack.c.l.b16 %v1942
      %v2201 = vunpack.c.l.b16 %v1943
      %v2202 = vunpack.c.l.b16 %v1944
      %v2203 = vunpack.c.l.b16 %v1945
      %v2204 = vunpack.c.l.b16 %v1946
      %v2205 = vunpack.c.l.b16 %v1947
      %v2206 = vunpack.c.l.b16 %v1948
      %v2207 = vunpack.c.l.b16 %v1949
      %v2208 = vunpack.c.l.b16 %v1950
      %v2209 = vunpack.c.l.b16 %v1951
      %v2210 = vunpack.c.l.b16 %v1952
      %v2211 = vunpack.c.l.b16 %v1953
      %v2212 = vunpack.c.l.b16 %v1954
      %v2213 = vpack.c.b16 %v2198, %v2197
      %v2214 = vpack.c.b16 %v2200, %v2199
      %v2215 = vpack.c.b16 %v2202, %v2201
      %v2216 = vpack.c.b16 %v2204, %v2203
      %v2217 = vpack.c.b16 %v2206, %v2205
      %v2218 = vpack.c.b16 %v2208, %v2207
      %v2219 = vpack.c.b16 %v2210, %v2209
      %v2220 = vpack.c.b16 %v2212, %v2211
      %2229 = vmatprep.subr.bf16.mxu0 0
      %2230 = vmatpush1.bf16.msra.mxu0 %v2213
      %2231 = vmatprep.subr.bf16.mxu0 0
      %2232 = vmatpush1.bf16.msra.mxu0 %v2214
      %2233 = vmatprep.subr.bf16.mxu0 0
      %2234 = vmatpush1.bf16.msra.mxu0 %v2215
      %2235 = vmatprep.subr.bf16.mxu0 0
      %2236 = vmatpush1.bf16.msra.mxu0 %v2216
      %2237 = vmatprep.subr.bf16.mxu0 0
      %2238 = vmatpush1.bf16.msra.mxu0 %v2217
      %2239 = vmatprep.subr.bf16.mxu0 0
      %2240 = vmatpush1.bf16.msra.mxu0 %v2218
      %2241 = vmatprep.subr.bf16.mxu0 0
      %2242 = vmatpush1.bf16.msra.mxu0 %v2219
      %2243 = vmatprep.subr.bf16.mxu0 0
      %2244 = vmatpush1.bf16.msra.mxu0 %v2220
      %2245 = vmatprep.subr.bf16.mxu0 0
      %2246 = vmatpush1.bf16.msra.mxu0 0
      %2247 = vmatprep.subr.bf16.mxu0 0
      %2248 = vmatpush1.bf16.msra.mxu0 0
      %2249 = vmatprep.subr.bf16.mxu0 0
      %2250 = vmatpush1.bf16.msra.mxu0 0
      %2251 = vmatprep.subr.bf16.mxu0 0
      %2252 = vmatpush1.bf16.msra.mxu0 0
      %2253 = vmatprep.subr.bf16.mxu0 0
      %2254 = vmatpush1.bf16.msra.mxu0 0
      %2255 = vmatprep.subr.bf16.mxu0 0
      %2256 = vmatpush1.bf16.msra.mxu0 0
      %2257 = vmatprep.subr.bf16.mxu0 0
      %2258 = vmatpush1.bf16.msra.mxu0 0
      %2259 = vmatprep.subr.bf16.mxu0 0
      %2260 = vmatpush1.bf16.msra.mxu0 0
      %2261 = vmatprep.mubr.bf16.mxu0 0
      %2262 = vmatmul.mubr.bf16.gmra.mrb[0].mxu0 %v537
      %v2263 = vpop.f32.mrb[0].mxu0
      %v2264 = vadd.f32 %v2055, %v2263
      %v2265 = vpop.f32.mrb[0].mxu0
      %v2266 = vpop.f32.mrb[0].mxu0
      %v2267 = vadd.f32 %v2058, %v2266
      %v2268 = vpop.f32.mrb[0].mxu0
      %2269 = vmatprep.mubr.bf16.mxu0 0
      %2270 = vmatmul.mubr.bf16.gmra.mrb[0].mxu0 %v538
      %v2271 = vpop.f32.mrb[0].mxu0
      %v2272 = vadd.f32 %v2063, %v2271
      %v2273 = vpop.f32.mrb[0].mxu0
      %v2274 = vpop.f32.mrb[0].mxu0
      %v2275 = vadd.f32 %v2066, %v2274
      %v2276 = vpop.f32.mrb[0].mxu0
      %2277 = vmatprep.mubr.bf16.mxu0 0
      %2278 = vmatmul.mubr.bf16.gmra.mrb[0].mxu0 %v539
      %v2279 = vpop.f32.mrb[0].mxu0
      %v2280 = vadd.f32 %v2071, %v2279
      %v2281 = vpop.f32.mrb[0].mxu0
      %v2282 = vpop.f32.mrb[0].mxu0
      %v2283 = vadd.f32 %v2074, %v2282
      %v2284 = vpop.f32.mrb[0].mxu0
      %2285 = vmatprep.mubr.bf16.mxu0 0
      %2286 = vmatmul.mubr.bf16.gmra.mrb[0].mxu0 %v540
      %v2287 = vpop.f32.mrb[0].mxu0
      %v2288 = vadd.f32 %v2079, %v2287
      %v2289 = vpop.f32.mrb[0].mxu0
      %v2290 = vpop.f32.mrb[0].mxu0
      %v2291 = vadd.f32 %v2082, %v2290
      %v2292 = vpop.f32.mrb[0].mxu0
      %2293 = vmatprep.mubr.bf16.mxu0 0
      %2294 = vmatmul.mubr.bf16.gmra.mrb[0].mxu0 %v541
      %v2295 = vpop.f32.mrb[0].mxu0
      %v2296 = vadd.f32 %v2087, %v2295
      %v2297 = vpop.f32.mrb[0].mxu0
      %v2298 = vpop.f32.mrb[0].mxu0
      %v2299 = vadd.f32 %v2090, %v2298
      %v2300 = vpop.f32.mrb[0].mxu0
      %2301 = vmatprep.mubr.bf16.mxu0 0
      %2302 = vmatmul.mubr.bf16.gmra.mrb[0].mxu0 %v542
      %v2303 = vpop.f32.mrb[0].mxu0
      %v2304 = vadd.f32 %v2095, %v2303
      %v2305 = vpop.f32.mrb[0].mxu0
      %v2306 = vpop.f32.mrb[0].mxu0
      %v2307 = vadd.f32 %v2098, %v2306
      %v2308 = vpop.f32.mrb[0].mxu0
      %2309 = vmatprep.mubr.bf16.mxu0 0
      %2310 = vmatmul.mubr.bf16.gmra.mrb[0].mxu0 %v543
      %v2311 = vpop.f32.mrb[0].mxu0
      %v2312 = vadd.f32 %v2103, %v2311
      %v2313 = vpop.f32.mrb[0].mxu0
      %v2314 = vpop.f32.mrb[0].mxu0
      %v2315 = vadd.f32 %v2106, %v2314
      %v2316 = vpop.f32.mrb[0].mxu0
      %2317 = vmatprep.mubr.bf16.mxu0 0
      %2318 = vmatmul.mubr.bf16.gmra.mrb[0].mxu0 %v544
      %v2319 = vpop.f32.mrb[0].mxu0
      %v2320 = vadd.f32 %v2111, %v2319
      %v2321 = vpop.f32.mrb[0].mxu0
      %v2322 = vpop.f32.mrb[0].mxu0
      %v2323 = vadd.f32 %v2114, %v2322
      %v2324 = vpop.f32.mrb[0].mxu0
      %2325 = vmatprep.mubr.bf16.mxu0 0
      %2326 = vmatmul.mubr.bf16.gmra.mrb[0].mxu0 %v545
      %v2327 = vpop.f32.mrb[0].mxu0
      %v2328 = vadd.f32 %v2119, %v2327
      %v2329 = vpop.f32.mrb[0].mxu0
      %v2330 = vpop.f32.mrb[0].mxu0
      %v2331 = vadd.f32 %v2122, %v2330
      %v2332 = vpop.f32.mrb[0].mxu0
      %2333 = vmatprep.mubr.bf16.mxu0 0
      %2334 = vmatmul.mubr.bf16.gmra.mrb[0].mxu0 %v546
      %v2335 = vpop.f32.mrb[0].mxu0
      %v2336 = vadd.f32 %v2127, %v2335
      %v2337 = vpop.f32.mrb[0].mxu0
      %v2338 = vpop.f32.mrb[0].mxu0
      %v2339 = vadd.f32 %v2130, %v2338
      %v2340 = vpop.f32.mrb[0].mxu0
      %2341 = vmatprep.mubr.bf16.mxu0 0
      %2342 = vmatmul.mubr.bf16.gmra.mrb[0].mxu0 %v547
      %v2343 = vpop.f32.mrb[0].mxu0
      %v2344 = vadd.f32 %v2135, %v2343
      %v2345 = vpop.f32.mrb[0].mxu0
      %v2346 = vpop.f32.mrb[0].mxu0
      %v2347 = vadd.f32 %v2138, %v2346
      %v2348 = vpop.f32.mrb[0].mxu0
      %2349 = vmatprep.mubr.bf16.mxu0 0
      %2350 = vmatmul.mubr.bf16.gmra.mrb[0].mxu0 %v548
      %v2351 = vpop.f32.mrb[0].mxu0
      %v2352 = vadd.f32 %v2143, %v2351
      %v2353 = vpop.f32.mrb[0].mxu0
      %v2354 = vpop.f32.mrb[0].mxu0
      %v2355 = vadd.f32 %v2146, %v2354
      %v2356 = vpop.f32.mrb[0].mxu0
      %2357 = vmatprep.mubr.bf16.mxu0 0
      %2358 = vmatmul.mubr.bf16.gmra.mrb[0].mxu0 %v549
      %v2359 = vpop.f32.mrb[0].mxu0
      %v2360 = vadd.f32 %v2151, %v2359
      %v2361 = vpop.f32.mrb[0].mxu0
      %v2362 = vpop.f32.mrb[0].mxu0
      %v2363 = vadd.f32 %v2154, %v2362
      %v2364 = vpop.f32.mrb[0].mxu0
      %2365 = vmatprep.mubr.bf16.mxu0 0
      %2366 = vmatmul.mubr.bf16.gmra.mrb[0].mxu0 %v550
      %v2367 = vpop.f32.mrb[0].mxu0
      %v2368 = vadd.f32 %v2159, %v2367
      %v2369 = vpop.f32.mrb[0].mxu0
      %v2370 = vpop.f32.mrb[0].mxu0
      %v2371 = vadd.f32 %v2162, %v2370
      %v2372 = vpop.f32.mrb[0].mxu0
      %2373 = vmatprep.mubr.bf16.mxu0 0
      %2374 = vmatmul.mubr.bf16.gmra.mrb[0].mxu0 %v551
      %v2375 = vpop.f32.mrb[0].mxu0
      %v2376 = vadd.f32 %v2167, %v2375
      %v2377 = vpop.f32.mrb[0].mxu0
      %v2378 = vpop.f32.mrb[0].mxu0
      %v2379 = vadd.f32 %v2170, %v2378
      %v2380 = vpop.f32.mrb[0].mxu0
      %2381 = vmatprep.mubr.bf16.mxu0 0
      %2382 = vmatmul.mubr.bf16.gmra.mrb[0].mxu0 %v552
      %v2383 = vpop.f32.mrb[0].mxu0
      %v2384 = vadd.f32 %v2175, %v2383
      %v2385 = vpop.f32.mrb[0].mxu0
      %v2386 = vpop.f32.mrb[0].mxu0
      %v2387 = vadd.f32 %v2178, %v2386
      %v2388 = vpop.f32.mrb[0].mxu0
      %2389 = vdwg.mxu0
      %s2390 = scalar_lea.vmem %s4, 448
      %v2391 = vld [vmem:[%s2390] sm:$0xf]
      %v2392 = vld [vmem:[%s2390 + $0x4] sm:$0xf]
      %v2393 = vld [vmem:[%s2390 + $0x8] sm:$0xf]
      %v2394 = vld [vmem:[%s2390 + $0xc] sm:$0xf]
      %v2395 = vld [vmem:[%s2390 + $0x10] sm:$0xf]
      %v2396 = vld [vmem:[%s2390 + $0x14] sm:$0xf]
      %v2397 = vld [vmem:[%s2390 + $0x18] sm:$0xf]
      %v2398 = vld [vmem:[%s2390 + $0x1c] sm:$0xf]
      %v2399 = vld [vmem:[%s2390 + $0x20] sm:$0xf]
      %v2400 = vld [vmem:[%s2390 + $0x24] sm:$0xf]
      %v2401 = vld [vmem:[%s2390 + $0x28] sm:$0xf]
      %v2402 = vld [vmem:[%s2390 + $0x2c] sm:$0xf]
      %v2403 = vld [vmem:[%s2390 + $0x30] sm:$0xf]
      %v2404 = vld [vmem:[%s2390 + $0x34] sm:$0xf]
      %v2405 = vld [vmem:[%s2390 + $0x38] sm:$0xf]
      %v2406 = vld [vmem:[%s2390 + $0x3c] sm:$0xf]
      %v2423 = vunpack.c.l.b16 %v2391
      %v2424 = vunpack.c.l.b16 %v2392
      %v2425 = vunpack.c.l.b16 %v2393
      %v2426 = vunpack.c.l.b16 %v2394
      %v2427 = vunpack.c.l.b16 %v2395
      %v2428 = vunpack.c.l.b16 %v2396
      %v2429 = vunpack.c.l.b16 %v2397
      %v2430 = vunpack.c.l.b16 %v2398
      %v2431 = vunpack.c.l.b16 %v2399
      %v2432 = vunpack.c.l.b16 %v2400
      %v2433 = vunpack.c.l.b16 %v2401
      %v2434 = vunpack.c.l.b16 %v2402
      %v2435 = vunpack.c.l.b16 %v2403
      %v2436 = vunpack.c.l.b16 %v2404
      %v2437 = vunpack.c.l.b16 %v2405
      %v2438 = vunpack.c.l.b16 %v2406
      %v2439 = vpack.c.b16 %v2424, %v2423
      %v2440 = vpack.c.b16 %v2426, %v2425
      %v2441 = vpack.c.b16 %v2428, %v2427
      %v2442 = vpack.c.b16 %v2430, %v2429
      %v2443 = vpack.c.b16 %v2432, %v2431
      %v2444 = vpack.c.b16 %v2434, %v2433
      %v2445 = vpack.c.b16 %v2436, %v2435
      %v2446 = vpack.c.b16 %v2438, %v2437
      %2455 = vmatprep.subr.bf16.mxu0 0
      %2456 = vmatpush1.bf16.msra.mxu0 %v2439
      %2457 = vmatprep.subr.bf16.mxu0 0
      %2458 = vmatpush1.bf16.msra.mxu0 %v2440
      %2459 = vmatprep.subr.bf16.mxu0 0
      %2460 = vmatpush1.bf16.msra.mxu0 %v2441
      %2461 = vmatprep.subr.bf16.mxu0 0
      %2462 = vmatpush1.bf16.msra.mxu0 %v2442
      %2463 = vmatprep.subr.bf16.mxu0 0
      %2464 = vmatpush1.bf16.msra.mxu0 %v2443
      %2465 = vmatprep.subr.bf16.mxu0 0
      %2466 = vmatpush1.bf16.msra.mxu0 %v2444
      %2467 = vmatprep.subr.bf16.mxu0 0
      %2468 = vmatpush1.bf16.msra.mxu0 %v2445
      %2469 = vmatprep.subr.bf16.mxu0 0
      %2470 = vmatpush1.bf16.msra.mxu0 %v2446
      %2471 = vmatprep.subr.bf16.mxu0 0
      %2472 = vmatpush1.bf16.msra.mxu0 0
      %2473 = vmatprep.subr.bf16.mxu0 0
      %2474 = vmatpush1.bf16.msra.mxu0 0
      %2475 = vmatprep.subr.bf16.mxu0 0
      %2476 = vmatpush1.bf16.msra.mxu0 0
      %2477 = vmatprep.subr.bf16.mxu0 0
      %2478 = vmatpush1.bf16.msra.mxu0 0
      %2479 = vmatprep.subr.bf16.mxu0 0
      %2480 = vmatpush1.bf16.msra.mxu0 0
      %2481 = vmatprep.subr.bf16.mxu0 0
      %2482 = vmatpush1.bf16.msra.mxu0 0
      %2483 = vmatprep.subr.bf16.mxu0 0
      %2484 = vmatpush1.bf16.msra.mxu0 0
      %2485 = vmatprep.subr.bf16.mxu0 0
      %2486 = vmatpush1.bf16.msra.mxu0 0
      %2487 = vmatprep.mubr.bf16.mxu0 0
      %2488 = vmatmul.mubr.bf16.gmra.mrb[0].mxu0 %v1456
      %v2489 = vpop.f32.mrb[0].mxu0
      %v2490 = vadd.f32 0.0, %v2489
      %v2491 = vpop.f32.mrb[0].mxu0
      %v2492 = vpop.f32.mrb[0].mxu0
      %v2493 = vadd.f32 0.0, %v2492
      %v2494 = vpop.f32.mrb[0].mxu0
      %2495 = vmatprep.mubr.bf16.mxu0 0
      %2496 = vmatmul.mubr.bf16.gmra.mrb[0].mxu0 %v1457
      %v2497 = vpop.f32.mrb[0].mxu0
      %v2498 = vadd.f32 0.0, %v2497
      %v2499 = vpop.f32.mrb[0].mxu0
      %v2500 = vpop.f32.mrb[0].mxu0
      %v2501 = vadd.f32 0.0, %v2500
      %v2502 = vpop.f32.mrb[0].mxu0
      %2503 = vmatprep.mubr.bf16.mxu0 0
      %2504 = vmatmul.mubr.bf16.gmra.mrb[0].mxu0 %v1458
      %v2505 = vpop.f32.mrb[0].mxu0
      %v2506 = vadd.f32 0.0, %v2505
      %v2507 = vpop.f32.mrb[0].mxu0
      %v2508 = vpop.f32.mrb[0].mxu0
      %v2509 = vadd.f32 0.0, %v2508
      %v2510 = vpop.f32.mrb[0].mxu0
      %2511 = vmatprep.mubr.bf16.mxu0 0
      %2512 = vmatmul.mubr.bf16.gmra.mrb[0].mxu0 %v1459
      %v2513 = vpop.f32.mrb[0].mxu0
      %v2514 = vadd.f32 0.0, %v2513
      %v2515 = vpop.f32.mrb[0].mxu0
      %v2516 = vpop.f32.mrb[0].mxu0
      %v2517 = vadd.f32 0.0, %v2516
      %v2518 = vpop.f32.mrb[0].mxu0
      %2519 = vmatprep.mubr.bf16.mxu0 0
      %2520 = vmatmul.mubr.bf16.gmra.mrb[0].mxu0 %v1460
      %v2521 = vpop.f32.mrb[0].mxu0
      %v2522 = vadd.f32 0.0, %v2521
      %v2523 = vpop.f32.mrb[0].mxu0
      %v2524 = vpop.f32.mrb[0].mxu0
      %v2525 = vadd.f32 0.0, %v2524
      %v2526 = vpop.f32.mrb[0].mxu0
      %2527 = vmatprep.mubr.bf16.mxu0 0
      %2528 = vmatmul.mubr.bf16.gmra.mrb[0].mxu0 %v1461
      %v2529 = vpop.f32.mrb[0].mxu0
      %v2530 = vadd.f32 0.0, %v2529
      %v2531 = vpop.f32.mrb[0].mxu0
      %v2532 = vpop.f32.mrb[0].mxu0
      %v2533 = vadd.f32 0.0, %v2532
      %v2534 = vpop.f32.mrb[0].mxu0
      %2535 = vmatprep.mubr.bf16.mxu0 0
      %2536 = vmatmul.mubr.bf16.gmra.mrb[0].mxu0 %v1462
      %v2537 = vpop.f32.mrb[0].mxu0
      %v2538 = vadd.f32 0.0, %v2537
      %v2539 = vpop.f32.mrb[0].mxu0
      %v2540 = vpop.f32.mrb[0].mxu0
      %v2541 = vadd.f32 0.0, %v2540
      %v2542 = vpop.f32.mrb[0].mxu0
      %2543 = vmatprep.mubr.bf16.mxu0 0
      %2544 = vmatmul.mubr.bf16.gmra.mrb[0].mxu0 %v1463
      %v2545 = vpop.f32.mrb[0].mxu0
      %v2546 = vadd.f32 0.0, %v2545
      %v2547 = vpop.f32.mrb[0].mxu0
      %v2548 = vpop.f32.mrb[0].mxu0
      %v2549 = vadd.f32 0.0, %v2548
      %v2550 = vpop.f32.mrb[0].mxu0
      %2551 = vmatprep.mubr.bf16.mxu0 0
      %2552 = vmatmul.mubr.bf16.gmra.mrb[0].mxu0 %v1464
      %v2553 = vpop.f32.mrb[0].mxu0
      %v2554 = vadd.f32 0.0, %v2553
      %v2555 = vpop.f32.mrb[0].mxu0
      %v2556 = vpop.f32.mrb[0].mxu0
      %v2557 = vadd.f32 0.0, %v2556
      %v2558 = vpop.f32.mrb[0].mxu0
      %2559 = vmatprep.mubr.bf16.mxu0 0
      %2560 = vmatmul.mubr.bf16.gmra.mrb[0].mxu0 %v1465
      %v2561 = vpop.f32.mrb[0].mxu0
      %v2562 = vadd.f32 0.0, %v2561
      %v2563 = vpop.f32.mrb[0].mxu0
      %v2564 = vpop.f32.mrb[0].mxu0
      %v2565 = vadd.f32 0.0, %v2564
      %v2566 = vpop.f32.mrb[0].mxu0
      %2567 = vmatprep.mubr.bf16.mxu0 0
      %2568 = vmatmul.mubr.bf16.gmra.mrb[0].mxu0 %v1466
      %v2569 = vpop.f32.mrb[0].mxu0
      %v2570 = vadd.f32 0.0, %v2569
      %v2571 = vpop.f32.mrb[0].mxu0
      %v2572 = vpop.f32.mrb[0].mxu0
      %v2573 = vadd.f32 0.0, %v2572
      %v2574 = vpop.f32.mrb[0].mxu0
      %2575 = vmatprep.mubr.bf16.mxu0 0
      %2576 = vmatmul.mubr.bf16.gmra.mrb[0].mxu0 %v1467
      %v2577 = vpop.f32.mrb[0].mxu0
      %v2578 = vadd.f32 0.0, %v2577
      %v2579 = vpop.f32.mrb[0].mxu0
      %v2580 = vpop.f32.mrb[0].mxu0
      %v2581 = vadd.f32 0.0, %v2580
      %v2582 = vpop.f32.mrb[0].mxu0
      %2583 = vmatprep.mubr.bf16.mxu0 0
      %2584 = vmatmul.mubr.bf16.gmra.mrb[0].mxu0 %v1468
      %v2585 = vpop.f32.mrb[0].mxu0
      %v2586 = vadd.f32 0.0, %v2585
      %v2587 = vpop.f32.mrb[0].mxu0
      %v2588 = vpop.f32.mrb[0].mxu0
      %v2589 = vadd.f32 0.0, %v2588
      %v2590 = vpop.f32.mrb[0].mxu0
      %2591 = vmatprep.mubr.bf16.mxu0 0
      %2592 = vmatmul.mubr.bf16.gmra.mrb[0].mxu0 %v1469
      %v2593 = vpop.f32.mrb[0].mxu0
      %v2594 = vadd.f32 0.0, %v2593
      %v2595 = vpop.f32.mrb[0].mxu0
      %v2596 = vpop.f32.mrb[0].mxu0
      %v2597 = vadd.f32 0.0, %v2596
      %v2598 = vpop.f32.mrb[0].mxu0
      %2599 = vmatprep.mubr.bf16.mxu0 0
      %2600 = vmatmul.mubr.bf16.gmra.mrb[0].mxu0 %v1470
      %v2601 = vpop.f32.mrb[0].mxu0
      %v2602 = vadd.f32 0.0, %v2601
      %v2603 = vpop.f32.mrb[0].mxu0
      %v2604 = vpop.f32.mrb[0].mxu0
      %v2605 = vadd.f32 0.0, %v2604
      %v2606 = vpop.f32.mrb[0].mxu0
      %2607 = vmatprep.mubr.bf16.mxu0 0
      %2608 = vmatmul.mubr.bf16.gmra.mrb[0].mxu0 %v1471
      %v2609 = vpop.f32.mrb[0].mxu0
      %v2610 = vadd.f32 0.0, %v2609
      %v2611 = vpop.f32.mrb[0].mxu0
      %v2612 = vpop.f32.mrb[0].mxu0
      %v2613 = vadd.f32 0.0, %v2612
      %v2614 = vpop.f32.mrb[0].mxu0
      %2615 = vdwg.mxu0
      %v2616 = vadd.f32 %v2264, %v2490
      %v2617 = vadd.f32 %v2267, %v2493
      %v2618 = vadd.f32 %v2272, %v2498
      %v2619 = vadd.f32 %v2275, %v2501
      %v2620 = vadd.f32 %v2280, %v2506
      %v2621 = vadd.f32 %v2283, %v2509
      %v2622 = vadd.f32 %v2288, %v2514
      %v2623 = vadd.f32 %v2291, %v2517
      %v2624 = vadd.f32 %v2296, %v2522
      %v2625 = vadd.f32 %v2299, %v2525
      %v2626 = vadd.f32 %v2304, %v2530
      %v2627 = vadd.f32 %v2307, %v2533
      %v2628 = vadd.f32 %v2312, %v2538
      %v2629 = vadd.f32 %v2315, %v2541
      %v2630 = vadd.f32 %v2320, %v2546
      %v2631 = vadd.f32 %v2323, %v2549
      %v2632 = vadd.f32 %v2328, %v2554
      %v2633 = vadd.f32 %v2331, %v2557
      %v2634 = vadd.f32 %v2336, %v2562
      %v2635 = vadd.f32 %v2339, %v2565
      %v2636 = vadd.f32 %v2344, %v2570
      %v2637 = vadd.f32 %v2347, %v2573
      %v2638 = vadd.f32 %v2352, %v2578
      %v2639 = vadd.f32 %v2355, %v2581
      %v2640 = vadd.f32 %v2360, %v2586
      %v2641 = vadd.f32 %v2363, %v2589
      %v2642 = vadd.f32 %v2368, %v2594
      %v2643 = vadd.f32 %v2371, %v2597
      %v2644 = vadd.f32 %v2376, %v2602
      %v2645 = vadd.f32 %v2379, %v2605
      %v2646 = vadd.f32 %v2384, %v2610
      %v2647 = vadd.f32 %v2387, %v2613
      %s2648 = scalar_lea.vmem %s4, 512
      %v2649 = vld [vmem:[%s2648] sm:$0xf]
      %v2650 = vld [vmem:[%s2648 + $0x4] sm:$0xf]
      %v2651 = vld [vmem:[%s2648 + $0x8] sm:$0xf]
      %v2652 = vld [vmem:[%s2648 + $0xc] sm:$0xf]
      %v2653 = vld [vmem:[%s2648 + $0x10] sm:$0xf]
      %v2654 = vld [vmem:[%s2648 + $0x14] sm:$0xf]
      %v2655 = vld [vmem:[%s2648 + $0x18] sm:$0xf]
      %v2656 = vld [vmem:[%s2648 + $0x1c] sm:$0xf]
      %v2657 = vld [vmem:[%s2648 + $0x20] sm:$0xf]
      %v2658 = vld [vmem:[%s2648 + $0x24] sm:$0xf]
      %v2659 = vld [vmem:[%s2648 + $0x28] sm:$0xf]
      %v2660 = vld [vmem:[%s2648 + $0x2c] sm:$0xf]
      %v2661 = vld [vmem:[%s2648 + $0x30] sm:$0xf]
      %v2662 = vld [vmem:[%s2648 + $0x34] sm:$0xf]
      %v2663 = vld [vmem:[%s2648 + $0x38] sm:$0xf]
      %v2664 = vld [vmem:[%s2648 + $0x3c] sm:$0xf]
      %v2697 = vunpack.c.l.b16 %v418
      %v2698 = vunpack.c.l.b16 %v419
      %v2699 = vunpack.c.l.b16 %v420
      %v2700 = vunpack.c.l.b16 %v421
      %v2701 = vunpack.c.l.b16 %v422
      %v2702 = vunpack.c.l.b16 %v423
      %v2703 = vunpack.c.l.b16 %v424
      %v2704 = vunpack.c.l.b16 %v425
      %v2705 = vunpack.c.l.b16 %v426
      %v2706 = vunpack.c.l.b16 %v427
      %v2707 = vunpack.c.l.b16 %v428
      %v2708 = vunpack.c.l.b16 %v429
      %v2709 = vunpack.c.l.b16 %v430
      %v2710 = vunpack.c.l.b16 %v431
      %v2711 = vunpack.c.l.b16 %v432
      %v2712 = vunpack.c.l.b16 %v433
      %v2713 = vunpack.c.l.b16 %v434
      %v2714 = vunpack.c.l.b16 %v435
      %v2715 = vunpack.c.l.b16 %v436
      %v2716 = vunpack.c.l.b16 %v437
      %v2717 = vunpack.c.l.b16 %v438
      %v2718 = vunpack.c.l.b16 %v439
      %v2719 = vunpack.c.l.b16 %v440
      %v2720 = vunpack.c.l.b16 %v441
      %v2721 = vunpack.c.l.b16 %v442
      %v2722 = vunpack.c.l.b16 %v443
      %v2723 = vunpack.c.l.b16 %v444
      %v2724 = vunpack.c.l.b16 %v445
      %v2725 = vunpack.c.l.b16 %v446
      %v2726 = vunpack.c.l.b16 %v447
      %v2727 = vunpack.c.l.b16 %v448
      %v2728 = vunpack.c.l.b16 %v449
      %v2729 = vpack.c.b16 %v2698, %v2697
      %v2730 = vpack.c.b16 %v2700, %v2699
      %v2731 = vpack.c.b16 %v2702, %v2701
      %v2732 = vpack.c.b16 %v2704, %v2703
      %v2733 = vpack.c.b16 %v2706, %v2705
      %v2734 = vpack.c.b16 %v2708, %v2707
      %v2735 = vpack.c.b16 %v2710, %v2709
      %v2736 = vpack.c.b16 %v2712, %v2711
      %v2737 = vpack.c.b16 %v2714, %v2713
      %v2738 = vpack.c.b16 %v2716, %v2715
      %v2739 = vpack.c.b16 %v2718, %v2717
      %v2740 = vpack.c.b16 %v2720, %v2719
      %v2741 = vpack.c.b16 %v2722, %v2721
      %v2742 = vpack.c.b16 %v2724, %v2723
      %v2743 = vpack.c.b16 %v2726, %v2725
      %v2744 = vpack.c.b16 %v2728, %v2727
      %v2777 = vunpack.c.l.b16 %v2649
      %v2778 = vunpack.c.l.b16 %v2650
      %v2779 = vunpack.c.l.b16 %v2651
      %v2780 = vunpack.c.l.b16 %v2652
      %v2781 = vunpack.c.l.b16 %v2653
      %v2782 = vunpack.c.l.b16 %v2654
      %v2783 = vunpack.c.l.b16 %v2655
      %v2784 = vunpack.c.l.b16 %v2656
      %v2785 = vunpack.c.l.b16 %v2657
      %v2786 = vunpack.c.l.b16 %v2658
      %v2787 = vunpack.c.l.b16 %v2659
      %v2788 = vunpack.c.l.b16 %v2660
      %v2789 = vunpack.c.l.b16 %v2661
      %v2790 = vunpack.c.l.b16 %v2662
      %v2791 = vunpack.c.l.b16 %v2663
      %v2792 = vunpack.c.l.b16 %v2664
      %v2793 = vpack.c.b16 %v2778, %v2777
      %v2794 = vpack.c.b16 %v2780, %v2779
      %v2795 = vpack.c.b16 %v2782, %v2781
      %v2796 = vpack.c.b16 %v2784, %v2783
      %v2797 = vpack.c.b16 %v2786, %v2785
      %v2798 = vpack.c.b16 %v2788, %v2787
      %v2799 = vpack.c.b16 %v2790, %v2789
      %v2800 = vpack.c.b16 %v2792, %v2791
      %2809 = vmatprep.subr.bf16.mxu0 0
      %2810 = vmatpush1.bf16.msra.mxu0 %v2793
      %2811 = vmatprep.subr.bf16.mxu0 0
      %2812 = vmatpush1.bf16.msra.mxu0 %v2794
      %2813 = vmatprep.subr.bf16.mxu0 0
      %2814 = vmatpush1.bf16.msra.mxu0 %v2795
      %2815 = vmatprep.subr.bf16.mxu0 0
      %2816 = vmatpush1.bf16.msra.mxu0 %v2796
      %2817 = vmatprep.subr.bf16.mxu0 0
      %2818 = vmatpush1.bf16.msra.mxu0 %v2797
      %2819 = vmatprep.subr.bf16.mxu0 0
      %2820 = vmatpush1.bf16.msra.mxu0 %v2798
      %2821 = vmatprep.subr.bf16.mxu0 0
      %2822 = vmatpush1.bf16.msra.mxu0 %v2799
      %2823 = vmatprep.subr.bf16.mxu0 0
      %2824 = vmatpush1.bf16.msra.mxu0 %v2800
      %2825 = vmatprep.subr.bf16.mxu0 0
      %2826 = vmatpush1.bf16.msra.mxu0 0
      %2827 = vmatprep.subr.bf16.mxu0 0
      %2828 = vmatpush1.bf16.msra.mxu0 0
      %2829 = vmatprep.subr.bf16.mxu0 0
      %2830 = vmatpush1.bf16.msra.mxu0 0
      %2831 = vmatprep.subr.bf16.mxu0 0
      %2832 = vmatpush1.bf16.msra.mxu0 0
      %2833 = vmatprep.subr.bf16.mxu0 0
      %2834 = vmatpush1.bf16.msra.mxu0 0
      %2835 = vmatprep.subr.bf16.mxu0 0
      %2836 = vmatpush1.bf16.msra.mxu0 0
      %2837 = vmatprep.subr.bf16.mxu0 0
      %2838 = vmatpush1.bf16.msra.mxu0 0
      %2839 = vmatprep.subr.bf16.mxu0 0
      %2840 = vmatpush1.bf16.msra.mxu0 0
      %2841 = vmatprep.mubr.bf16.mxu0 0
      %2842 = vmatmul.mubr.bf16.gmra.mrb[0].mxu0 %v2729
      %v2843 = vpop.f32.mrb[0].mxu0
      %v2844 = vadd.f32 0.0, %v2843
      %v2845 = vpop.f32.mrb[0].mxu0
      %v2846 = vpop.f32.mrb[0].mxu0
      %v2847 = vadd.f32 0.0, %v2846
      %v2848 = vpop.f32.mrb[0].mxu0
      %2849 = vmatprep.mubr.bf16.mxu0 0
      %2850 = vmatmul.mubr.bf16.gmra.mrb[0].mxu0 %v2730
      %v2851 = vpop.f32.mrb[0].mxu0
      %v2852 = vadd.f32 0.0, %v2851
      %v2853 = vpop.f32.mrb[0].mxu0
      %v2854 = vpop.f32.mrb[0].mxu0
      %v2855 = vadd.f32 0.0, %v2854
      %v2856 = vpop.f32.mrb[0].mxu0
      %2857 = vmatprep.mubr.bf16.mxu0 0
      %2858 = vmatmul.mubr.bf16.gmra.mrb[0].mxu0 %v2731
      %v2859 = vpop.f32.mrb[0].mxu0
      %v2860 = vadd.f32 0.0, %v2859
      %v2861 = vpop.f32.mrb[0].mxu0
      %v2862 = vpop.f32.mrb[0].mxu0
      %v2863 = vadd.f32 0.0, %v2862
      %v2864 = vpop.f32.mrb[0].mxu0
      %2865 = vmatprep.mubr.bf16.mxu0 0
      %2866 = vmatmul.mubr.bf16.gmra.mrb[0].mxu0 %v2732
      %v2867 = vpop.f32.mrb[0].mxu0
      %v2868 = vadd.f32 0.0, %v2867
      %v2869 = vpop.f32.mrb[0].mxu0
      %v2870 = vpop.f32.mrb[0].mxu0
      %v2871 = vadd.f32 0.0, %v2870
      %v2872 = vpop.f32.mrb[0].mxu0
      %2873 = vmatprep.mubr.bf16.mxu0 0
      %2874 = vmatmul.mubr.bf16.gmra.mrb[0].mxu0 %v2733
      %v2875 = vpop.f32.mrb[0].mxu0
      %v2876 = vadd.f32 0.0, %v2875
      %v2877 = vpop.f32.mrb[0].mxu0
      %v2878 = vpop.f32.mrb[0].mxu0
      %v2879 = vadd.f32 0.0, %v2878
      %v2880 = vpop.f32.mrb[0].mxu0
      %2881 = vmatprep.mubr.bf16.mxu0 0
      %2882 = vmatmul.mubr.bf16.gmra.mrb[0].mxu0 %v2734
      %v2883 = vpop.f32.mrb[0].mxu0
      %v2884 = vadd.f32 0.0, %v2883
      %v2885 = vpop.f32.mrb[0].mxu0
      %v2886 = vpop.f32.mrb[0].mxu0
      %v2887 = vadd.f32 0.0, %v2886
      %v2888 = vpop.f32.mrb[0].mxu0
      %2889 = vmatprep.mubr.bf16.mxu0 0
      %2890 = vmatmul.mubr.bf16.gmra.mrb[0].mxu0 %v2735
      %v2891 = vpop.f32.mrb[0].mxu0
      %v2892 = vadd.f32 0.0, %v2891
      %v2893 = vpop.f32.mrb[0].mxu0
      %v2894 = vpop.f32.mrb[0].mxu0
      %v2895 = vadd.f32 0.0, %v2894
      %v2896 = vpop.f32.mrb[0].mxu0
      %2897 = vmatprep.mubr.bf16.mxu0 0
      %2898 = vmatmul.mubr.bf16.gmra.mrb[0].mxu0 %v2736
      %v2899 = vpop.f32.mrb[0].mxu0
      %v2900 = vadd.f32 0.0, %v2899
      %v2901 = vpop.f32.mrb[0].mxu0
      %v2902 = vpop.f32.mrb[0].mxu0
      %v2903 = vadd.f32 0.0, %v2902
      %v2904 = vpop.f32.mrb[0].mxu0
      %2905 = vmatprep.mubr.bf16.mxu0 0
      %2906 = vmatmul.mubr.bf16.gmra.mrb[0].mxu0 %v2737
      %v2907 = vpop.f32.mrb[0].mxu0
      %v2908 = vadd.f32 0.0, %v2907
      %v2909 = vpop.f32.mrb[0].mxu0
      %v2910 = vpop.f32.mrb[0].mxu0
      %v2911 = vadd.f32 0.0, %v2910
      %v2912 = vpop.f32.mrb[0].mxu0
      %2913 = vmatprep.mubr.bf16.mxu0 0
      %2914 = vmatmul.mubr.bf16.gmra.mrb[0].mxu0 %v2738
      %v2915 = vpop.f32.mrb[0].mxu0
      %v2916 = vadd.f32 0.0, %v2915
      %v2917 = vpop.f32.mrb[0].mxu0
      %v2918 = vpop.f32.mrb[0].mxu0
      %v2919 = vadd.f32 0.0, %v2918
      %v2920 = vpop.f32.mrb[0].mxu0
      %2921 = vmatprep.mubr.bf16.mxu0 0
      %2922 = vmatmul.mubr.bf16.gmra.mrb[0].mxu0 %v2739
      %v2923 = vpop.f32.mrb[0].mxu0
      %v2924 = vadd.f32 0.0, %v2923
      %v2925 = vpop.f32.mrb[0].mxu0
      %v2926 = vpop.f32.mrb[0].mxu0
      %v2927 = vadd.f32 0.0, %v2926
      %v2928 = vpop.f32.mrb[0].mxu0
      %2929 = vmatprep.mubr.bf16.mxu0 0
      %2930 = vmatmul.mubr.bf16.gmra.mrb[0].mxu0 %v2740
      %v2931 = vpop.f32.mrb[0].mxu0
      %v2932 = vadd.f32 0.0, %v2931
      %v2933 = vpop.f32.mrb[0].mxu0
      %v2934 = vpop.f32.mrb[0].mxu0
      %v2935 = vadd.f32 0.0, %v2934
      %v2936 = vpop.f32.mrb[0].mxu0
      %2937 = vmatprep.mubr.bf16.mxu0 0
      %2938 = vmatmul.mubr.bf16.gmra.mrb[0].mxu0 %v2741
      %v2939 = vpop.f32.mrb[0].mxu0
      %v2940 = vadd.f32 0.0, %v2939
      %v2941 = vpop.f32.mrb[0].mxu0
      %v2942 = vpop.f32.mrb[0].mxu0
      %v2943 = vadd.f32 0.0, %v2942
      %v2944 = vpop.f32.mrb[0].mxu0
      %2945 = vmatprep.mubr.bf16.mxu0 0
      %2946 = vmatmul.mubr.bf16.gmra.mrb[0].mxu0 %v2742
      %v2947 = vpop.f32.mrb[0].mxu0
      %v2948 = vadd.f32 0.0, %v2947
      %v2949 = vpop.f32.mrb[0].mxu0
      %v2950 = vpop.f32.mrb[0].mxu0
      %v2951 = vadd.f32 0.0, %v2950
      %v2952 = vpop.f32.mrb[0].mxu0
      %2953 = vmatprep.mubr.bf16.mxu0 0
      %2954 = vmatmul.mubr.bf16.gmra.mrb[0].mxu0 %v2743
      %v2955 = vpop.f32.mrb[0].mxu0
      %v2956 = vadd.f32 0.0, %v2955
      %v2957 = vpop.f32.mrb[0].mxu0
      %v2958 = vpop.f32.mrb[0].mxu0
      %v2959 = vadd.f32 0.0, %v2958
      %v2960 = vpop.f32.mrb[0].mxu0
      %2961 = vmatprep.mubr.bf16.mxu0 0
      %2962 = vmatmul.mubr.bf16.gmra.mrb[0].mxu0 %v2744
      %v2963 = vpop.f32.mrb[0].mxu0
      %v2964 = vadd.f32 0.0, %v2963
      %v2965 = vpop.f32.mrb[0].mxu0
      %v2966 = vpop.f32.mrb[0].mxu0
      %v2967 = vadd.f32 0.0, %v2966
      %v2968 = vpop.f32.mrb[0].mxu0
      %2969 = vdwg.mxu0
      %v2970 = vadd.f32 %v2616, %v2844
      %v2971 = vadd.f32 %v2617, %v2847
      %v2972 = vadd.f32 %v2618, %v2852
      %v2973 = vadd.f32 %v2619, %v2855
      %v2974 = vadd.f32 %v2620, %v2860
      %v2975 = vadd.f32 %v2621, %v2863
      %v2976 = vadd.f32 %v2622, %v2868
      %v2977 = vadd.f32 %v2623, %v2871
      %v2978 = vadd.f32 %v2624, %v2876
      %v2979 = vadd.f32 %v2625, %v2879
      %v2980 = vadd.f32 %v2626, %v2884
      %v2981 = vadd.f32 %v2627, %v2887
      %v2982 = vadd.f32 %v2628, %v2892
      %v2983 = vadd.f32 %v2629, %v2895
      %v2984 = vadd.f32 %v2630, %v2900
      %v2985 = vadd.f32 %v2631, %v2903
      %v2986 = vadd.f32 %v2632, %v2908
      %v2987 = vadd.f32 %v2633, %v2911
      %v2988 = vadd.f32 %v2634, %v2916
      %v2989 = vadd.f32 %v2635, %v2919
      %v2990 = vadd.f32 %v2636, %v2924
      %v2991 = vadd.f32 %v2637, %v2927
      %v2992 = vadd.f32 %v2638, %v2932
      %v2993 = vadd.f32 %v2639, %v2935
      %v2994 = vadd.f32 %v2640, %v2940
      %v2995 = vadd.f32 %v2641, %v2943
      %v2996 = vadd.f32 %v2642, %v2948
      %v2997 = vadd.f32 %v2643, %v2951
      %v2998 = vadd.f32 %v2644, %v2956
      %v2999 = vadd.f32 %v2645, %v2959
      %v3000 = vadd.f32 %v2646, %v2964
      %v3001 = vadd.f32 %v2647, %v2967
      %v3002 = vadd.f32 %v2970, %v471
      %v3003 = vadd.f32 %v2971, %v471
      %v3004 = vadd.f32 %v2972, %v471
      %v3005 = vadd.f32 %v2973, %v471
      %v3006 = vadd.f32 %v2974, %v471
      %v3007 = vadd.f32 %v2975, %v471
      %v3008 = vadd.f32 %v2976, %v471
      %v3009 = vadd.f32 %v2977, %v471
      %v3010 = vadd.f32 %v2978, %v471
      %v3011 = vadd.f32 %v2979, %v471
      %v3012 = vadd.f32 %v2980, %v471
      %v3013 = vadd.f32 %v2981, %v471
      %v3014 = vadd.f32 %v2982, %v471
      %v3015 = vadd.f32 %v2983, %v471
      %v3016 = vadd.f32 %v2984, %v471
      %v3017 = vadd.f32 %v2985, %v471
      %v3018 = vadd.f32 %v2986, %v471
      %v3019 = vadd.f32 %v2987, %v471
      %v3020 = vadd.f32 %v2988, %v471
      %v3021 = vadd.f32 %v2989, %v471
      %v3022 = vadd.f32 %v2990, %v471
      %v3023 = vadd.f32 %v2991, %v471
      %v3024 = vadd.f32 %v2992, %v471
      %v3025 = vadd.f32 %v2993, %v471
      %v3026 = vadd.f32 %v2994, %v471
      %v3027 = vadd.f32 %v2995, %v471
      %v3028 = vadd.f32 %v2996, %v471
      %v3029 = vadd.f32 %v2997, %v471
      %v3030 = vadd.f32 %v2998, %v471
      %v3031 = vadd.f32 %v2999, %v471
      %v3032 = vadd.f32 %v3000, %v471
      %v3033 = vadd.f32 %v3001, %v471
      %3066 = vrot.lane.b32.xlu0 %v1326, 32
      %v3067 = vpop.permute.xlu0 %3066
      %3068 = vrot.lane.b32.xlu0 %v1327, 32
      %v3069 = vpop.permute.xlu0 %3068
      %3070 = vrot.lane.b32.xlu0 %v1328, 32
      %v3071 = vpop.permute.xlu0 %3070
      %3072 = vrot.lane.b32.xlu0 %v1329, 32
      %v3073 = vpop.permute.xlu0 %3072
      %3074 = vrot.lane.b32.xlu0 %v1330, 32
      %v3075 = vpop.permute.xlu0 %3074
      %3076 = vrot.lane.b32.xlu0 %v1331, 32
      %v3077 = vpop.permute.xlu0 %3076
      %3078 = vrot.lane.b32.xlu0 %v1332, 32
      %v3079 = vpop.permute.xlu0 %3078
      %3080 = vrot.lane.b32.xlu0 %v1333, 32
      %v3081 = vpop.permute.xlu0 %3080
      %3082 = vrot.lane.b32.xlu0 %v1334, 32
      %v3083 = vpop.permute.xlu0 %3082
      %3084 = vrot.lane.b32.xlu0 %v1335, 32
      %v3085 = vpop.permute.xlu0 %3084
      %3086 = vrot.lane.b32.xlu0 %v1336, 32
      %v3087 = vpop.permute.xlu0 %3086
      %3088 = vrot.lane.b32.xlu0 %v1337, 32
      %v3089 = vpop.permute.xlu0 %3088
      %3090 = vrot.lane.b32.xlu0 %v1338, 32
      %v3091 = vpop.permute.xlu0 %3090
      %3092 = vrot.lane.b32.xlu0 %v1339, 32
      %v3093 = vpop.permute.xlu0 %3092
      %3094 = vrot.lane.b32.xlu0 %v1340, 32
      %v3095 = vpop.permute.xlu0 %3094
      %3096 = vrot.lane.b32.xlu0 %v1341, 32
      %v3097 = vpop.permute.xlu0 %3096
      %3098 = vrot.lane.b32.xlu0 %v1342, 32
      %v3099 = vpop.permute.xlu0 %3098
      %3100 = vrot.lane.b32.xlu0 %v1343, 32
      %v3101 = vpop.permute.xlu0 %3100
      %3102 = vrot.lane.b32.xlu0 %v1344, 32
      %v3103 = vpop.permute.xlu0 %3102
      %3104 = vrot.lane.b32.xlu0 %v1345, 32
      %v3105 = vpop.permute.xlu0 %3104
      %3106 = vrot.lane.b32.xlu0 %v1346, 32
      %v3107 = vpop.permute.xlu0 %3106
      %3108 = vrot.lane.b32.xlu0 %v1347, 32
      %v3109 = vpop.permute.xlu0 %3108
      %3110 = vrot.lane.b32.xlu0 %v1348, 32
      %v3111 = vpop.permute.xlu0 %3110
      %3112 = vrot.lane.b32.xlu0 %v1349, 32
      %v3113 = vpop.permute.xlu0 %3112
      %3114 = vrot.lane.b32.xlu0 %v1350, 32
      %v3115 = vpop.permute.xlu0 %3114
      %3116 = vrot.lane.b32.xlu0 %v1351, 32
      %v3117 = vpop.permute.xlu0 %3116
      %3118 = vrot.lane.b32.xlu0 %v1352, 32
      %v3119 = vpop.permute.xlu0 %3118
      %3120 = vrot.lane.b32.xlu0 %v1353, 32
      %v3121 = vpop.permute.xlu0 %3120
      %3122 = vrot.lane.b32.xlu0 %v1354, 32
      %v3123 = vpop.permute.xlu0 %3122
      %3124 = vrot.lane.b32.xlu0 %v1355, 32
      %v3125 = vpop.permute.xlu0 %3124
      %3126 = vrot.lane.b32.xlu0 %v1356, 32
      %v3127 = vpop.permute.xlu0 %3126
      %3128 = vrot.lane.b32.xlu0 %v1357, 32
      %v3129 = vpop.permute.xlu0 %3128
      %3194 = vrot.lane.b32.xlu0 %v1906, 64
      %v3195 = vpop.permute.xlu0 %3194
      %3196 = vrot.lane.b32.xlu0 %v1907, 64
      %v3197 = vpop.permute.xlu0 %3196
      %3198 = vrot.lane.b32.xlu0 %v1908, 64
      %v3199 = vpop.permute.xlu0 %3198
      %3200 = vrot.lane.b32.xlu0 %v1909, 64
      %v3201 = vpop.permute.xlu0 %3200
      %3202 = vrot.lane.b32.xlu0 %v1910, 64
      %v3203 = vpop.permute.xlu0 %3202
      %3204 = vrot.lane.b32.xlu0 %v1911, 64
      %v3205 = vpop.permute.xlu0 %3204
      %3206 = vrot.lane.b32.xlu0 %v1912, 64
      %v3207 = vpop.permute.xlu0 %3206
      %3208 = vrot.lane.b32.xlu0 %v1913, 64
      %v3209 = vpop.permute.xlu0 %3208
      %3210 = vrot.lane.b32.xlu0 %v1914, 64
      %v3211 = vpop.permute.xlu0 %3210
      %3212 = vrot.lane.b32.xlu0 %v1915, 64
      %v3213 = vpop.permute.xlu0 %3212
      %3214 = vrot.lane.b32.xlu0 %v1916, 64
      %v3215 = vpop.permute.xlu0 %3214
      %3216 = vrot.lane.b32.xlu0 %v1917, 64
      %v3217 = vpop.permute.xlu0 %3216
      %3218 = vrot.lane.b32.xlu0 %v1918, 64
      %v3219 = vpop.permute.xlu0 %3218
      %3220 = vrot.lane.b32.xlu0 %v1919, 64
      %v3221 = vpop.permute.xlu0 %3220
      %3222 = vrot.lane.b32.xlu0 %v1920, 64
      %v3223 = vpop.permute.xlu0 %3222
      %3224 = vrot.lane.b32.xlu0 %v1921, 64
      %v3225 = vpop.permute.xlu0 %3224
      %3226 = vrot.lane.b32.xlu0 %v1922, 64
      %v3227 = vpop.permute.xlu0 %3226
      %3228 = vrot.lane.b32.xlu0 %v1923, 64
      %v3229 = vpop.permute.xlu0 %3228
      %3230 = vrot.lane.b32.xlu0 %v1924, 64
      %v3231 = vpop.permute.xlu0 %3230
      %3232 = vrot.lane.b32.xlu0 %v1925, 64
      %v3233 = vpop.permute.xlu0 %3232
      %3234 = vrot.lane.b32.xlu0 %v1926, 64
      %v3235 = vpop.permute.xlu0 %3234
      %3236 = vrot.lane.b32.xlu0 %v1927, 64
      %v3237 = vpop.permute.xlu0 %3236
      %3238 = vrot.lane.b32.xlu0 %v1928, 64
      %v3239 = vpop.permute.xlu0 %3238
      %3240 = vrot.lane.b32.xlu0 %v1929, 64
      %v3241 = vpop.permute.xlu0 %3240
      %3242 = vrot.lane.b32.xlu0 %v1930, 64
      %v3243 = vpop.permute.xlu0 %3242
      %3244 = vrot.lane.b32.xlu0 %v1931, 64
      %v3245 = vpop.permute.xlu0 %3244
      %3246 = vrot.lane.b32.xlu0 %v1932, 64
      %v3247 = vpop.permute.xlu0 %3246
      %3248 = vrot.lane.b32.xlu0 %v1933, 64
      %v3249 = vpop.permute.xlu0 %3248
      %3250 = vrot.lane.b32.xlu0 %v1934, 64
      %v3251 = vpop.permute.xlu0 %3250
      %3252 = vrot.lane.b32.xlu0 %v1935, 64
      %v3253 = vpop.permute.xlu0 %3252
      %3254 = vrot.lane.b32.xlu0 %v1936, 64
      %v3255 = vpop.permute.xlu0 %3254
      %3256 = vrot.lane.b32.xlu0 %v1937, 64
      %v3257 = vpop.permute.xlu0 %3256
      %3322 = vrot.lane.b32.xlu0 %v3002, 96
      %v3323 = vpop.permute.xlu0 %3322
      %3324 = vrot.lane.b32.xlu0 %v3003, 96
      %v3325 = vpop.permute.xlu0 %3324
      %3326 = vrot.lane.b32.xlu0 %v3004, 96
      %v3327 = vpop.permute.xlu0 %3326
      %3328 = vrot.lane.b32.xlu0 %v3005, 96
      %v3329 = vpop.permute.xlu0 %3328
      %3330 = vrot.lane.b32.xlu0 %v3006, 96
      %v3331 = vpop.permute.xlu0 %3330
      %3332 = vrot.lane.b32.xlu0 %v3007, 96
      %v3333 = vpop.permute.xlu0 %3332
      %3334 = vrot.lane.b32.xlu0 %v3008, 96
      %v3335 = vpop.permute.xlu0 %3334
      %3336 = vrot.lane.b32.xlu0 %v3009, 96
      %v3337 = vpop.permute.xlu0 %3336
      %3338 = vrot.lane.b32.xlu0 %v3010, 96
      %v3339 = vpop.permute.xlu0 %3338
      %3340 = vrot.lane.b32.xlu0 %v3011, 96
      %v3341 = vpop.permute.xlu0 %3340
      %3342 = vrot.lane.b32.xlu0 %v3012, 96
      %v3343 = vpop.permute.xlu0 %3342
      %3344 = vrot.lane.b32.xlu0 %v3013, 96
      %v3345 = vpop.permute.xlu0 %3344
      %3346 = vrot.lane.b32.xlu0 %v3014, 96
      %v3347 = vpop.permute.xlu0 %3346
      %3348 = vrot.lane.b32.xlu0 %v3015, 96
      %v3349 = vpop.permute.xlu0 %3348
      %3350 = vrot.lane.b32.xlu0 %v3016, 96
      %v3351 = vpop.permute.xlu0 %3350
      %3352 = vrot.lane.b32.xlu0 %v3017, 96
      %v3353 = vpop.permute.xlu0 %3352
      %3354 = vrot.lane.b32.xlu0 %v3018, 96
      %v3355 = vpop.permute.xlu0 %3354
      %3356 = vrot.lane.b32.xlu0 %v3019, 96
      %v3357 = vpop.permute.xlu0 %3356
      %3358 = vrot.lane.b32.xlu0 %v3020, 96
      %v3359 = vpop.permute.xlu0 %3358
      %3360 = vrot.lane.b32.xlu0 %v3021, 96
      %v3361 = vpop.permute.xlu0 %3360
      %3362 = vrot.lane.b32.xlu0 %v3022, 96
      %v3363 = vpop.permute.xlu0 %3362
      %3364 = vrot.lane.b32.xlu0 %v3023, 96
      %v3365 = vpop.permute.xlu0 %3364
      %3366 = vrot.lane.b32.xlu0 %v3024, 96
      %v3367 = vpop.permute.xlu0 %3366
      %3368 = vrot.lane.b32.xlu0 %v3025, 96
      %v3369 = vpop.permute.xlu0 %3368
      %3370 = vrot.lane.b32.xlu0 %v3026, 96
      %v3371 = vpop.permute.xlu0 %3370
      %3372 = vrot.lane.b32.xlu0 %v3027, 96
      %v3373 = vpop.permute.xlu0 %3372
      %3374 = vrot.lane.b32.xlu0 %v3028, 96
      %v3375 = vpop.permute.xlu0 %3374
      %3376 = vrot.lane.b32.xlu0 %v3029, 96
      %v3377 = vpop.permute.xlu0 %3376
      %3378 = vrot.lane.b32.xlu0 %v3030, 96
      %v3379 = vpop.permute.xlu0 %3378
      %3380 = vrot.lane.b32.xlu0 %v3031, 96
      %v3381 = vpop.permute.xlu0 %3380
      %3382 = vrot.lane.b32.xlu0 %v3032, 96
      %v3383 = vpop.permute.xlu0 %3382
      %3384 = vrot.lane.b32.xlu0 %v3033, 96
      %v3385 = vpop.permute.xlu0 %3384
      %vm3418 = vcmask 261120
      %v3419 = vsel %vm3418, %v652, %v3067
      %v3420 = vsel %vm3418, %v655, %v3069
      %v3421 = vsel %vm3418, %v660, %v3071
      %v3422 = vsel %vm3418, %v663, %v3073
      %v3423 = vsel %vm3418, %v668, %v3075
      %v3424 = vsel %vm3418, %v671, %v3077
      %v3425 = vsel %vm3418, %v676, %v3079
      %v3426 = vsel %vm3418, %v679, %v3081
      %v3427 = vsel %vm3418, %v684, %v3083
      %v3428 = vsel %vm3418, %v687, %v3085
      %v3429 = vsel %vm3418, %v692, %v3087
      %v3430 = vsel %vm3418, %v695, %v3089
      %v3431 = vsel %vm3418, %v700, %v3091
      %v3432 = vsel %vm3418, %v703, %v3093
      %v3433 = vsel %vm3418, %v708, %v3095
      %v3434 = vsel %vm3418, %v711, %v3097
      %v3435 = vsel %vm3418, %v716, %v3099
      %v3436 = vsel %vm3418, %v719, %v3101
      %v3437 = vsel %vm3418, %v724, %v3103
      %v3438 = vsel %vm3418, %v727, %v3105
      %v3439 = vsel %vm3418, %v732, %v3107
      %v3440 = vsel %vm3418, %v735, %v3109
      %v3441 = vsel %vm3418, %v740, %v3111
      %v3442 = vsel %vm3418, %v743, %v3113
      %v3443 = vsel %vm3418, %v748, %v3115
      %v3444 = vsel %vm3418, %v751, %v3117
      %v3445 = vsel %vm3418, %v756, %v3119
      %v3446 = vsel %vm3418, %v759, %v3121
      %v3447 = vsel %vm3418, %v764, %v3123
      %v3448 = vsel %vm3418, %v767, %v3125
      %v3449 = vsel %vm3418, %v772, %v3127
      %v3450 = vsel %vm3418, %v775, %v3129
      %vm3451 = vcmask 523264
      %v3452 = vsel %vm3451, %v3419, %v3195
      %v3453 = vsel %vm3451, %v3420, %v3197
      %v3454 = vsel %vm3451, %v3421, %v3199
      %v3455 = vsel %vm3451, %v3422, %v3201
      %v3456 = vsel %vm3451, %v3423, %v3203
      %v3457 = vsel %vm3451, %v3424, %v3205
      %v3458 = vsel %vm3451, %v3425, %v3207
      %v3459 = vsel %vm3451, %v3426, %v3209
      %v3460 = vsel %vm3451, %v3427, %v3211
      %v3461 = vsel %vm3451, %v3428, %v3213
      %v3462 = vsel %vm3451, %v3429, %v3215
      %v3463 = vsel %vm3451, %v3430, %v3217
      %v3464 = vsel %vm3451, %v3431, %v3219
      %v3465 = vsel %vm3451, %v3432, %v3221
      %v3466 = vsel %vm3451, %v3433, %v3223
      %v3467 = vsel %vm3451, %v3434, %v3225
      %v3468 = vsel %vm3451, %v3435, %v3227
      %v3469 = vsel %vm3451, %v3436, %v3229
      %v3470 = vsel %vm3451, %v3437, %v3231
      %v3471 = vsel %vm3451, %v3438, %v3233
      %v3472 = vsel %vm3451, %v3439, %v3235
      %v3473 = vsel %vm3451, %v3440, %v3237
      %v3474 = vsel %vm3451, %v3441, %v3239
      %v3475 = vsel %vm3451, %v3442, %v3241
      %v3476 = vsel %vm3451, %v3443, %v3243
      %v3477 = vsel %vm3451, %v3444, %v3245
      %v3478 = vsel %vm3451, %v3445, %v3247
      %v3479 = vsel %vm3451, %v3446, %v3249
      %v3480 = vsel %vm3451, %v3447, %v3251
      %v3481 = vsel %vm3451, %v3448, %v3253
      %v3482 = vsel %vm3451, %v3449, %v3255
      %v3483 = vsel %vm3451, %v3450, %v3257
      %vm3484 = vcmask 785408
      %v3485 = vsel %vm3484, %v3452, %v3323
      %v3486 = vsel %vm3484, %v3453, %v3325
      %v3487 = vsel %vm3484, %v3454, %v3327
      %v3488 = vsel %vm3484, %v3455, %v3329
      %v3489 = vsel %vm3484, %v3456, %v3331
      %v3490 = vsel %vm3484, %v3457, %v3333
      %v3491 = vsel %vm3484, %v3458, %v3335
      %v3492 = vsel %vm3484, %v3459, %v3337
      %v3493 = vsel %vm3484, %v3460, %v3339
      %v3494 = vsel %vm3484, %v3461, %v3341
      %v3495 = vsel %vm3484, %v3462, %v3343
      %v3496 = vsel %vm3484, %v3463, %v3345
      %v3497 = vsel %vm3484, %v3464, %v3347
      %v3498 = vsel %vm3484, %v3465, %v3349
      %v3499 = vsel %vm3484, %v3466, %v3351
      %v3500 = vsel %vm3484, %v3467, %v3353
      %v3501 = vsel %vm3484, %v3468, %v3355
      %v3502 = vsel %vm3484, %v3469, %v3357
      %v3503 = vsel %vm3484, %v3470, %v3359
      %v3504 = vsel %vm3484, %v3471, %v3361
      %v3505 = vsel %vm3484, %v3472, %v3363
      %v3506 = vsel %vm3484, %v3473, %v3365
      %v3507 = vsel %vm3484, %v3474, %v3367
      %v3508 = vsel %vm3484, %v3475, %v3369
      %v3509 = vsel %vm3484, %v3476, %v3371
      %v3510 = vsel %vm3484, %v3477, %v3373
      %v3511 = vsel %vm3484, %v3478, %v3375
      %v3512 = vsel %vm3484, %v3479, %v3377
      %v3513 = vsel %vm3484, %v3480, %v3379
      %v3514 = vsel %vm3484, %v3481, %v3381
      %v3515 = vsel %vm3484, %v3482, %v3383
      %v3516 = vsel %vm3484, %v3483, %v3385
      %3517 = vst [vmem:[%s319] sm:$0xff] %v3485
      %3518 = vst [vmem:[%s319 + $0x8] sm:$0xff] %v3486
      %3519 = vst [vmem:[%s319 + $0x10] sm:$0xff] %v3487
      %3520 = vst [vmem:[%s319 + $0x18] sm:$0xff] %v3488
      %3521 = vst [vmem:[%s319 + $0x20] sm:$0xff] %v3489
      %3522 = vst [vmem:[%s319 + $0x28] sm:$0xff] %v3490
      %3523 = vst [vmem:[%s319 + $0x30] sm:$0xff] %v3491
      %3524 = vst [vmem:[%s319 + $0x38] sm:$0xff] %v3492
      %3525 = vst [vmem:[%s319 + $0x40] sm:$0xff] %v3493
      %3526 = vst [vmem:[%s319 + $0x48] sm:$0xff] %v3494
      %3527 = vst [vmem:[%s319 + $0x50] sm:$0xff] %v3495
      %3528 = vst [vmem:[%s319 + $0x58] sm:$0xff] %v3496
      %3529 = vst [vmem:[%s319 + $0x60] sm:$0xff] %v3497
      %3530 = vst [vmem:[%s319 + $0x68] sm:$0xff] %v3498
      %3531 = vst [vmem:[%s319 + $0x70] sm:$0xff] %v3499
      %3532 = vst [vmem:[%s319 + $0x78] sm:$0xff] %v3500
      %3533 = vst [vmem:[%s319 + $0x80] sm:$0xff] %v3501
      %3534 = vst [vmem:[%s319 + $0x88] sm:$0xff] %v3502
      %3535 = vst [vmem:[%s319 + $0x90] sm:$0xff] %v3503
      %3536 = vst [vmem:[%s319 + $0x98] sm:$0xff] %v3504
      %3537 = vst [vmem:[%s319 + $0xa0] sm:$0xff] %v3505
      %3538 = vst [vmem:[%s319 + $0xa8] sm:$0xff] %v3506
      %3539 = vst [vmem:[%s319 + $0xb0] sm:$0xff] %v3507
      %3540 = vst [vmem:[%s319 + $0xb8] sm:$0xff] %v3508
      %3541 = vst [vmem:[%s319 + $0xc0] sm:$0xff] %v3509
      %3542 = vst [vmem:[%s319 + $0xc8] sm:$0xff] %v3510
      %3543 = vst [vmem:[%s319 + $0xd0] sm:$0xff] %v3511
      %3544 = vst [vmem:[%s319 + $0xd8] sm:$0xff] %v3512
      %3545 = vst [vmem:[%s319 + $0xe0] sm:$0xff] %v3513
      %3546 = vst [vmem:[%s319 + $0xe8] sm:$0xff] %v3514
      %3547 = vst [vmem:[%s319 + $0xf0] sm:$0xff] %v3515
      %3548 = vst [vmem:[%s319 + $0xf8] sm:$0xff] %v3516
      %s3549 = smul.u32 32, %s17
      %p3550 = scmp.lt.s32.totalorder %s3549, 63
      %s3551 = scalar_select %p3550, %s3549, 63
      %s3552 = smul.addr %s3551, 8
      %s3553 = scalar_lea.vmem %s6, %s3552
      // Predicated region
      $region45: #{convt_block_forward.3} parent=43 // pred_check
        %p3554 = pneg %p181
      $region46: #{convt_block_forward.3} parent=43 // pred_check_branch
        %3556 = sbr.rel (%p3554) target = $region48
      $region47: #{convt_block_forward.3} parent=43 // pred_region
        %s3557 = smul.u32 32, %s17
      $region48: #{convt_block_forward.3} parent=43 // pred_fallthru
        _
    $region44: #{convt_block_forward.3} parent=5 // pred_fallthru
      _
    %p3558 = scmp.le.s32.totalorder 2, %s12
    // Predicated region
    $region49: #{convt_block_forward.3} parent=5 // pred_check
      %p3559 = pneg %p3558
    $region50: #{convt_block_forward.3} parent=5 // pred_check_branch
      %3561 = sbr.rel (%p3559) target = $region52
    $region51: #{convt_block_forward.3} parent=5 // pred_region
      %s3562 = ssub.s32 %s12, 2
      // Predicated region
      $region53: #{convt_block_forward.3} parent=51 // pred_check
        %p3563 = pneg %p187
      $region54: #{convt_block_forward.3} parent=51 // pred_check_branch
        %3565 = sbr.rel (%p3563) target = $region56
      $region55: #{convt_block_forward.3} parent=51 // pred_region
        %s3566 = smul.u32 32, %s18
        %p3567 = scmp.lt.s32.totalorder %s3566, 63
        %s3568 = scalar_select %p3567, %s3566, 63
        %s3569 = smul.addr %s3568, 8
        %s3570 = scalar_lea.vmem %s6, %s3569
      $region56: #{convt_block_forward.3} parent=51 // pred_fallthru
        _
    $region52: #{convt_block_forward.3} parent=5 // pred_fallthru
      _
  $region6: #{convt_block_forward.3} parent=0 // loop_footer
    %s16 = sadd.s32 1, %s12
  $region7: #{convt_block_forward.3} parent=0 // loop_footer_branch
    %11 = sbr.rel target = $region3
  $region8: #{convt_block_forward.3} parent=0 // loop_exit
    _

</llo_original>
